<compile_context>
chip_gen: v7x
topology: tpu7x:2x2x1
jax: 0.10.0
libtpu: 0.0.40
codegen_flags: <defaults>
</compile_context>

<pallas_src>
import jax
import jax.numpy as jnp
from jax import lax
from jax.experimental import pallas as pl
from jax.experimental.pallas import tpu as pltpu

IN_FEATURES = 1
LATENT = 20      # H
CHUNK = 512      # in-kernel lane chunk (bounds live vreg footprint)
MAX_TM = 4096    # max batch tile (lanes) per grid step


def _round_up(n, m):
    return -(-n // m) * m


def _pick_tm(n):
    """Pick the batch tile (lanes per grid step).

    Big enough to amortize per-grid-step overhead, but keeps >= 2 (even when
    possible) blocks so both v7x TensorCores get work.  Always a multiple of
    CHUNK so the in-kernel chunk loop has a static, exact trip count.
    """
    n_min = _round_up(n, CHUNK)
    if n_min <= CHUNK:
        return CHUNK
    n_blocks = max(2, pl.cdiv(n_min, MAX_TM))
    if n_blocks % 2:
        n_blocks += 1
    tm = _round_up(pl.cdiv(n_min, n_blocks), CHUNK)
    return min(tm, MAX_TM)


def expnet_kernel(x_ref, w1_ref, b1_ref, w2t_ref, b2_ref, w3_ref, b3_ref, o_ref):
    # x_ref:   (1, TM)    batch on lanes
    # w1_ref:  (H, 1)     layer-1 weights as a column (in_features == 1)
    # b1_ref:  (H, 1)
    # w2t_ref: (H, H)     layer-2 weights, pre-transposed to (out, in)
    # b2_ref:  (H, 1)
    # w3_ref:  (1, H)     layer-3 weights as a row
    # b3_ref:  (1, 1)     scalar bias in SMEM
    # o_ref:   (1, TM)    lane-dense output row
    w1 = w1_ref[...]
    b1 = b1_ref[...]
    w2t = w2t_ref[...]
    b2 = b2_ref[...]
    w3 = w3_ref[...]
    b3 = b3_ref[0, 0]

    n_chunks = o_ref.shape[1] // CHUNK  # static (TM is a multiple of CHUNK)

    def chunk_body(c, carry):
        off = pl.multiple_of(c * CHUNK, CHUNK)
        x = x_ref[:, pl.ds(off, CHUNK)].astype(jnp.float32)        # (1, CHUNK)

        # Layer 1: ExpLinear(1, H) + Sin.  K == 1 -> broadcast FMA on the VPU,
        # exp on the EUP (free slot), sin on the VPU (the binding unit).
        h = jnp.sin(jnp.exp(w1 * x + b1))                          # (H, CHUNK)

        # Layer 2: ExpLinear(H, H) + Sin.  (20,20)@(20,CHUNK) rides the
        # otherwise-idle MXU (H intentionally left unpadded).
        h = jnp.dot(w2t, h, preferred_element_type=jnp.float32) + b2
        h = jnp.sin(jnp.exp(h))                                    # (H, CHUNK)

        # Layer 3: Linear(H, 1) -> lane-dense (1, CHUNK) output row.
        o = jnp.dot(w3, h, preferred_element_type=jnp.float32) + b3
        o_ref[:, pl.ds(off, CHUNK)] = o.astype(o_ref.dtype)
        return carry

    lax.fori_loop(0, n_chunks, chunk_body, 0, unroll=True)


def expnet_forward(x, params, *, tm=None):
    """x: (N, 1) float32.  params: dict of (in, out)-layout weights.

    Returns (N, 1) float32.  N may be arbitrary; the ragged tail (if any) is
    zero-padded up to a multiple of the batch tile and trimmed on the way out.
    """
    N, in_f = x.shape
    assert in_f == IN_FEATURES == 1, "kernel specialized for in_features == 1"
    H = LATENT

    if tm is None:
        tm = _pick_tm(N)
    assert tm % CHUNK == 0, "batch tile must be a multiple of CHUNK"
    n_blocks = pl.cdiv(N, tm)
    n_pad = n_blocks * tm

    # Lane-dense input row: (N,1)->(1,N) is a free reshape (same linear
    # order); pad only when the tail is ragged (no zeros+scatter relayout).
    x_row = x.astype(jnp.float32).reshape(1, N)
    if n_pad != N:
        x_row = jnp.pad(x_row, ((0, 0), (0, n_pad - N)))

    # Re-layout the (tiny) parameters for the transposed compute.
    w1c = params["w1"].T.astype(jnp.float32)   # (H, 1)
    b1c = params["b1"].T.astype(jnp.float32)   # (H, 1)
    w2t = params["w2"].T.astype(jnp.float32)   # (H, H)  (out, in)
    b2c = params["b2"].T.astype(jnp.float32)   # (H, 1)
    w3r = params["w3"].astype(jnp.float32)     # (1, H)
    b3 = params["b3"].astype(jnp.float32)      # (1, 1)  -> SMEM

    const = lambda shape: pl.BlockSpec(shape, lambda i: (0, 0))

    # Advisory hint for XLA's scheduler around the custom call.
    weight_bytes = 4 * (2 * H + H * H + 2 * H + 1)
    cost = pl.CostEstimate(
        flops=int(n_pad * (2 * H * H + 2 * H + 4 * H)),
        transcendentals=int(n_pad * 4 * H),          # 2x exp + 2x sin per unit
        bytes_accessed=int(8 * n_pad + weight_bytes),
    )

    out_row = pl.pallas_call(
        expnet_kernel,
        out_shape=jax.ShapeDtypeStruct((1, n_pad), jnp.float32),
        grid=(n_blocks,),
        in_specs=[
            pl.BlockSpec((1, tm), lambda i: (0, i)),   # x tile (lane-dense)
            const((H, 1)),                             # w1
            const((H, 1)),                             # b1
            const((H, H)),                             # w2^T
            const((H, 1)),                             # b2
            const((1, H)),                             # w3
            pl.BlockSpec(memory_space=pltpu.MemorySpace.SMEM),  # b3 scalar
        ],
        out_specs=pl.BlockSpec((1, tm), lambda i: (0, i)),
        compiler_params=pltpu.CompilerParams(
            dimension_semantics=("parallel",)),
        cost_estimate=cost,
    )(x_row, w1c, b1c, w2t, b2c, w3r, b3)

    # (1, n_pad) -> (N, 1): reshape is free; slice only if padding was added.
    out = out_row.reshape(n_pad, 1)
    if n_pad != N:
        out = out[:N]
    return out


def init_params(key):
    """Deterministic init mimicking PyTorch's U(-1/sqrt(fan_in), 1/sqrt(fan_in))."""
    H = LATENT
    ks = jax.random.split(key, 6)

    def uinit(k, shape, fan_in):
        bound = 1.0 / jnp.sqrt(jnp.float32(fan_in))
        return jax.random.uniform(k, shape, jnp.float32, -bound, bound)

    return {
        "w1": uinit(ks[0], (IN_FEATURES, H), IN_FEATURES),   # (in, out)
        "b1": uinit(ks[1], (1, H), IN_FEATURES),
        "w2": uinit(ks[2], (H, H), H),                       # (in, out)
        "b2": uinit(ks[3], (1, H), H),
        "w3": uinit(ks[4], (1, H), H),                       # (out=1, in=H) row
        "b3": uinit(ks[5], (1, 1), H),
    }


def expnet_reference(x, p):
    h = jnp.sin(jnp.exp(x @ p["w1"] + p["b1"]))
    h = jnp.sin(jnp.exp(h @ p["w2"] + p["b2"]))
    return h @ p["w3"].T + p["b3"]


if __name__ == "__main__":
    key = jax.random.PRNGKey(0)
    kx, kp = jax.random.split(key)

    # Non-multiple-of-tile batch to exercise the padding path; tile picker
    # yields tm=512 -> 2 grid blocks, so both v7x TensorCores get work.
    N = 1000
    x = jax.random.uniform(kx, (N, IN_FEATURES), jnp.float32, -1.0, 1.0)
    params = init_params(kp)

    out = expnet_forward(x, params)
    out = jax.block_until_ready(out)

    ref = expnet_reference(x, params)
    assert out.shape == (N, 1)
    assert jnp.allclose(out, ref, atol=1e-4, rtol=1e-4), "mismatch vs reference"

    print("KERNEL_OK")
</pallas_src>

<mosaic_0001>
module attributes {stable_mosaic.version = 11 : i64} {
  func.func @expnet_kernel(%arg0: i32, %arg1: memref<1x512xf32, #tpu.memory_space<vmem>>, %arg2: memref<20x1xf32, #tpu.memory_space<vmem>>, %arg3: memref<20x1xf32, #tpu.memory_space<vmem>>, %arg4: memref<20x20xf32, #tpu.memory_space<vmem>>, %arg5: memref<20x1xf32, #tpu.memory_space<vmem>>, %arg6: memref<1x20xf32, #tpu.memory_space<vmem>>, %arg7: memref<1x1xf32, #tpu.memory_space<smem>>, %arg8: memref<1x512xf32, #tpu.memory_space<vmem>>) attributes {dimension_semantics = [#tpu.dimension_semantics<parallel>], iteration_bounds = array<i64: 2>, scalar_prefetch = 0 : i64, scratch_operands = 0 : i64, tpu.core_type = #tpu.core_type<tc>, window_params = [{transform_indices = @transform_0, window_bounds = array<i64: 1, 512>}, {pipeline_mode = #tpu.pipeline_mode<synchronous>, transform_indices = @transform_1, window_bounds = array<i64: 20, 1>}, {pipeline_mode = #tpu.pipeline_mode<synchronous>, transform_indices = @transform_2, window_bounds = array<i64: 20, 1>}, {pipeline_mode = #tpu.pipeline_mode<synchronous>, transform_indices = @transform_3, window_bounds = array<i64: 20, 20>}, {pipeline_mode = #tpu.pipeline_mode<synchronous>, transform_indices = @transform_4, window_bounds = array<i64: 20, 1>}, {pipeline_mode = #tpu.pipeline_mode<synchronous>, transform_indices = @transform_5, window_bounds = array<i64: 1, 20>}, {transform_indices = @transform_6, window_bounds = array<i64: 1, 1>}, {transform_indices = @transform_7, window_bounds = array<i64: 1, 512>}]} {
    %c0 = arith.constant 0 : index
    %c0_0 = arith.constant 0 : index
    %0 = vector.load %arg2[%c0, %c0_0] : memref<20x1xf32, #tpu.memory_space<vmem>>, vector<20x1xf32>
    %c0_1 = arith.constant 0 : index
    %c0_2 = arith.constant 0 : index
    %1 = vector.load %arg3[%c0_1, %c0_2] : memref<20x1xf32, #tpu.memory_space<vmem>>, vector<20x1xf32>
    %c0_3 = arith.constant 0 : index
    %c0_4 = arith.constant 0 : index
    %2 = vector.load %arg4[%c0_3, %c0_4] : memref<20x20xf32, #tpu.memory_space<vmem>>, vector<20x20xf32>
    %c0_5 = arith.constant 0 : index
    %c0_6 = arith.constant 0 : index
    %3 = vector.load %arg5[%c0_5, %c0_6] : memref<20x1xf32, #tpu.memory_space<vmem>>, vector<20x1xf32>
    %c0_7 = arith.constant 0 : index
    %c0_8 = arith.constant 0 : index
    %4 = vector.load %arg6[%c0_7, %c0_8] : memref<1x20xf32, #tpu.memory_space<vmem>>, vector<1x20xf32>
    %c0_9 = arith.constant 0 : index
    %c0_10 = arith.constant 0 : index
    %5 = memref.load %arg7[%c0_9, %c0_10] : memref<1x1xf32, #tpu.memory_space<smem>>
    %c0_i32 = arith.constant 0 : i32
    %c512_i32 = arith.constant 512 : i32
    %6 = arith.muli %c0_i32, %c512_i32 : i32
    %7 = tpu.assume_multiple %6, 512 : i32
    %c0_11 = arith.constant 0 : index
    %8 = arith.index_cast %7 : i32 to index
    %9 = vector.load %arg1[%c0_11, %8] : memref<1x512xf32, #tpu.memory_space<vmem>>, vector<1x512xf32>
    %10 = vector.broadcast %0 : vector<20x1xf32> to vector<20x512xf32>
    %11 = vector.broadcast %9 : vector<1x512xf32> to vector<20x512xf32>
    %12 = arith.mulf %10, %11 : vector<20x512xf32>
    %13 = vector.broadcast %1 : vector<20x1xf32> to vector<20x512xf32>
    %14 = arith.addf %12, %13 : vector<20x512xf32>
    %15 = math.exp %14 : vector<20x512xf32>
    %16 = math.sin %15 : vector<20x512xf32>
    %cst = arith.constant dense<0.000000e+00> : vector<20x512xf32>
    %17 = tpu.matmul %2, %16, %cst {dimension_numbers = #tpu.dot_dimension_numbers<[1], [0], [0], [1], [0, 0, 1, 1], [], []>} : vector<20x20xf32>, vector<20x512xf32>, vector<20x512xf32> -> vector<20x512xf32>
    %18 = vector.broadcast %3 : vector<20x1xf32> to vector<20x512xf32>
    %19 = arith.addf %17, %18 : vector<20x512xf32>
    %20 = math.exp %19 : vector<20x512xf32>
    %21 = math.sin %20 : vector<20x512xf32>
    %cst_12 = arith.constant dense<0.000000e+00> : vector<1x512xf32>
    %22 = tpu.matmul %4, %21, %cst_12 {dimension_numbers = #tpu.dot_dimension_numbers<[1], [0], [0], [1], [0, 0, 1, 1], [], []>} : vector<1x20xf32>, vector<20x512xf32>, vector<1x512xf32> -> vector<1x512xf32>
    %23 = vector.broadcast %5 : f32 to vector<1x512xf32>
    %24 = arith.addf %22, %23 : vector<1x512xf32>
    %c0_13 = arith.constant 0 : index
    %25 = arith.index_cast %7 : i32 to index
    %26 = vector.load %arg8[%c0_13, %25] : memref<1x512xf32, #tpu.memory_space<vmem>>, vector<1x512xf32>
    tpu.vector_store %arg8[%c0_13, %25], %24 {strides = array<i32>} : memref<1x512xf32, #tpu.memory_space<vmem>>, vector<1x512xf32>,
    %c1_i32 = arith.constant 1 : i32
    return
  }
  func.func @transform_0(%arg0: i32) -> (i32, i32) {
    %c0_i32 = arith.constant 0 : i32
    %c0_i32_0 = arith.constant 0 : i32
    return %c0_i32, %arg0 : i32, i32
  }
  func.func @transform_1(%arg0: i32) -> (i32, i32) {
    %c0_i32 = arith.constant 0 : i32
    %c0_i32_0 = arith.constant 0 : i32
    %c0_i32_1 = arith.constant 0 : i32
    return %c0_i32, %c0_i32_0 : i32, i32
  }
  func.func @transform_2(%arg0: i32) -> (i32, i32) {
    %c0_i32 = arith.constant 0 : i32
    %c0_i32_0 = arith.constant 0 : i32
    %c0_i32_1 = arith.constant 0 : i32
    return %c0_i32, %c0_i32_0 : i32, i32
  }
  func.func @transform_3(%arg0: i32) -> (i32, i32) {
    %c0_i32 = arith.constant 0 : i32
    %c0_i32_0 = arith.constant 0 : i32
    %c0_i32_1 = arith.constant 0 : i32
    return %c0_i32, %c0_i32_0 : i32, i32
  }
  func.func @transform_4(%arg0: i32) -> (i32, i32) {
    %c0_i32 = arith.constant 0 : i32
    %c0_i32_0 = arith.constant 0 : i32
    %c0_i32_1 = arith.constant 0 : i32
    return %c0_i32, %c0_i32_0 : i32, i32
  }
  func.func @transform_5(%arg0: i32) -> (i32, i32) {
    %c0_i32 = arith.constant 0 : i32
    %c0_i32_0 = arith.constant 0 : i32
    %c0_i32_1 = arith.constant 0 : i32
    return %c0_i32, %c0_i32_0 : i32, i32
  }
  func.func @transform_6(%arg0: i32) -> (i32, i32) {
    %c0_i32 = arith.constant 0 : i32
    %c0_i32_0 = arith.constant 0 : i32
    %c0_i32_1 = arith.constant 0 : i32
    return %c0_i32, %c0_i32_0 : i32, i32
  }
  func.func @transform_7(%arg0: i32) -> (i32, i32) {
    %c0_i32 = arith.constant 0 : i32
    %c0_i32_0 = arith.constant 0 : i32
    return %c0_i32, %arg0 : i32, i32
  }
}

</mosaic_0001>

<llo_original>
// kernel: tpu_custom_call.1
$region0: #{tpu_custom_call.1}
  #allocation0 [shape = 'u32[]', space=smem, size = 0x4, offset = 0x4, fixed_abs, tag = 'smem constant byte address 0x4 - core index']
  #allocation1 [shape = 'u32[144,128]{1,0:T(1,128)}', space=vmem, size = 0x12000, scoped, tag = 'internal scratch']
  #allocation2 [shape = 'f32[1,1]{1,0:T(1,128)S(6)}', space=smem, size = 0x200, scoped, tag = 'scoped memory for tpu_custom_call.1']
  %s0 = inlined_call_operand.vmem [shape: f32[1,1024], index: 0, kind: input, shape index: {}]
  %s1 = inlined_call_operand.vmem [shape: f32[20,1], index: 1, kind: input, shape index: {}]
  %s2 = inlined_call_operand.vmem [shape: f32[20,1], index: 2, kind: input, shape index: {}]
  %s3 = inlined_call_operand.vmem [shape: f32[20,20], index: 3, kind: input, shape index: {}]
  %s4 = inlined_call_operand.vmem [shape: f32[20,1], index: 4, kind: input, shape index: {}]
  %s5 = inlined_call_operand.vmem [shape: f32[1,20], index: 5, kind: input, shape index: {}]
  %s6 = inlined_call_operand.<no memory space> [shape: f32[1,1], index: 6, kind: input, shape index: {}]
  %s7 = inlined_call_operand.hbm [shape: f32[1,1024], index: 7, kind: output, shape index: {}]
  %s8 = sld [smem:[#allocation0]]
  $region61: #{tpu_custom_call.1} parent=0
    _
  %s10 = ssub.s32 1, %s8
  %s11 = scalar_select 0, %s10, %s8
  %12 = sst [smem:[#allocation2]] %s6
  $region1: #{tpu_custom_call.1} parent=0
    #allocation3 [shape = 'u8[4096]{0}', space=vmem, size = 0x1000, scoped, tag = 'output window, operand 0']
    #allocation4 [shape = 's32[2]{0}', space=sflag, size = 0x8, scoped, tag = 'scoped memory for tpu_custom_call.1']
    %13 = vsyncpa [#allocation4], 0
    %s14 = scalar_lea.sflag [#allocation4], 1
    %15 = vsyncpa %s14, 0
    loop: start=0, step=1, limit=4
    $region2: #{tpu_custom_call.1} parent=1 // loop_pre_header
      _
    $region3: #{tpu_custom_call.1} parent=1 // loop_header
      %s17 = sphi 0, %s21
      %p18 = scmp.ge.s32.totalorder %s17, 4
      %s27 = sphi 0, %s29
      %s30 = sphi 0, %s27
      %s31 = sphi 0, %s30
      %s47 = sphi 0, %s31
      %s51 = sphi 0, %s51
      %s53 = sphi 0, %s51
      %s54 = sphi 0, %s53
      %s68 = sphi 0, %s54
      %s72 = sphi 0, %s72
      %s74 = sphi 0, %s72
      %s75 = sphi 0, %s74
      %s89 = sphi 0, %s75
      %s93 = sphi 0, %s93
      %s95 = sphi 0, %s93
      %s96 = sphi 0, %s95
      %s110 = sphi 0, %s96
      %s114 = sphi 0, %s114
      %s116 = sphi 0, %s114
      %s117 = sphi 0, %s116
      %s131 = sphi 0, %s117
      %s135 = sphi 0, %s135
      %s137 = sphi 0, %s135
      %s138 = sphi 0, %s137
      %s152 = sphi 0, %s138
      %s156 = sphi 0, %s156
      %s158 = sphi 0, %s156
      %s159 = sphi 0, %s158
      %s173 = sphi 0, %s159
      %s179 = sphi 0, %s181
      %s182 = sphi 0, %s179
      %s183 = sphi 0, %s182
      %s199 = sphi 0, %s183
    $region4: #{tpu_custom_call.1} parent=1 // loop_header_branch
      %20 = sbr.rel (%p18) target = $region8
    $region5: #{tpu_custom_call.1} parent=1 // loop_body
      %s22 = ssub.s32 %s17, 1
      %s23 = ssub.s32 %s17, 2
      %s24 = sadd.s32 %s17, 1
      %s25 = ssub.s32 %s17, %s24
      %p26 = scmp.eq.s32.totalorder %s25, 0
      %s28 = sadd.s32 %s27, 1
      %s29 = scalar_select %p26, %s27, %s28
      %p32 = pneg %p26
      %p33 = scmp.eq.s32.totalorder %s17, 1
      %p34 = por %p32, %p33
      %p35 = scmp.ne.s32.totalorder %s27, %s30
      %p36 = scmp.eq.s32.totalorder %s17, 0
      %p37 = por %p35, %p36
      %p38 = scmp.ne.s32.totalorder %s27, %s30
      %p39 = scmp.eq.s32.totalorder %s22, 1
      %p40 = por %p38, %p39
      %p41 = scmp.ne.s32.totalorder %s30, %s31
      %p42 = scmp.eq.s32.totalorder %s22, 0
      %p43 = por %p41, %p42
      %p44 = scmp.ne.s32.totalorder %s30, %s31
      %p45 = scmp.eq.s32.totalorder %s23, 1
      %p46 = por %p44, %p45
      %p48 = scmp.ne.s32.totalorder %s31, %s47
      %p49 = scmp.eq.s32.totalorder %s23, 0
      %p50 = por %p48, %p49
      %s52 = sadd.s32 %s51, 1
      %p55 = scmp.eq.s32.totalorder %s17, 1
      %p56 = scmp.ne.s32.totalorder %s51, %s53
      %p57 = scmp.eq.s32.totalorder %s17, 0
      %p58 = por %p56, %p57
      %p59 = scmp.ne.s32.totalorder %s51, %s53
      %p60 = scmp.eq.s32.totalorder %s22, 1
      %p61 = por %p59, %p60
      %p62 = scmp.ne.s32.totalorder %s53, %s54
      %p63 = scmp.eq.s32.totalorder %s22, 0
      %p64 = por %p62, %p63
      %p65 = scmp.ne.s32.totalorder %s53, %s54
      %p66 = scmp.eq.s32.totalorder %s23, 1
      %p67 = por %p65, %p66
      %p69 = scmp.ne.s32.totalorder %s54, %s68
      %p70 = scmp.eq.s32.totalorder %s23, 0
      %p71 = por %p69, %p70
      %s73 = sadd.s32 %s72, 1
      %p76 = scmp.eq.s32.totalorder %s17, 1
      %p77 = scmp.ne.s32.totalorder %s72, %s74
      %p78 = scmp.eq.s32.totalorder %s17, 0
      %p79 = por %p77, %p78
      %p80 = scmp.ne.s32.totalorder %s72, %s74
      %p81 = scmp.eq.s32.totalorder %s22, 1
      %p82 = por %p80, %p81
      %p83 = scmp.ne.s32.totalorder %s74, %s75
      %p84 = scmp.eq.s32.totalorder %s22, 0
      %p85 = por %p83, %p84
      %p86 = scmp.ne.s32.totalorder %s74, %s75
      %p87 = scmp.eq.s32.totalorder %s23, 1
      %p88 = por %p86, %p87
      %p90 = scmp.ne.s32.totalorder %s75, %s89
      %p91 = scmp.eq.s32.totalorder %s23, 0
      %p92 = por %p90, %p91
      %s94 = sadd.s32 %s93, 1
      %p97 = scmp.eq.s32.totalorder %s17, 1
      %p98 = scmp.ne.s32.totalorder %s93, %s95
      %p99 = scmp.eq.s32.totalorder %s17, 0
      %p100 = por %p98, %p99
      %p101 = scmp.ne.s32.totalorder %s93, %s95
      %p102 = scmp.eq.s32.totalorder %s22, 1
      %p103 = por %p101, %p102
      %p104 = scmp.ne.s32.totalorder %s95, %s96
      %p105 = scmp.eq.s32.totalorder %s22, 0
      %p106 = por %p104, %p105
      %p107 = scmp.ne.s32.totalorder %s95, %s96
      %p108 = scmp.eq.s32.totalorder %s23, 1
      %p109 = por %p107, %p108
      %p111 = scmp.ne.s32.totalorder %s96, %s110
      %p112 = scmp.eq.s32.totalorder %s23, 0
      %p113 = por %p111, %p112
      %s115 = sadd.s32 %s114, 1
      %p118 = scmp.eq.s32.totalorder %s17, 1
      %p119 = scmp.ne.s32.totalorder %s114, %s116
      %p120 = scmp.eq.s32.totalorder %s17, 0
      %p121 = por %p119, %p120
      %p122 = scmp.ne.s32.totalorder %s114, %s116
      %p123 = scmp.eq.s32.totalorder %s22, 1
      %p124 = por %p122, %p123
      %p125 = scmp.ne.s32.totalorder %s116, %s117
      %p126 = scmp.eq.s32.totalorder %s22, 0
      %p127 = por %p125, %p126
      %p128 = scmp.ne.s32.totalorder %s116, %s117
      %p129 = scmp.eq.s32.totalorder %s23, 1
      %p130 = por %p128, %p129
      %p132 = scmp.ne.s32.totalorder %s117, %s131
      %p133 = scmp.eq.s32.totalorder %s23, 0
      %p134 = por %p132, %p133
      %s136 = sadd.s32 %s135, 1
      %p139 = scmp.eq.s32.totalorder %s17, 1
      %p140 = scmp.ne.s32.totalorder %s135, %s137
      %p141 = scmp.eq.s32.totalorder %s17, 0
      %p142 = por %p140, %p141
      %p143 = scmp.ne.s32.totalorder %s135, %s137
      %p144 = scmp.eq.s32.totalorder %s22, 1
      %p145 = por %p143, %p144
      %p146 = scmp.ne.s32.totalorder %s137, %s138
      %p147 = scmp.eq.s32.totalorder %s22, 0
      %p148 = por %p146, %p147
      %p149 = scmp.ne.s32.totalorder %s137, %s138
      %p150 = scmp.eq.s32.totalorder %s23, 1
      %p151 = por %p149, %p150
      %p153 = scmp.ne.s32.totalorder %s138, %s152
      %p154 = scmp.eq.s32.totalorder %s23, 0
      %p155 = por %p153, %p154
      %s157 = sadd.s32 %s156, 1
      %p160 = scmp.eq.s32.totalorder %s17, 1
      %p161 = scmp.ne.s32.totalorder %s156, %s158
      %p162 = scmp.eq.s32.totalorder %s17, 0
      %p163 = por %p161, %p162
      %p164 = scmp.ne.s32.totalorder %s156, %s158
      %p165 = scmp.eq.s32.totalorder %s22, 1
      %p166 = por %p164, %p165
      %p167 = scmp.ne.s32.totalorder %s158, %s159
      %p168 = scmp.eq.s32.totalorder %s22, 0
      %p169 = por %p167, %p168
      %p170 = scmp.ne.s32.totalorder %s158, %s159
      %p171 = scmp.eq.s32.totalorder %s23, 1
      %p172 = por %p170, %p171
      %p174 = scmp.ne.s32.totalorder %s159, %s173
      %p175 = scmp.eq.s32.totalorder %s23, 0
      %p176 = por %p174, %p175
      %s177 = ssub.s32 %s17, %s24
      %p178 = scmp.eq.s32.totalorder %s177, 0
      %s180 = sadd.s32 %s179, 1
      %s181 = scalar_select %p178, %s179, %s180
      %p184 = pneg %p178
      %p185 = scmp.eq.s32.totalorder %s17, 1
      %p186 = por %p184, %p185
      %p187 = scmp.ne.s32.totalorder %s179, %s182
      %p188 = scmp.eq.s32.totalorder %s17, 0
      %p189 = por %p187, %p188
      %p190 = scmp.ne.s32.totalorder %s179, %s182
      %p191 = scmp.eq.s32.totalorder %s22, 1
      %p192 = por %p190, %p191
      %p193 = scmp.ne.s32.totalorder %s182, %s183
      %p194 = scmp.eq.s32.totalorder %s22, 0
      %p195 = por %p193, %p194
      %p196 = scmp.ne.s32.totalorder %s182, %s183
      %p197 = scmp.eq.s32.totalorder %s23, 1
      %p198 = por %p196, %p197
      %p200 = scmp.ne.s32.totalorder %s183, %s199
      %p201 = scmp.eq.s32.totalorder %s23, 0
      %p202 = por %p200, %p201
      %p203 = scmp.le.s32.totalorder 1, %s17
      %p204 = scmp.lt.s32.totalorder %s17, 3
      %p205 = pnand %p203, %p204
      %p206 = pneg %p205
      // Predicated region
      $region9: #{tpu_custom_call.1} parent=5 // pred_check
        _
      $region10: #{tpu_custom_call.1} parent=5 // pred_check_branch
        %208 = sbr.rel (%p205) target = $region12
      $region11: #{tpu_custom_call.1} parent=5 // pred_region
        %s209 = ssub.s32 %s17, 1
        // Predicated region
        $region13: #{tpu_custom_call.1} parent=11 // pred_check
          %p210 = pneg %p64
        $region14: #{tpu_custom_call.1} parent=11 // pred_check_branch
          %212 = sbr.rel (%p210) target = $region16
        $region15: #{tpu_custom_call.1} parent=11 // pred_region
          _
        $region16: #{tpu_custom_call.1} parent=11 // pred_fallthru
          _
        // Predicated region
        $region17: #{tpu_custom_call.1} parent=11 // pred_check
          %p213 = pneg %p85
        $region18: #{tpu_custom_call.1} parent=11 // pred_check_branch
          %215 = sbr.rel (%p213) target = $region20
        $region19: #{tpu_custom_call.1} parent=11 // pred_region
          _
        $region20: #{tpu_custom_call.1} parent=11 // pred_fallthru
          _
        // Predicated region
        $region21: #{tpu_custom_call.1} parent=11 // pred_check
          %p216 = pneg %p106
        $region22: #{tpu_custom_call.1} parent=11 // pred_check_branch
          %218 = sbr.rel (%p216) target = $region24
        $region23: #{tpu_custom_call.1} parent=11 // pred_region
          _
        $region24: #{tpu_custom_call.1} parent=11 // pred_fallthru
          _
        // Predicated region
        $region25: #{tpu_custom_call.1} parent=11 // pred_check
          %p219 = pneg %p127
        $region26: #{tpu_custom_call.1} parent=11 // pred_check_branch
          %221 = sbr.rel (%p219) target = $region28
        $region27: #{tpu_custom_call.1} parent=11 // pred_region
          _
        $region28: #{tpu_custom_call.1} parent=11 // pred_fallthru
          _
        // Predicated region
        $region29: #{tpu_custom_call.1} parent=11 // pred_check
          %p222 = pneg %p148
        $region30: #{tpu_custom_call.1} parent=11 // pred_check_branch
          %224 = sbr.rel (%p222) target = $region32
        $region31: #{tpu_custom_call.1} parent=11 // pred_region
          _
        $region32: #{tpu_custom_call.1} parent=11 // pred_fallthru
          _
        // Predicated region
        $region33: #{tpu_custom_call.1} parent=11 // pred_check
          %p225 = pneg %p169
        $region34: #{tpu_custom_call.1} parent=11 // pred_check_branch
          %227 = sbr.rel (%p225) target = $region36
        $region35: #{tpu_custom_call.1} parent=11 // pred_region
          _
        $region36: #{tpu_custom_call.1} parent=11 // pred_fallthru
          _
      $region12: #{tpu_custom_call.1} parent=5 // pred_fallthru
        _
      %p228 = scmp.lt.s32.totalorder %s17, 2
      // Predicated region
      $region37: #{tpu_custom_call.1} parent=5 // pred_check
        %p229 = pneg %p228
      $region38: #{tpu_custom_call.1} parent=5 // pred_check_branch
        %231 = sbr.rel (%p229) target = $region40
      $region39: #{tpu_custom_call.1} parent=5 // pred_region
        // Predicated region
        $region41: #{tpu_custom_call.1} parent=39 // pred_check
          %p232 = pneg %p37
        $region42: #{tpu_custom_call.1} parent=39 // pred_check_branch
          %234 = sbr.rel (%p232) target = $region44
        $region43: #{tpu_custom_call.1} parent=39 // pred_region
          %s235 = smul.u32 4, %s17
          %p236 = scmp.lt.s32.totalorder %s235, 7
          %s237 = scalar_select %p236, %s235, 7
          %s238 = scalar_lea.vmem %s0, %s237
          %s239 = smul.u32 4, %s17
        $region44: #{tpu_custom_call.1} parent=39 // pred_fallthru
          _
      $region40: #{tpu_custom_call.1} parent=5 // pred_fallthru
        _
      %p240 = scmp.le.s32.totalorder 1, %s17
      %p241 = scmp.lt.s32.totalorder %s17, 3
      %p242 = pnand %p240, %p241
      %p243 = pneg %p242
      // Predicated region
      $region45: #{tpu_custom_call.1} parent=5 // pred_check
        _
      $region46: #{tpu_custom_call.1} parent=5 // pred_check_branch
        %245 = sbr.rel (%p242) target = $region48
      $region47: #{tpu_custom_call.1} parent=5 // pred_region
        %s246 = ssub.s32 %s17, 1
        %s247 = smul.u32 4, %s22
        %p248 = scmp.lt.s32.totalorder %s247, 7
        %s249 = scalar_select %p248, %s247, 7
        %s250 = scalar_lea.vmem %s0, %s249
        %p251 = pneg %p43
        %p252 = pneg %p40
        %p253 = pneg %p64
        %p254 = pneg %p61
        %p255 = pneg %p85
        %p256 = pneg %p82
        %p257 = pneg %p106
        %p258 = pneg %p103
        %p259 = pneg %p127
        %p260 = pneg %p124
        %p261 = pneg %p148
        %p262 = pneg %p145
        %p263 = pneg %p169
        %p264 = pneg %p166
        %p265 = pneg %p195
        %p266 = pneg %p192
        %s267 = sand.u32 %s182, 1
        %s268 = scalar_lea.sflag [#allocation4], %s267
        %s269 = sand.u32 %s182, 1
        %s270 = smul.addr %s269, 4
        %s271 = scalar_lea.vmem [#allocation3], %s270
        %s272 = smul.u32 4, %s22
        %p273 = scmp.lt.s32.totalorder %s272, 7
        %s274 = scalar_select %p273, %s272, 7
        %s275 = scalar_lea.vmem %s0, %s274
        %s276 = smul.u32 4, %s22
        %s277 = smul.u32 4, %s22
        %v278 = vld [vmem:[%s1] sm:$0xff]
        %v279 = vld [vmem:[%s1 + $0x8] sm:$0xff]
        %v280 = vld [vmem:[%s1 + $0x10] sm:$0xf]
        %v281 = vld [vmem:[%s2] sm:$0xff]
        %v282 = vld [vmem:[%s2 + $0x8] sm:$0xff]
        %v283 = vld [vmem:[%s2 + $0x10] sm:$0xf]
        %v284 = vld [vmem:[%s3] sm:$0xff]
        %v285 = vld [vmem:[%s3 + $0x8] sm:$0xff]
        %v286 = vld [vmem:[%s3 + $0x10] sm:$0xf]
        %v287 = vld [vmem:[%s4] sm:$0xff]
        %v288 = vld [vmem:[%s4 + $0x8] sm:$0xff]
        %v289 = vld [vmem:[%s4 + $0x10] sm:$0xf]
        %v290 = vld [vmem:[%s5] sm:$0x1]
        %s291 = sld [smem:[#allocation2]]
        %v292 = vld [vmem:[%s275] sm:$0xf]
        %294 = vset.pattern.permute.xlu0 0
        %295 = vperm.xlu0 %294, %v278
        %v296 = vpop.permute.xlu0 %295
        %299 = vset.pattern.permute.xlu0 0
        %300 = vperm.xlu0 %299, %v279
        %v301 = vpop.permute.xlu0 %300
        %304 = vset.pattern.permute.xlu0 0
        %305 = vperm.xlu0 %304, %v280
        %v306 = vpop.permute.xlu0 %305
        %v309 = vlaneseq
        %v310 = vshrl.u32 %v309, 7
        %v311 = vsub.s32 0, %v310
        %v312 = vrot.slane %v292, %v311
        %v313 = vlaneseq
        %v314 = vshrl.u32 %v313, 7
        %v315 = vsub.s32 1, %v314
        %v316 = vrot.slane %v292, %v315
        %v317 = vlaneseq
        %v318 = vshrl.u32 %v317, 7
        %v319 = vsub.s32 2, %v318
        %v320 = vrot.slane %v292, %v319
        %v321 = vlaneseq
        %v322 = vshrl.u32 %v321, 7
        %v323 = vsub.s32 3, %v322
        %v324 = vrot.slane %v292, %v323
        %v329 = vmul.f32 %v296, %v312
        %v330 = vmul.f32 %v296, %v316
        %v331 = vmul.f32 %v296, %v320
        %v332 = vmul.f32 %v296, %v324
        %v333 = vmul.f32 %v301, %v312
        %v334 = vmul.f32 %v301, %v316
        %v335 = vmul.f32 %v301, %v320
        %v336 = vmul.f32 %v301, %v324
        %v337 = vmul.f32 %v306, %v312
        %v338 = vmul.f32 %v306, %v316
        %v339 = vmul.f32 %v306, %v320
        %v340 = vmul.f32 %v306, %v324
        %342 = vset.pattern.permute.xlu0 0
        %343 = vperm.xlu0 %342, %v281
        %v344 = vpop.permute.xlu0 %343
        %347 = vset.pattern.permute.xlu0 0
        %348 = vperm.xlu0 %347, %v282
        %v349 = vpop.permute.xlu0 %348
        %352 = vset.pattern.permute.xlu0 0
        %353 = vperm.xlu0 %352, %v283
        %v354 = vpop.permute.xlu0 %353
        %v356 = vadd.f32 %v329, %v344
        %v357 = vadd.f32 %v330, %v344
        %v358 = vadd.f32 %v331, %v344
        %v359 = vadd.f32 %v332, %v344
        %v360 = vadd.f32 %v333, %v349
        %v361 = vadd.f32 %v334, %v349
        %v362 = vadd.f32 %v335, %v349
        %v363 = vadd.f32 %v336, %v349
        %v364 = vadd.f32 %v337, %v354
        %v365 = vadd.f32 %v338, %v354
        %v366 = vadd.f32 %v339, %v354
        %v367 = vadd.f32 %v340, %v354
        %v368 = vmul.f32 %v356, 1.442695
        %v369 = vpow.pop %v368
        %v370 = vmul.f32 %v357, 1.442695
        %v371 = vpow.pop %v370
        %v372 = vmul.f32 %v358, 1.442695
        %v373 = vpow.pop %v372
        %v374 = vmul.f32 %v359, 1.442695
        %v375 = vpow.pop %v374
        %v376 = vmul.f32 %v360, 1.442695
        %v377 = vpow.pop %v376
        %v378 = vmul.f32 %v361, 1.442695
        %v379 = vpow.pop %v378
        %v380 = vmul.f32 %v362, 1.442695
        %v381 = vpow.pop %v380
        %v382 = vmul.f32 %v363, 1.442695
        %v383 = vpow.pop %v382
        %v384 = vmul.f32 %v364, 1.442695
        %v385 = vpow.pop %v384
        %v386 = vmul.f32 %v365, 1.442695
        %v387 = vpow.pop %v386
        %v388 = vmul.f32 %v366, 1.442695
        %v389 = vpow.pop %v388
        %v390 = vmul.f32 %v367, 1.442695
        %v391 = vpow.pop %v390
        %v392 = vand.u32 2147483647, %v369
        %vm393 = vcmp.le.f32.partialorder %v392, 0.7853982
        %vm394 = vcmp.lt.s32.totalorder %v369, 0
        %v395 = vand.u32 %v369, 2139095040
        %v396 = vshrl.u32 %v395, 23
        %v397 = vsub.s32 %v396, 127
        %v398 = vand.u32 2147483647, %v369
        %v399 = vand.u32 %v398, 8388607
        %v400 = vor.u32 %v399, 8388608
        %v401 = vsub.s32 0, %v400
        %v402 = vadd.s32 %v397, 1
        %vm403 = vcmp.gt.s32.totalorder %v402, 0
        %v404 = vsel %vm403, %v402, 0
        %v405 = vshrl.u32 %v404, 5
        %v406 = vand.u32 %v404, 31
        %v407 = vsub.s32 32, %v406
        %v408 = vshrl.u32 683565275, %v407
        %v409 = vshll.u32 683565275, %v406
        %v410 = vshrl.u32 2475754826, %v407
        %v411 = vor.u32 %v409, %v410
        %v412 = vshll.u32 2475754826, %v406
        %v413 = vshrl.u32 2131351028, %v407
        %v414 = vor.u32 %v412, %v413
        %v415 = vshll.u32 2131351028, %v406
        %v416 = vshrl.u32 2102212464, %v407
        %v417 = vor.u32 %v415, %v416
        %v418 = vshll.u32 2102212464, %v406
        %v419 = vshrl.u32 920167782, %v407
        %v420 = vor.u32 %v418, %v419
        %v421 = vshll.u32 920167782, %v406
        %v422 = vshrl.u32 1326507024, %v407
        %v423 = vor.u32 %v421, %v422
        %vm424 = vcmp.lt.s32.totalorder %v405, 1
        %vm425 = vcmp.lt.s32.totalorder %v405, 2
        %vm426 = vcmp.lt.s32.totalorder %v405, 3
        %vm427 = vcmp.lt.s32.totalorder %v405, 4
        %v428 = vsel %vm424, %v408, %v411
        %v429 = vsel %vm427, %v417, 2102212464
        %v430 = vsel %vm426, %v414, %v429
        %v431 = vsel %vm425, %v428, %v430
        %v432 = vsel %vm424, %v411, %v414
        %v433 = vsel %vm427, %v420, 920167782
        %v434 = vsel %vm426, %v417, %v433
        %v435 = vsel %vm425, %v432, %v434
        %v436 = vsel %vm424, %v414, %v417
        %v437 = vsel %vm427, %v423, 1326507024
        %v438 = vsel %vm426, %v420, %v437
        %v439 = vsel %vm425, %v436, %v438
        %v440 = vshll.u32 %v400, 8
        %v441 = vmul.u32.u64.compose %v440, %v439
        %v442 = vextract.low.u32 %v441
        %v443 = vextract.high.u32 %v441
        %v444 = vmul.u32.u64.compose %v440, %v435
        %v445 = vextract.low.u32 %v444
        %v446 = vextract.high.u32 %v444
        %v447 = vmul.u32 %v440, %v431
        %v448 = vadd.s32 %v443, %v445
        %vm449 = vc.u32 %v443, %v445
        %v450 = vadd.s32 %v446, 1
        %v451 = vsel %vm449, %v450, %v446
        %v452 = vadd.s32 %v447, %v451
        %v453 = vadd.s32 %v452, 536870912
        %v454 = vshrl.u32 %v453, 30
        %v455 = vshll.u32 %v454, 30
        %v456 = vsub.s32 %v452, %v455
        %vm457 = vcmp.lt.s32.totalorder %v456, 0
        %v458 = vsub.s32 0, %v456
        %v459 = vsel %vm457, %v458, %v456
        %v460 = vclz %v459
        %v461 = vsub.s32 %v460, 2
        %vm462 = vcmp.gt.s32.totalorder 0, %v461
        %v463 = vsel %vm462, 0, %v461
        %v464 = vsub.s32 32, %v463
        %v465 = vshll.u32 %v456, %v463
        %v466 = vshrl.u32 %v448, %v464
        %v467 = vor.u32 %v465, %v466
        %v468 = vsub.s32 4294967266, %v463
        %v469 = vadd.s32 %v468, 127
        %v470 = vshll.u32 %v469, 23
        %v471 = vor.u32 4788187, %v470
        %v472 = vand.u32 2147483647, %v471
        %v474 = vcvt.s32.f32 %v467
        %v475 = vmul.f32 %v474, %v472
        %v476 = vxor.u32 %v475, 2147483648
        %v477 = vsel %vm394, %v476, %v475
        %v478 = vsub.s32 4, %v454
        %v479 = vsel %vm394, %v478, %v454
        %v480 = vsel %vm393, %v369, %v477
        %v481 = vsel %vm393, 0, %v479
        %v482 = vcosq.f32.pop %v480
        %v483 = vsinq.f32.pop %v480
        %vm484 = vweird.f32 %v369
        %v485 = vadd.s32 %v481, 3
        %v486 = vand.u32 %v485, 3
        %vm487 = vcmp.lt.s32.totalorder %v486, 2
        %vm488 = vcmp.eq.s32.totalorder %v486, 0
        %v489 = vxor.u32 %v483, 2147483648
        %v490 = vsel %vm488, %v482, %v489
        %vm491 = vcmp.eq.s32.totalorder %v486, 2
        %v492 = vxor.u32 %v482, 2147483648
        %v493 = vsel %vm491, %v492, %v483
        %v494 = vsel %vm487, %v490, %v493
        %v495 = vsel %vm484, nan, %v494
        %v496 = vand.u32 2147483647, %v371
        %vm497 = vcmp.le.f32.partialorder %v496, 0.7853982
        %vm498 = vcmp.lt.s32.totalorder %v371, 0
        %v499 = vand.u32 %v371, 2139095040
        %v500 = vshrl.u32 %v499, 23
        %v501 = vsub.s32 %v500, 127
        %v502 = vand.u32 2147483647, %v371
        %v503 = vand.u32 %v502, 8388607
        %v504 = vor.u32 %v503, 8388608
        %v505 = vsub.s32 0, %v504
        %v506 = vadd.s32 %v501, 1
        %vm507 = vcmp.gt.s32.totalorder %v506, 0
        %v508 = vsel %vm507, %v506, 0
        %v509 = vshrl.u32 %v508, 5
        %v510 = vand.u32 %v508, 31
        %v511 = vsub.s32 32, %v510
        %v512 = vshrl.u32 683565275, %v511
        %v513 = vshll.u32 683565275, %v510
        %v514 = vshrl.u32 2475754826, %v511
        %v515 = vor.u32 %v513, %v514
        %v516 = vshll.u32 2475754826, %v510
        %v517 = vshrl.u32 2131351028, %v511
        %v518 = vor.u32 %v516, %v517
        %v519 = vshll.u32 2131351028, %v510
        %v520 = vshrl.u32 2102212464, %v511
        %v521 = vor.u32 %v519, %v520
        %v522 = vshll.u32 2102212464, %v510
        %v523 = vshrl.u32 920167782, %v511
        %v524 = vor.u32 %v522, %v523
        %v525 = vshll.u32 920167782, %v510
        %v526 = vshrl.u32 1326507024, %v511
        %v527 = vor.u32 %v525, %v526
        %vm528 = vcmp.lt.s32.totalorder %v509, 1
        %vm529 = vcmp.lt.s32.totalorder %v509, 2
        %vm530 = vcmp.lt.s32.totalorder %v509, 3
        %vm531 = vcmp.lt.s32.totalorder %v509, 4
        %v532 = vsel %vm528, %v512, %v515
        %v533 = vsel %vm531, %v521, 2102212464
        %v534 = vsel %vm530, %v518, %v533
        %v535 = vsel %vm529, %v532, %v534
        %v536 = vsel %vm528, %v515, %v518
        %v537 = vsel %vm531, %v524, 920167782
        %v538 = vsel %vm530, %v521, %v537
        %v539 = vsel %vm529, %v536, %v538
        %v540 = vsel %vm528, %v518, %v521
        %v541 = vsel %vm531, %v527, 1326507024
        %v542 = vsel %vm530, %v524, %v541
        %v543 = vsel %vm529, %v540, %v542
        %v544 = vshll.u32 %v504, 8
        %v545 = vmul.u32.u64.compose %v544, %v543
        %v546 = vextract.low.u32 %v545
        %v547 = vextract.high.u32 %v545
        %v548 = vmul.u32.u64.compose %v544, %v539
        %v549 = vextract.low.u32 %v548
        %v550 = vextract.high.u32 %v548
        %v551 = vmul.u32 %v544, %v535
        %v552 = vadd.s32 %v547, %v549
        %vm553 = vc.u32 %v547, %v549
        %v554 = vadd.s32 %v550, 1
        %v555 = vsel %vm553, %v554, %v550
        %v556 = vadd.s32 %v551, %v555
        %v557 = vadd.s32 %v556, 536870912
        %v558 = vshrl.u32 %v557, 30
        %v559 = vshll.u32 %v558, 30
        %v560 = vsub.s32 %v556, %v559
        %vm561 = vcmp.lt.s32.totalorder %v560, 0
        %v562 = vsub.s32 0, %v560
        %v563 = vsel %vm561, %v562, %v560
        %v564 = vclz %v563
        %v565 = vsub.s32 %v564, 2
        %vm566 = vcmp.gt.s32.totalorder 0, %v565
        %v567 = vsel %vm566, 0, %v565
        %v568 = vsub.s32 32, %v567
        %v569 = vshll.u32 %v560, %v567
        %v570 = vshrl.u32 %v552, %v568
        %v571 = vor.u32 %v569, %v570
        %v572 = vsub.s32 4294967266, %v567
        %v573 = vadd.s32 %v572, 127
        %v574 = vshll.u32 %v573, 23
        %v575 = vor.u32 4788187, %v574
        %v576 = vand.u32 2147483647, %v575
        %v578 = vcvt.s32.f32 %v571
        %v579 = vmul.f32 %v578, %v576
        %v580 = vxor.u32 %v579, 2147483648
        %v581 = vsel %vm498, %v580, %v579
        %v582 = vsub.s32 4, %v558
        %v583 = vsel %vm498, %v582, %v558
        %v584 = vsel %vm497, %v371, %v581
        %v585 = vsel %vm497, 0, %v583
        %v586 = vcosq.f32.pop %v584
        %v587 = vsinq.f32.pop %v584
        %vm588 = vweird.f32 %v371
        %v589 = vadd.s32 %v585, 3
        %v590 = vand.u32 %v589, 3
        %vm591 = vcmp.lt.s32.totalorder %v590, 2
        %vm592 = vcmp.eq.s32.totalorder %v590, 0
        %v593 = vxor.u32 %v587, 2147483648
        %v594 = vsel %vm592, %v586, %v593
        %vm595 = vcmp.eq.s32.totalorder %v590, 2
        %v596 = vxor.u32 %v586, 2147483648
        %v597 = vsel %vm595, %v596, %v587
        %v598 = vsel %vm591, %v594, %v597
        %v599 = vsel %vm588, nan, %v598
        %v600 = vand.u32 2147483647, %v373
        %vm601 = vcmp.le.f32.partialorder %v600, 0.7853982
        %vm602 = vcmp.lt.s32.totalorder %v373, 0
        %v603 = vand.u32 %v373, 2139095040
        %v604 = vshrl.u32 %v603, 23
        %v605 = vsub.s32 %v604, 127
        %v606 = vand.u32 2147483647, %v373
        %v607 = vand.u32 %v606, 8388607
        %v608 = vor.u32 %v607, 8388608
        %v609 = vsub.s32 0, %v608
        %v610 = vadd.s32 %v605, 1
        %vm611 = vcmp.gt.s32.totalorder %v610, 0
        %v612 = vsel %vm611, %v610, 0
        %v613 = vshrl.u32 %v612, 5
        %v614 = vand.u32 %v612, 31
        %v615 = vsub.s32 32, %v614
        %v616 = vshrl.u32 683565275, %v615
        %v617 = vshll.u32 683565275, %v614
        %v618 = vshrl.u32 2475754826, %v615
        %v619 = vor.u32 %v617, %v618
        %v620 = vshll.u32 2475754826, %v614
        %v621 = vshrl.u32 2131351028, %v615
        %v622 = vor.u32 %v620, %v621
        %v623 = vshll.u32 2131351028, %v614
        %v624 = vshrl.u32 2102212464, %v615
        %v625 = vor.u32 %v623, %v624
        %v626 = vshll.u32 2102212464, %v614
        %v627 = vshrl.u32 920167782, %v615
        %v628 = vor.u32 %v626, %v627
        %v629 = vshll.u32 920167782, %v614
        %v630 = vshrl.u32 1326507024, %v615
        %v631 = vor.u32 %v629, %v630
        %vm632 = vcmp.lt.s32.totalorder %v613, 1
        %vm633 = vcmp.lt.s32.totalorder %v613, 2
        %vm634 = vcmp.lt.s32.totalorder %v613, 3
        %vm635 = vcmp.lt.s32.totalorder %v613, 4
        %v636 = vsel %vm632, %v616, %v619
        %v637 = vsel %vm635, %v625, 2102212464
        %v638 = vsel %vm634, %v622, %v637
        %v639 = vsel %vm633, %v636, %v638
        %v640 = vsel %vm632, %v619, %v622
        %v641 = vsel %vm635, %v628, 920167782
        %v642 = vsel %vm634, %v625, %v641
        %v643 = vsel %vm633, %v640, %v642
        %v644 = vsel %vm632, %v622, %v625
        %v645 = vsel %vm635, %v631, 1326507024
        %v646 = vsel %vm634, %v628, %v645
        %v647 = vsel %vm633, %v644, %v646
        %v648 = vshll.u32 %v608, 8
        %v649 = vmul.u32.u64.compose %v648, %v647
        %v650 = vextract.low.u32 %v649
        %v651 = vextract.high.u32 %v649
        %v652 = vmul.u32.u64.compose %v648, %v643
        %v653 = vextract.low.u32 %v652
        %v654 = vextract.high.u32 %v652
        %v655 = vmul.u32 %v648, %v639
        %v656 = vadd.s32 %v651, %v653
        %vm657 = vc.u32 %v651, %v653
        %v658 = vadd.s32 %v654, 1
        %v659 = vsel %vm657, %v658, %v654
        %v660 = vadd.s32 %v655, %v659
        %v661 = vadd.s32 %v660, 536870912
        %v662 = vshrl.u32 %v661, 30
        %v663 = vshll.u32 %v662, 30
        %v664 = vsub.s32 %v660, %v663
        %vm665 = vcmp.lt.s32.totalorder %v664, 0
        %v666 = vsub.s32 0, %v664
        %v667 = vsel %vm665, %v666, %v664
        %v668 = vclz %v667
        %v669 = vsub.s32 %v668, 2
        %vm670 = vcmp.gt.s32.totalorder 0, %v669
        %v671 = vsel %vm670, 0, %v669
        %v672 = vsub.s32 32, %v671
        %v673 = vshll.u32 %v664, %v671
        %v674 = vshrl.u32 %v656, %v672
        %v675 = vor.u32 %v673, %v674
        %v676 = vsub.s32 4294967266, %v671
        %v677 = vadd.s32 %v676, 127
        %v678 = vshll.u32 %v677, 23
        %v679 = vor.u32 4788187, %v678
        %v680 = vand.u32 2147483647, %v679
        %v682 = vcvt.s32.f32 %v675
        %v683 = vmul.f32 %v682, %v680
        %v684 = vxor.u32 %v683, 2147483648
        %v685 = vsel %vm602, %v684, %v683
        %v686 = vsub.s32 4, %v662
        %v687 = vsel %vm602, %v686, %v662
        %v688 = vsel %vm601, %v373, %v685
        %v689 = vsel %vm601, 0, %v687
        %v690 = vcosq.f32.pop %v688
        %v691 = vsinq.f32.pop %v688
        %vm692 = vweird.f32 %v373
        %v693 = vadd.s32 %v689, 3
        %v694 = vand.u32 %v693, 3
        %vm695 = vcmp.lt.s32.totalorder %v694, 2
        %vm696 = vcmp.eq.s32.totalorder %v694, 0
        %v697 = vxor.u32 %v691, 2147483648
        %v698 = vsel %vm696, %v690, %v697
        %vm699 = vcmp.eq.s32.totalorder %v694, 2
        %v700 = vxor.u32 %v690, 2147483648
        %v701 = vsel %vm699, %v700, %v691
        %v702 = vsel %vm695, %v698, %v701
        %v703 = vsel %vm692, nan, %v702
        %v704 = vand.u32 2147483647, %v375
        %vm705 = vcmp.le.f32.partialorder %v704, 0.7853982
        %vm706 = vcmp.lt.s32.totalorder %v375, 0
        %v707 = vand.u32 %v375, 2139095040
        %v708 = vshrl.u32 %v707, 23
        %v709 = vsub.s32 %v708, 127
        %v710 = vand.u32 2147483647, %v375
        %v711 = vand.u32 %v710, 8388607
        %v712 = vor.u32 %v711, 8388608
        %v713 = vsub.s32 0, %v712
        %v714 = vadd.s32 %v709, 1
        %vm715 = vcmp.gt.s32.totalorder %v714, 0
        %v716 = vsel %vm715, %v714, 0
        %v717 = vshrl.u32 %v716, 5
        %v718 = vand.u32 %v716, 31
        %v719 = vsub.s32 32, %v718
        %v720 = vshrl.u32 683565275, %v719
        %v721 = vshll.u32 683565275, %v718
        %v722 = vshrl.u32 2475754826, %v719
        %v723 = vor.u32 %v721, %v722
        %v724 = vshll.u32 2475754826, %v718
        %v725 = vshrl.u32 2131351028, %v719
        %v726 = vor.u32 %v724, %v725
        %v727 = vshll.u32 2131351028, %v718
        %v728 = vshrl.u32 2102212464, %v719
        %v729 = vor.u32 %v727, %v728
        %v730 = vshll.u32 2102212464, %v718
        %v731 = vshrl.u32 920167782, %v719
        %v732 = vor.u32 %v730, %v731
        %v733 = vshll.u32 920167782, %v718
        %v734 = vshrl.u32 1326507024, %v719
        %v735 = vor.u32 %v733, %v734
        %vm736 = vcmp.lt.s32.totalorder %v717, 1
        %vm737 = vcmp.lt.s32.totalorder %v717, 2
        %vm738 = vcmp.lt.s32.totalorder %v717, 3
        %vm739 = vcmp.lt.s32.totalorder %v717, 4
        %v740 = vsel %vm736, %v720, %v723
        %v741 = vsel %vm739, %v729, 2102212464
        %v742 = vsel %vm738, %v726, %v741
        %v743 = vsel %vm737, %v740, %v742
        %v744 = vsel %vm736, %v723, %v726
        %v745 = vsel %vm739, %v732, 920167782
        %v746 = vsel %vm738, %v729, %v745
        %v747 = vsel %vm737, %v744, %v746
        %v748 = vsel %vm736, %v726, %v729
        %v749 = vsel %vm739, %v735, 1326507024
        %v750 = vsel %vm738, %v732, %v749
        %v751 = vsel %vm737, %v748, %v750
        %v752 = vshll.u32 %v712, 8
        %v753 = vmul.u32.u64.compose %v752, %v751
        %v754 = vextract.low.u32 %v753
        %v755 = vextract.high.u32 %v753
        %v756 = vmul.u32.u64.compose %v752, %v747
        %v757 = vextract.low.u32 %v756
        %v758 = vextract.high.u32 %v756
        %v759 = vmul.u32 %v752, %v743
        %v760 = vadd.s32 %v755, %v757
        %vm761 = vc.u32 %v755, %v757
        %v762 = vadd.s32 %v758, 1
        %v763 = vsel %vm761, %v762, %v758
        %v764 = vadd.s32 %v759, %v763
        %v765 = vadd.s32 %v764, 536870912
        %v766 = vshrl.u32 %v765, 30
        %v767 = vshll.u32 %v766, 30
        %v768 = vsub.s32 %v764, %v767
        %vm769 = vcmp.lt.s32.totalorder %v768, 0
        %v770 = vsub.s32 0, %v768
        %v771 = vsel %vm769, %v770, %v768
        %v772 = vclz %v771
        %v773 = vsub.s32 %v772, 2
        %vm774 = vcmp.gt.s32.totalorder 0, %v773
        %v775 = vsel %vm774, 0, %v773
        %v776 = vsub.s32 32, %v775
        %v777 = vshll.u32 %v768, %v775
        %v778 = vshrl.u32 %v760, %v776
        %v779 = vor.u32 %v777, %v778
        %v780 = vsub.s32 4294967266, %v775
        %v781 = vadd.s32 %v780, 127
        %v782 = vshll.u32 %v781, 23
        %v783 = vor.u32 4788187, %v782
        %v784 = vand.u32 2147483647, %v783
        %v786 = vcvt.s32.f32 %v779
        %v787 = vmul.f32 %v786, %v784
        %v788 = vxor.u32 %v787, 2147483648
        %v789 = vsel %vm706, %v788, %v787
        %v790 = vsub.s32 4, %v766
        %v791 = vsel %vm706, %v790, %v766
        %v792 = vsel %vm705, %v375, %v789
        %v793 = vsel %vm705, 0, %v791
        %v794 = vcosq.f32.pop %v792
        %v795 = vsinq.f32.pop %v792
        %vm796 = vweird.f32 %v375
        %v797 = vadd.s32 %v793, 3
        %v798 = vand.u32 %v797, 3
        %vm799 = vcmp.lt.s32.totalorder %v798, 2
        %vm800 = vcmp.eq.s32.totalorder %v798, 0
        %v801 = vxor.u32 %v795, 2147483648
        %v802 = vsel %vm800, %v794, %v801
        %vm803 = vcmp.eq.s32.totalorder %v798, 2
        %v804 = vxor.u32 %v794, 2147483648
        %v805 = vsel %vm803, %v804, %v795
        %v806 = vsel %vm799, %v802, %v805
        %v807 = vsel %vm796, nan, %v806
        %v808 = vand.u32 2147483647, %v377
        %vm809 = vcmp.le.f32.partialorder %v808, 0.7853982
        %vm810 = vcmp.lt.s32.totalorder %v377, 0
        %v811 = vand.u32 %v377, 2139095040
        %v812 = vshrl.u32 %v811, 23
        %v813 = vsub.s32 %v812, 127
        %v814 = vand.u32 2147483647, %v377
        %v815 = vand.u32 %v814, 8388607
        %v816 = vor.u32 %v815, 8388608
        %v817 = vsub.s32 0, %v816
        %v818 = vadd.s32 %v813, 1
        %vm819 = vcmp.gt.s32.totalorder %v818, 0
        %v820 = vsel %vm819, %v818, 0
        %v821 = vshrl.u32 %v820, 5
        %v822 = vand.u32 %v820, 31
        %v823 = vsub.s32 32, %v822
        %v824 = vshrl.u32 683565275, %v823
        %v825 = vshll.u32 683565275, %v822
        %v826 = vshrl.u32 2475754826, %v823
        %v827 = vor.u32 %v825, %v826
        %v828 = vshll.u32 2475754826, %v822
        %v829 = vshrl.u32 2131351028, %v823
        %v830 = vor.u32 %v828, %v829
        %v831 = vshll.u32 2131351028, %v822
        %v832 = vshrl.u32 2102212464, %v823
        %v833 = vor.u32 %v831, %v832
        %v834 = vshll.u32 2102212464, %v822
        %v835 = vshrl.u32 920167782, %v823
        %v836 = vor.u32 %v834, %v835
        %v837 = vshll.u32 920167782, %v822
        %v838 = vshrl.u32 1326507024, %v823
        %v839 = vor.u32 %v837, %v838
        %vm840 = vcmp.lt.s32.totalorder %v821, 1
        %vm841 = vcmp.lt.s32.totalorder %v821, 2
        %vm842 = vcmp.lt.s32.totalorder %v821, 3
        %vm843 = vcmp.lt.s32.totalorder %v821, 4
        %v844 = vsel %vm840, %v824, %v827
        %v845 = vsel %vm843, %v833, 2102212464
        %v846 = vsel %vm842, %v830, %v845
        %v847 = vsel %vm841, %v844, %v846
        %v848 = vsel %vm840, %v827, %v830
        %v849 = vsel %vm843, %v836, 920167782
        %v850 = vsel %vm842, %v833, %v849
        %v851 = vsel %vm841, %v848, %v850
        %v852 = vsel %vm840, %v830, %v833
        %v853 = vsel %vm843, %v839, 1326507024
        %v854 = vsel %vm842, %v836, %v853
        %v855 = vsel %vm841, %v852, %v854
        %v856 = vshll.u32 %v816, 8
        %v857 = vmul.u32.u64.compose %v856, %v855
        %v858 = vextract.low.u32 %v857
        %v859 = vextract.high.u32 %v857
        %v860 = vmul.u32.u64.compose %v856, %v851
        %v861 = vextract.low.u32 %v860
        %v862 = vextract.high.u32 %v860
        %v863 = vmul.u32 %v856, %v847
        %v864 = vadd.s32 %v859, %v861
        %vm865 = vc.u32 %v859, %v861
        %v866 = vadd.s32 %v862, 1
        %v867 = vsel %vm865, %v866, %v862
        %v868 = vadd.s32 %v863, %v867
        %v869 = vadd.s32 %v868, 536870912
        %v870 = vshrl.u32 %v869, 30
        %v871 = vshll.u32 %v870, 30
        %v872 = vsub.s32 %v868, %v871
        %vm873 = vcmp.lt.s32.totalorder %v872, 0
        %v874 = vsub.s32 0, %v872
        %v875 = vsel %vm873, %v874, %v872
        %v876 = vclz %v875
        %v877 = vsub.s32 %v876, 2
        %vm878 = vcmp.gt.s32.totalorder 0, %v877
        %v879 = vsel %vm878, 0, %v877
        %v880 = vsub.s32 32, %v879
        %v881 = vshll.u32 %v872, %v879
        %v882 = vshrl.u32 %v864, %v880
        %v883 = vor.u32 %v881, %v882
        %v884 = vsub.s32 4294967266, %v879
        %v885 = vadd.s32 %v884, 127
        %v886 = vshll.u32 %v885, 23
        %v887 = vor.u32 4788187, %v886
        %v888 = vand.u32 2147483647, %v887
        %v890 = vcvt.s32.f32 %v883
        %v891 = vmul.f32 %v890, %v888
        %v892 = vxor.u32 %v891, 2147483648
        %v893 = vsel %vm810, %v892, %v891
        %v894 = vsub.s32 4, %v870
        %v895 = vsel %vm810, %v894, %v870
        %v896 = vsel %vm809, %v377, %v893
        %v897 = vsel %vm809, 0, %v895
        %v898 = vcosq.f32.pop %v896
        %v899 = vsinq.f32.pop %v896
        %vm900 = vweird.f32 %v377
        %v901 = vadd.s32 %v897, 3
        %v902 = vand.u32 %v901, 3
        %vm903 = vcmp.lt.s32.totalorder %v902, 2
        %vm904 = vcmp.eq.s32.totalorder %v902, 0
        %v905 = vxor.u32 %v899, 2147483648
        %v906 = vsel %vm904, %v898, %v905
        %vm907 = vcmp.eq.s32.totalorder %v902, 2
        %v908 = vxor.u32 %v898, 2147483648
        %v909 = vsel %vm907, %v908, %v899
        %v910 = vsel %vm903, %v906, %v909
        %v911 = vsel %vm900, nan, %v910
        %v912 = vand.u32 2147483647, %v379
        %vm913 = vcmp.le.f32.partialorder %v912, 0.7853982
        %vm914 = vcmp.lt.s32.totalorder %v379, 0
        %v915 = vand.u32 %v379, 2139095040
        %v916 = vshrl.u32 %v915, 23
        %v917 = vsub.s32 %v916, 127
        %v918 = vand.u32 2147483647, %v379
        %v919 = vand.u32 %v918, 8388607
        %v920 = vor.u32 %v919, 8388608
        %v921 = vsub.s32 0, %v920
        %v922 = vadd.s32 %v917, 1
        %vm923 = vcmp.gt.s32.totalorder %v922, 0
        %v924 = vsel %vm923, %v922, 0
        %v925 = vshrl.u32 %v924, 5
        %v926 = vand.u32 %v924, 31
        %v927 = vsub.s32 32, %v926
        %v928 = vshrl.u32 683565275, %v927
        %v929 = vshll.u32 683565275, %v926
        %v930 = vshrl.u32 2475754826, %v927
        %v931 = vor.u32 %v929, %v930
        %v932 = vshll.u32 2475754826, %v926
        %v933 = vshrl.u32 2131351028, %v927
        %v934 = vor.u32 %v932, %v933
        %v935 = vshll.u32 2131351028, %v926
        %v936 = vshrl.u32 2102212464, %v927
        %v937 = vor.u32 %v935, %v936
        %v938 = vshll.u32 2102212464, %v926
        %v939 = vshrl.u32 920167782, %v927
        %v940 = vor.u32 %v938, %v939
        %v941 = vshll.u32 920167782, %v926
        %v942 = vshrl.u32 1326507024, %v927
        %v943 = vor.u32 %v941, %v942
        %vm944 = vcmp.lt.s32.totalorder %v925, 1
        %vm945 = vcmp.lt.s32.totalorder %v925, 2
        %vm946 = vcmp.lt.s32.totalorder %v925, 3
        %vm947 = vcmp.lt.s32.totalorder %v925, 4
        %v948 = vsel %vm944, %v928, %v931
        %v949 = vsel %vm947, %v937, 2102212464
        %v950 = vsel %vm946, %v934, %v949
        %v951 = vsel %vm945, %v948, %v950
        %v952 = vsel %vm944, %v931, %v934
        %v953 = vsel %vm947, %v940, 920167782
        %v954 = vsel %vm946, %v937, %v953
        %v955 = vsel %vm945, %v952, %v954
        %v956 = vsel %vm944, %v934, %v937
        %v957 = vsel %vm947, %v943, 1326507024
        %v958 = vsel %vm946, %v940, %v957
        %v959 = vsel %vm945, %v956, %v958
        %v960 = vshll.u32 %v920, 8
        %v961 = vmul.u32.u64.compose %v960, %v959
        %v962 = vextract.low.u32 %v961
        %v963 = vextract.high.u32 %v961
        %v964 = vmul.u32.u64.compose %v960, %v955
        %v965 = vextract.low.u32 %v964
        %v966 = vextract.high.u32 %v964
        %v967 = vmul.u32 %v960, %v951
        %v968 = vadd.s32 %v963, %v965
        %vm969 = vc.u32 %v963, %v965
        %v970 = vadd.s32 %v966, 1
        %v971 = vsel %vm969, %v970, %v966
        %v972 = vadd.s32 %v967, %v971
        %v973 = vadd.s32 %v972, 536870912
        %v974 = vshrl.u32 %v973, 30
        %v975 = vshll.u32 %v974, 30
        %v976 = vsub.s32 %v972, %v975
        %vm977 = vcmp.lt.s32.totalorder %v976, 0
        %v978 = vsub.s32 0, %v976
        %v979 = vsel %vm977, %v978, %v976
        %v980 = vclz %v979
        %v981 = vsub.s32 %v980, 2
        %vm982 = vcmp.gt.s32.totalorder 0, %v981
        %v983 = vsel %vm982, 0, %v981
        %v984 = vsub.s32 32, %v983
        %v985 = vshll.u32 %v976, %v983
        %v986 = vshrl.u32 %v968, %v984
        %v987 = vor.u32 %v985, %v986
        %v988 = vsub.s32 4294967266, %v983
        %v989 = vadd.s32 %v988, 127
        %v990 = vshll.u32 %v989, 23
        %v991 = vor.u32 4788187, %v990
        %v992 = vand.u32 2147483647, %v991
        %v994 = vcvt.s32.f32 %v987
        %v995 = vmul.f32 %v994, %v992
        %v996 = vxor.u32 %v995, 2147483648
        %v997 = vsel %vm914, %v996, %v995
        %v998 = vsub.s32 4, %v974
        %v999 = vsel %vm914, %v998, %v974
        %v1000 = vsel %vm913, %v379, %v997
        %v1001 = vsel %vm913, 0, %v999
        %v1002 = vcosq.f32.pop %v1000
        %v1003 = vsinq.f32.pop %v1000
        %vm1004 = vweird.f32 %v379
        %v1005 = vadd.s32 %v1001, 3
        %v1006 = vand.u32 %v1005, 3
        %vm1007 = vcmp.lt.s32.totalorder %v1006, 2
        %vm1008 = vcmp.eq.s32.totalorder %v1006, 0
        %v1009 = vxor.u32 %v1003, 2147483648
        %v1010 = vsel %vm1008, %v1002, %v1009
        %vm1011 = vcmp.eq.s32.totalorder %v1006, 2
        %v1012 = vxor.u32 %v1002, 2147483648
        %v1013 = vsel %vm1011, %v1012, %v1003
        %v1014 = vsel %vm1007, %v1010, %v1013
        %v1015 = vsel %vm1004, nan, %v1014
        %v1016 = vand.u32 2147483647, %v381
        %vm1017 = vcmp.le.f32.partialorder %v1016, 0.7853982
        %vm1018 = vcmp.lt.s32.totalorder %v381, 0
        %v1019 = vand.u32 %v381, 2139095040
        %v1020 = vshrl.u32 %v1019, 23
        %v1021 = vsub.s32 %v1020, 127
        %v1022 = vand.u32 2147483647, %v381
        %v1023 = vand.u32 %v1022, 8388607
        %v1024 = vor.u32 %v1023, 8388608
        %v1025 = vsub.s32 0, %v1024
        %v1026 = vadd.s32 %v1021, 1
        %vm1027 = vcmp.gt.s32.totalorder %v1026, 0
        %v1028 = vsel %vm1027, %v1026, 0
        %v1029 = vshrl.u32 %v1028, 5
        %v1030 = vand.u32 %v1028, 31
        %v1031 = vsub.s32 32, %v1030
        %v1032 = vshrl.u32 683565275, %v1031
        %v1033 = vshll.u32 683565275, %v1030
        %v1034 = vshrl.u32 2475754826, %v1031
        %v1035 = vor.u32 %v1033, %v1034
        %v1036 = vshll.u32 2475754826, %v1030
        %v1037 = vshrl.u32 2131351028, %v1031
        %v1038 = vor.u32 %v1036, %v1037
        %v1039 = vshll.u32 2131351028, %v1030
        %v1040 = vshrl.u32 2102212464, %v1031
        %v1041 = vor.u32 %v1039, %v1040
        %v1042 = vshll.u32 2102212464, %v1030
        %v1043 = vshrl.u32 920167782, %v1031
        %v1044 = vor.u32 %v1042, %v1043
        %v1045 = vshll.u32 920167782, %v1030
        %v1046 = vshrl.u32 1326507024, %v1031
        %v1047 = vor.u32 %v1045, %v1046
        %vm1048 = vcmp.lt.s32.totalorder %v1029, 1
        %vm1049 = vcmp.lt.s32.totalorder %v1029, 2
        %vm1050 = vcmp.lt.s32.totalorder %v1029, 3
        %vm1051 = vcmp.lt.s32.totalorder %v1029, 4
        %v1052 = vsel %vm1048, %v1032, %v1035
        %v1053 = vsel %vm1051, %v1041, 2102212464
        %v1054 = vsel %vm1050, %v1038, %v1053
        %v1055 = vsel %vm1049, %v1052, %v1054
        %v1056 = vsel %vm1048, %v1035, %v1038
        %v1057 = vsel %vm1051, %v1044, 920167782
        %v1058 = vsel %vm1050, %v1041, %v1057
        %v1059 = vsel %vm1049, %v1056, %v1058
        %v1060 = vsel %vm1048, %v1038, %v1041
        %v1061 = vsel %vm1051, %v1047, 1326507024
        %v1062 = vsel %vm1050, %v1044, %v1061
        %v1063 = vsel %vm1049, %v1060, %v1062
        %v1064 = vshll.u32 %v1024, 8
        %v1065 = vmul.u32.u64.compose %v1064, %v1063
        %v1066 = vextract.low.u32 %v1065
        %v1067 = vextract.high.u32 %v1065
        %v1068 = vmul.u32.u64.compose %v1064, %v1059
        %v1069 = vextract.low.u32 %v1068
        %v1070 = vextract.high.u32 %v1068
        %v1071 = vmul.u32 %v1064, %v1055
        %v1072 = vadd.s32 %v1067, %v1069
        %vm1073 = vc.u32 %v1067, %v1069
        %v1074 = vadd.s32 %v1070, 1
        %v1075 = vsel %vm1073, %v1074, %v1070
        %v1076 = vadd.s32 %v1071, %v1075
        %v1077 = vadd.s32 %v1076, 536870912
        %v1078 = vshrl.u32 %v1077, 30
        %v1079 = vshll.u32 %v1078, 30
        %v1080 = vsub.s32 %v1076, %v1079
        %vm1081 = vcmp.lt.s32.totalorder %v1080, 0
        %v1082 = vsub.s32 0, %v1080
        %v1083 = vsel %vm1081, %v1082, %v1080
        %v1084 = vclz %v1083
        %v1085 = vsub.s32 %v1084, 2
        %vm1086 = vcmp.gt.s32.totalorder 0, %v1085
        %v1087 = vsel %vm1086, 0, %v1085
        %v1088 = vsub.s32 32, %v1087
        %v1089 = vshll.u32 %v1080, %v1087
        %v1090 = vshrl.u32 %v1072, %v1088
        %v1091 = vor.u32 %v1089, %v1090
        %v1092 = vsub.s32 4294967266, %v1087
        %v1093 = vadd.s32 %v1092, 127
        %v1094 = vshll.u32 %v1093, 23
        %v1095 = vor.u32 4788187, %v1094
        %v1096 = vand.u32 2147483647, %v1095
        %v1098 = vcvt.s32.f32 %v1091
        %v1099 = vmul.f32 %v1098, %v1096
        %v1100 = vxor.u32 %v1099, 2147483648
        %v1101 = vsel %vm1018, %v1100, %v1099
        %v1102 = vsub.s32 4, %v1078
        %v1103 = vsel %vm1018, %v1102, %v1078
        %v1104 = vsel %vm1017, %v381, %v1101
        %v1105 = vsel %vm1017, 0, %v1103
        %v1106 = vcosq.f32.pop %v1104
        %v1107 = vsinq.f32.pop %v1104
        %vm1108 = vweird.f32 %v381
        %v1109 = vadd.s32 %v1105, 3
        %v1110 = vand.u32 %v1109, 3
        %vm1111 = vcmp.lt.s32.totalorder %v1110, 2
        %vm1112 = vcmp.eq.s32.totalorder %v1110, 0
        %v1113 = vxor.u32 %v1107, 2147483648
        %v1114 = vsel %vm1112, %v1106, %v1113
        %vm1115 = vcmp.eq.s32.totalorder %v1110, 2
        %v1116 = vxor.u32 %v1106, 2147483648
        %v1117 = vsel %vm1115, %v1116, %v1107
        %v1118 = vsel %vm1111, %v1114, %v1117
        %v1119 = vsel %vm1108, nan, %v1118
        %v1120 = vand.u32 2147483647, %v383
        %vm1121 = vcmp.le.f32.partialorder %v1120, 0.7853982
        %vm1122 = vcmp.lt.s32.totalorder %v383, 0
        %v1123 = vand.u32 %v383, 2139095040
        %v1124 = vshrl.u32 %v1123, 23
        %v1125 = vsub.s32 %v1124, 127
        %v1126 = vand.u32 2147483647, %v383
        %v1127 = vand.u32 %v1126, 8388607
        %v1128 = vor.u32 %v1127, 8388608
        %v1129 = vsub.s32 0, %v1128
        %v1130 = vadd.s32 %v1125, 1
        %vm1131 = vcmp.gt.s32.totalorder %v1130, 0
        %v1132 = vsel %vm1131, %v1130, 0
        %v1133 = vshrl.u32 %v1132, 5
        %v1134 = vand.u32 %v1132, 31
        %v1135 = vsub.s32 32, %v1134
        %v1136 = vshrl.u32 683565275, %v1135
        %v1137 = vshll.u32 683565275, %v1134
        %v1138 = vshrl.u32 2475754826, %v1135
        %v1139 = vor.u32 %v1137, %v1138
        %v1140 = vshll.u32 2475754826, %v1134
        %v1141 = vshrl.u32 2131351028, %v1135
        %v1142 = vor.u32 %v1140, %v1141
        %v1143 = vshll.u32 2131351028, %v1134
        %v1144 = vshrl.u32 2102212464, %v1135
        %v1145 = vor.u32 %v1143, %v1144
        %v1146 = vshll.u32 2102212464, %v1134
        %v1147 = vshrl.u32 920167782, %v1135
        %v1148 = vor.u32 %v1146, %v1147
        %v1149 = vshll.u32 920167782, %v1134
        %v1150 = vshrl.u32 1326507024, %v1135
        %v1151 = vor.u32 %v1149, %v1150
        %vm1152 = vcmp.lt.s32.totalorder %v1133, 1
        %vm1153 = vcmp.lt.s32.totalorder %v1133, 2
        %vm1154 = vcmp.lt.s32.totalorder %v1133, 3
        %vm1155 = vcmp.lt.s32.totalorder %v1133, 4
        %v1156 = vsel %vm1152, %v1136, %v1139
        %v1157 = vsel %vm1155, %v1145, 2102212464
        %v1158 = vsel %vm1154, %v1142, %v1157
        %v1159 = vsel %vm1153, %v1156, %v1158
        %v1160 = vsel %vm1152, %v1139, %v1142
        %v1161 = vsel %vm1155, %v1148, 920167782
        %v1162 = vsel %vm1154, %v1145, %v1161
        %v1163 = vsel %vm1153, %v1160, %v1162
        %v1164 = vsel %vm1152, %v1142, %v1145
        %v1165 = vsel %vm1155, %v1151, 1326507024
        %v1166 = vsel %vm1154, %v1148, %v1165
        %v1167 = vsel %vm1153, %v1164, %v1166
        %v1168 = vshll.u32 %v1128, 8
        %v1169 = vmul.u32.u64.compose %v1168, %v1167
        %v1170 = vextract.low.u32 %v1169
        %v1171 = vextract.high.u32 %v1169
        %v1172 = vmul.u32.u64.compose %v1168, %v1163
        %v1173 = vextract.low.u32 %v1172
        %v1174 = vextract.high.u32 %v1172
        %v1175 = vmul.u32 %v1168, %v1159
        %v1176 = vadd.s32 %v1171, %v1173
        %vm1177 = vc.u32 %v1171, %v1173
        %v1178 = vadd.s32 %v1174, 1
        %v1179 = vsel %vm1177, %v1178, %v1174
        %v1180 = vadd.s32 %v1175, %v1179
        %v1181 = vadd.s32 %v1180, 536870912
        %v1182 = vshrl.u32 %v1181, 30
        %v1183 = vshll.u32 %v1182, 30
        %v1184 = vsub.s32 %v1180, %v1183
        %vm1185 = vcmp.lt.s32.totalorder %v1184, 0
        %v1186 = vsub.s32 0, %v1184
        %v1187 = vsel %vm1185, %v1186, %v1184
        %v1188 = vclz %v1187
        %v1189 = vsub.s32 %v1188, 2
        %vm1190 = vcmp.gt.s32.totalorder 0, %v1189
        %v1191 = vsel %vm1190, 0, %v1189
        %v1192 = vsub.s32 32, %v1191
        %v1193 = vshll.u32 %v1184, %v1191
        %v1194 = vshrl.u32 %v1176, %v1192
        %v1195 = vor.u32 %v1193, %v1194
        %v1196 = vsub.s32 4294967266, %v1191
        %v1197 = vadd.s32 %v1196, 127
        %v1198 = vshll.u32 %v1197, 23
        %v1199 = vor.u32 4788187, %v1198
        %v1200 = vand.u32 2147483647, %v1199
        %v1202 = vcvt.s32.f32 %v1195
        %v1203 = vmul.f32 %v1202, %v1200
        %v1204 = vxor.u32 %v1203, 2147483648
        %v1205 = vsel %vm1122, %v1204, %v1203
        %v1206 = vsub.s32 4, %v1182
        %v1207 = vsel %vm1122, %v1206, %v1182
        %v1208 = vsel %vm1121, %v383, %v1205
        %v1209 = vsel %vm1121, 0, %v1207
        %v1210 = vcosq.f32.pop %v1208
        %v1211 = vsinq.f32.pop %v1208
        %vm1212 = vweird.f32 %v383
        %v1213 = vadd.s32 %v1209, 3
        %v1214 = vand.u32 %v1213, 3
        %vm1215 = vcmp.lt.s32.totalorder %v1214, 2
        %vm1216 = vcmp.eq.s32.totalorder %v1214, 0
        %v1217 = vxor.u32 %v1211, 2147483648
        %v1218 = vsel %vm1216, %v1210, %v1217
        %vm1219 = vcmp.eq.s32.totalorder %v1214, 2
        %v1220 = vxor.u32 %v1210, 2147483648
        %v1221 = vsel %vm1219, %v1220, %v1211
        %v1222 = vsel %vm1215, %v1218, %v1221
        %v1223 = vsel %vm1212, nan, %v1222
        %v1224 = vand.u32 2147483647, %v385
        %vm1225 = vcmp.le.f32.partialorder %v1224, 0.7853982
        %vm1226 = vcmp.lt.s32.totalorder %v385, 0
        %v1227 = vand.u32 %v385, 2139095040
        %v1228 = vshrl.u32 %v1227, 23
        %v1229 = vsub.s32 %v1228, 127
        %v1230 = vand.u32 2147483647, %v385
        %v1231 = vand.u32 %v1230, 8388607
        %v1232 = vor.u32 %v1231, 8388608
        %v1233 = vsub.s32 0, %v1232
        %v1234 = vadd.s32 %v1229, 1
        %vm1235 = vcmp.gt.s32.totalorder %v1234, 0
        %v1236 = vsel %vm1235, %v1234, 0
        %v1237 = vshrl.u32 %v1236, 5
        %v1238 = vand.u32 %v1236, 31
        %v1239 = vsub.s32 32, %v1238
        %v1240 = vshrl.u32 683565275, %v1239
        %v1241 = vshll.u32 683565275, %v1238
        %v1242 = vshrl.u32 2475754826, %v1239
        %v1243 = vor.u32 %v1241, %v1242
        %v1244 = vshll.u32 2475754826, %v1238
        %v1245 = vshrl.u32 2131351028, %v1239
        %v1246 = vor.u32 %v1244, %v1245
        %v1247 = vshll.u32 2131351028, %v1238
        %v1248 = vshrl.u32 2102212464, %v1239
        %v1249 = vor.u32 %v1247, %v1248
        %v1250 = vshll.u32 2102212464, %v1238
        %v1251 = vshrl.u32 920167782, %v1239
        %v1252 = vor.u32 %v1250, %v1251
        %v1253 = vshll.u32 920167782, %v1238
        %v1254 = vshrl.u32 1326507024, %v1239
        %v1255 = vor.u32 %v1253, %v1254
        %vm1256 = vcmp.lt.s32.totalorder %v1237, 1
        %vm1257 = vcmp.lt.s32.totalorder %v1237, 2
        %vm1258 = vcmp.lt.s32.totalorder %v1237, 3
        %vm1259 = vcmp.lt.s32.totalorder %v1237, 4
        %v1260 = vsel %vm1256, %v1240, %v1243
        %v1261 = vsel %vm1259, %v1249, 2102212464
        %v1262 = vsel %vm1258, %v1246, %v1261
        %v1263 = vsel %vm1257, %v1260, %v1262
        %v1264 = vsel %vm1256, %v1243, %v1246
        %v1265 = vsel %vm1259, %v1252, 920167782
        %v1266 = vsel %vm1258, %v1249, %v1265
        %v1267 = vsel %vm1257, %v1264, %v1266
        %v1268 = vsel %vm1256, %v1246, %v1249
        %v1269 = vsel %vm1259, %v1255, 1326507024
        %v1270 = vsel %vm1258, %v1252, %v1269
        %v1271 = vsel %vm1257, %v1268, %v1270
        %v1272 = vshll.u32 %v1232, 8
        %v1273 = vmul.u32.u64.compose %v1272, %v1271
        %v1274 = vextract.low.u32 %v1273
        %v1275 = vextract.high.u32 %v1273
        %v1276 = vmul.u32.u64.compose %v1272, %v1267
        %v1277 = vextract.low.u32 %v1276
        %v1278 = vextract.high.u32 %v1276
        %v1279 = vmul.u32 %v1272, %v1263
        %v1280 = vadd.s32 %v1275, %v1277
        %vm1281 = vc.u32 %v1275, %v1277
        %v1282 = vadd.s32 %v1278, 1
        %v1283 = vsel %vm1281, %v1282, %v1278
        %v1284 = vadd.s32 %v1279, %v1283
        %v1285 = vadd.s32 %v1284, 536870912
        %v1286 = vshrl.u32 %v1285, 30
        %v1287 = vshll.u32 %v1286, 30
        %v1288 = vsub.s32 %v1284, %v1287
        %vm1289 = vcmp.lt.s32.totalorder %v1288, 0
        %v1290 = vsub.s32 0, %v1288
        %v1291 = vsel %vm1289, %v1290, %v1288
        %v1292 = vclz %v1291
        %v1293 = vsub.s32 %v1292, 2
        %vm1294 = vcmp.gt.s32.totalorder 0, %v1293
        %v1295 = vsel %vm1294, 0, %v1293
        %v1296 = vsub.s32 32, %v1295
        %v1297 = vshll.u32 %v1288, %v1295
        %v1298 = vshrl.u32 %v1280, %v1296
        %v1299 = vor.u32 %v1297, %v1298
        %v1300 = vsub.s32 4294967266, %v1295
        %v1301 = vadd.s32 %v1300, 127
        %v1302 = vshll.u32 %v1301, 23
        %v1303 = vor.u32 4788187, %v1302
        %v1304 = vand.u32 2147483647, %v1303
        %v1306 = vcvt.s32.f32 %v1299
        %v1307 = vmul.f32 %v1306, %v1304
        %v1308 = vxor.u32 %v1307, 2147483648
        %v1309 = vsel %vm1226, %v1308, %v1307
        %v1310 = vsub.s32 4, %v1286
        %v1311 = vsel %vm1226, %v1310, %v1286
        %v1312 = vsel %vm1225, %v385, %v1309
        %v1313 = vsel %vm1225, 0, %v1311
        %v1314 = vcosq.f32.pop %v1312
        %v1315 = vsinq.f32.pop %v1312
        %vm1316 = vweird.f32 %v385
        %v1317 = vadd.s32 %v1313, 3
        %v1318 = vand.u32 %v1317, 3
        %vm1319 = vcmp.lt.s32.totalorder %v1318, 2
        %vm1320 = vcmp.eq.s32.totalorder %v1318, 0
        %v1321 = vxor.u32 %v1315, 2147483648
        %v1322 = vsel %vm1320, %v1314, %v1321
        %vm1323 = vcmp.eq.s32.totalorder %v1318, 2
        %v1324 = vxor.u32 %v1314, 2147483648
        %v1325 = vsel %vm1323, %v1324, %v1315
        %v1326 = vsel %vm1319, %v1322, %v1325
        %v1327 = vsel %vm1316, nan, %v1326
        %v1328 = vand.u32 2147483647, %v387
        %vm1329 = vcmp.le.f32.partialorder %v1328, 0.7853982
        %vm1330 = vcmp.lt.s32.totalorder %v387, 0
        %v1331 = vand.u32 %v387, 2139095040
        %v1332 = vshrl.u32 %v1331, 23
        %v1333 = vsub.s32 %v1332, 127
        %v1334 = vand.u32 2147483647, %v387
        %v1335 = vand.u32 %v1334, 8388607
        %v1336 = vor.u32 %v1335, 8388608
        %v1337 = vsub.s32 0, %v1336
        %v1338 = vadd.s32 %v1333, 1
        %vm1339 = vcmp.gt.s32.totalorder %v1338, 0
        %v1340 = vsel %vm1339, %v1338, 0
        %v1341 = vshrl.u32 %v1340, 5
        %v1342 = vand.u32 %v1340, 31
        %v1343 = vsub.s32 32, %v1342
        %v1344 = vshrl.u32 683565275, %v1343
        %v1345 = vshll.u32 683565275, %v1342
        %v1346 = vshrl.u32 2475754826, %v1343
        %v1347 = vor.u32 %v1345, %v1346
        %v1348 = vshll.u32 2475754826, %v1342
        %v1349 = vshrl.u32 2131351028, %v1343
        %v1350 = vor.u32 %v1348, %v1349
        %v1351 = vshll.u32 2131351028, %v1342
        %v1352 = vshrl.u32 2102212464, %v1343
        %v1353 = vor.u32 %v1351, %v1352
        %v1354 = vshll.u32 2102212464, %v1342
        %v1355 = vshrl.u32 920167782, %v1343
        %v1356 = vor.u32 %v1354, %v1355
        %v1357 = vshll.u32 920167782, %v1342
        %v1358 = vshrl.u32 1326507024, %v1343
        %v1359 = vor.u32 %v1357, %v1358
        %vm1360 = vcmp.lt.s32.totalorder %v1341, 1
        %vm1361 = vcmp.lt.s32.totalorder %v1341, 2
        %vm1362 = vcmp.lt.s32.totalorder %v1341, 3
        %vm1363 = vcmp.lt.s32.totalorder %v1341, 4
        %v1364 = vsel %vm1360, %v1344, %v1347
        %v1365 = vsel %vm1363, %v1353, 2102212464
        %v1366 = vsel %vm1362, %v1350, %v1365
        %v1367 = vsel %vm1361, %v1364, %v1366
        %v1368 = vsel %vm1360, %v1347, %v1350
        %v1369 = vsel %vm1363, %v1356, 920167782
        %v1370 = vsel %vm1362, %v1353, %v1369
        %v1371 = vsel %vm1361, %v1368, %v1370
        %v1372 = vsel %vm1360, %v1350, %v1353
        %v1373 = vsel %vm1363, %v1359, 1326507024
        %v1374 = vsel %vm1362, %v1356, %v1373
        %v1375 = vsel %vm1361, %v1372, %v1374
        %v1376 = vshll.u32 %v1336, 8
        %v1377 = vmul.u32.u64.compose %v1376, %v1375
        %v1378 = vextract.low.u32 %v1377
        %v1379 = vextract.high.u32 %v1377
        %v1380 = vmul.u32.u64.compose %v1376, %v1371
        %v1381 = vextract.low.u32 %v1380
        %v1382 = vextract.high.u32 %v1380
        %v1383 = vmul.u32 %v1376, %v1367
        %v1384 = vadd.s32 %v1379, %v1381
        %vm1385 = vc.u32 %v1379, %v1381
        %v1386 = vadd.s32 %v1382, 1
        %v1387 = vsel %vm1385, %v1386, %v1382
        %v1388 = vadd.s32 %v1383, %v1387
        %v1389 = vadd.s32 %v1388, 536870912
        %v1390 = vshrl.u32 %v1389, 30
        %v1391 = vshll.u32 %v1390, 30
        %v1392 = vsub.s32 %v1388, %v1391
        %vm1393 = vcmp.lt.s32.totalorder %v1392, 0
        %v1394 = vsub.s32 0, %v1392
        %v1395 = vsel %vm1393, %v1394, %v1392
        %v1396 = vclz %v1395
        %v1397 = vsub.s32 %v1396, 2
        %vm1398 = vcmp.gt.s32.totalorder 0, %v1397
        %v1399 = vsel %vm1398, 0, %v1397
        %v1400 = vsub.s32 32, %v1399
        %v1401 = vshll.u32 %v1392, %v1399
        %v1402 = vshrl.u32 %v1384, %v1400
        %v1403 = vor.u32 %v1401, %v1402
        %v1404 = vsub.s32 4294967266, %v1399
        %v1405 = vadd.s32 %v1404, 127
        %v1406 = vshll.u32 %v1405, 23
        %v1407 = vor.u32 4788187, %v1406
        %v1408 = vand.u32 2147483647, %v1407
        %v1410 = vcvt.s32.f32 %v1403
        %v1411 = vmul.f32 %v1410, %v1408
        %v1412 = vxor.u32 %v1411, 2147483648
        %v1413 = vsel %vm1330, %v1412, %v1411
        %v1414 = vsub.s32 4, %v1390
        %v1415 = vsel %vm1330, %v1414, %v1390
        %v1416 = vsel %vm1329, %v387, %v1413
        %v1417 = vsel %vm1329, 0, %v1415
        %v1418 = vcosq.f32.pop %v1416
        %v1419 = vsinq.f32.pop %v1416
        %vm1420 = vweird.f32 %v387
        %v1421 = vadd.s32 %v1417, 3
        %v1422 = vand.u32 %v1421, 3
        %vm1423 = vcmp.lt.s32.totalorder %v1422, 2
        %vm1424 = vcmp.eq.s32.totalorder %v1422, 0
        %v1425 = vxor.u32 %v1419, 2147483648
        %v1426 = vsel %vm1424, %v1418, %v1425
        %vm1427 = vcmp.eq.s32.totalorder %v1422, 2
        %v1428 = vxor.u32 %v1418, 2147483648
        %v1429 = vsel %vm1427, %v1428, %v1419
        %v1430 = vsel %vm1423, %v1426, %v1429
        %v1431 = vsel %vm1420, nan, %v1430
        %v1432 = vand.u32 2147483647, %v389
        %vm1433 = vcmp.le.f32.partialorder %v1432, 0.7853982
        %vm1434 = vcmp.lt.s32.totalorder %v389, 0
        %v1435 = vand.u32 %v389, 2139095040
        %v1436 = vshrl.u32 %v1435, 23
        %v1437 = vsub.s32 %v1436, 127
        %v1438 = vand.u32 2147483647, %v389
        %v1439 = vand.u32 %v1438, 8388607
        %v1440 = vor.u32 %v1439, 8388608
        %v1441 = vsub.s32 0, %v1440
        %v1442 = vadd.s32 %v1437, 1
        %vm1443 = vcmp.gt.s32.totalorder %v1442, 0
        %v1444 = vsel %vm1443, %v1442, 0
        %v1445 = vshrl.u32 %v1444, 5
        %v1446 = vand.u32 %v1444, 31
        %v1447 = vsub.s32 32, %v1446
        %v1448 = vshrl.u32 683565275, %v1447
        %v1449 = vshll.u32 683565275, %v1446
        %v1450 = vshrl.u32 2475754826, %v1447
        %v1451 = vor.u32 %v1449, %v1450
        %v1452 = vshll.u32 2475754826, %v1446
        %v1453 = vshrl.u32 2131351028, %v1447
        %v1454 = vor.u32 %v1452, %v1453
        %v1455 = vshll.u32 2131351028, %v1446
        %v1456 = vshrl.u32 2102212464, %v1447
        %v1457 = vor.u32 %v1455, %v1456
        %v1458 = vshll.u32 2102212464, %v1446
        %v1459 = vshrl.u32 920167782, %v1447
        %v1460 = vor.u32 %v1458, %v1459
        %v1461 = vshll.u32 920167782, %v1446
        %v1462 = vshrl.u32 1326507024, %v1447
        %v1463 = vor.u32 %v1461, %v1462
        %vm1464 = vcmp.lt.s32.totalorder %v1445, 1
        %vm1465 = vcmp.lt.s32.totalorder %v1445, 2
        %vm1466 = vcmp.lt.s32.totalorder %v1445, 3
        %vm1467 = vcmp.lt.s32.totalorder %v1445, 4
        %v1468 = vsel %vm1464, %v1448, %v1451
        %v1469 = vsel %vm1467, %v1457, 2102212464
        %v1470 = vsel %vm1466, %v1454, %v1469
        %v1471 = vsel %vm1465, %v1468, %v1470
        %v1472 = vsel %vm1464, %v1451, %v1454
        %v1473 = vsel %vm1467, %v1460, 920167782
        %v1474 = vsel %vm1466, %v1457, %v1473
        %v1475 = vsel %vm1465, %v1472, %v1474
        %v1476 = vsel %vm1464, %v1454, %v1457
        %v1477 = vsel %vm1467, %v1463, 1326507024
        %v1478 = vsel %vm1466, %v1460, %v1477
        %v1479 = vsel %vm1465, %v1476, %v1478
        %v1480 = vshll.u32 %v1440, 8
        %v1481 = vmul.u32.u64.compose %v1480, %v1479
        %v1482 = vextract.low.u32 %v1481
        %v1483 = vextract.high.u32 %v1481
        %v1484 = vmul.u32.u64.compose %v1480, %v1475
        %v1485 = vextract.low.u32 %v1484
        %v1486 = vextract.high.u32 %v1484
        %v1487 = vmul.u32 %v1480, %v1471
        %v1488 = vadd.s32 %v1483, %v1485
        %vm1489 = vc.u32 %v1483, %v1485
        %v1490 = vadd.s32 %v1486, 1
        %v1491 = vsel %vm1489, %v1490, %v1486
        %v1492 = vadd.s32 %v1487, %v1491
        %v1493 = vadd.s32 %v1492, 536870912
        %v1494 = vshrl.u32 %v1493, 30
        %v1495 = vshll.u32 %v1494, 30
        %v1496 = vsub.s32 %v1492, %v1495
        %vm1497 = vcmp.lt.s32.totalorder %v1496, 0
        %v1498 = vsub.s32 0, %v1496
        %v1499 = vsel %vm1497, %v1498, %v1496
        %v1500 = vclz %v1499
        %v1501 = vsub.s32 %v1500, 2
        %vm1502 = vcmp.gt.s32.totalorder 0, %v1501
        %v1503 = vsel %vm1502, 0, %v1501
        %v1504 = vsub.s32 32, %v1503
        %v1505 = vshll.u32 %v1496, %v1503
        %v1506 = vshrl.u32 %v1488, %v1504
        %v1507 = vor.u32 %v1505, %v1506
        %v1508 = vsub.s32 4294967266, %v1503
        %v1509 = vadd.s32 %v1508, 127
        %v1510 = vshll.u32 %v1509, 23
        %v1511 = vor.u32 4788187, %v1510
        %v1512 = vand.u32 2147483647, %v1511
        %v1514 = vcvt.s32.f32 %v1507
        %v1515 = vmul.f32 %v1514, %v1512
        %v1516 = vxor.u32 %v1515, 2147483648
        %v1517 = vsel %vm1434, %v1516, %v1515
        %v1518 = vsub.s32 4, %v1494
        %v1519 = vsel %vm1434, %v1518, %v1494
        %v1520 = vsel %vm1433, %v389, %v1517
        %v1521 = vsel %vm1433, 0, %v1519
        %v1522 = vcosq.f32.pop %v1520
        %v1523 = vsinq.f32.pop %v1520
        %vm1524 = vweird.f32 %v389
        %v1525 = vadd.s32 %v1521, 3
        %v1526 = vand.u32 %v1525, 3
        %vm1527 = vcmp.lt.s32.totalorder %v1526, 2
        %vm1528 = vcmp.eq.s32.totalorder %v1526, 0
        %v1529 = vxor.u32 %v1523, 2147483648
        %v1530 = vsel %vm1528, %v1522, %v1529
        %vm1531 = vcmp.eq.s32.totalorder %v1526, 2
        %v1532 = vxor.u32 %v1522, 2147483648
        %v1533 = vsel %vm1531, %v1532, %v1523
        %v1534 = vsel %vm1527, %v1530, %v1533
        %v1535 = vsel %vm1524, nan, %v1534
        %v1536 = vand.u32 2147483647, %v391
        %vm1537 = vcmp.le.f32.partialorder %v1536, 0.7853982
        %vm1538 = vcmp.lt.s32.totalorder %v391, 0
        %v1539 = vand.u32 %v391, 2139095040
        %v1540 = vshrl.u32 %v1539, 23
        %v1541 = vsub.s32 %v1540, 127
        %v1542 = vand.u32 2147483647, %v391
        %v1543 = vand.u32 %v1542, 8388607
        %v1544 = vor.u32 %v1543, 8388608
        %v1545 = vsub.s32 0, %v1544
        %v1546 = vadd.s32 %v1541, 1
        %vm1547 = vcmp.gt.s32.totalorder %v1546, 0
        %v1548 = vsel %vm1547, %v1546, 0
        %v1549 = vshrl.u32 %v1548, 5
        %v1550 = vand.u32 %v1548, 31
        %v1551 = vsub.s32 32, %v1550
        %v1552 = vshrl.u32 683565275, %v1551
        %v1553 = vshll.u32 683565275, %v1550
        %v1554 = vshrl.u32 2475754826, %v1551
        %v1555 = vor.u32 %v1553, %v1554
        %v1556 = vshll.u32 2475754826, %v1550
        %v1557 = vshrl.u32 2131351028, %v1551
        %v1558 = vor.u32 %v1556, %v1557
        %v1559 = vshll.u32 2131351028, %v1550
        %v1560 = vshrl.u32 2102212464, %v1551
        %v1561 = vor.u32 %v1559, %v1560
        %v1562 = vshll.u32 2102212464, %v1550
        %v1563 = vshrl.u32 920167782, %v1551
        %v1564 = vor.u32 %v1562, %v1563
        %v1565 = vshll.u32 920167782, %v1550
        %v1566 = vshrl.u32 1326507024, %v1551
        %v1567 = vor.u32 %v1565, %v1566
        %vm1568 = vcmp.lt.s32.totalorder %v1549, 1
        %vm1569 = vcmp.lt.s32.totalorder %v1549, 2
        %vm1570 = vcmp.lt.s32.totalorder %v1549, 3
        %vm1571 = vcmp.lt.s32.totalorder %v1549, 4
        %v1572 = vsel %vm1568, %v1552, %v1555
        %v1573 = vsel %vm1571, %v1561, 2102212464
        %v1574 = vsel %vm1570, %v1558, %v1573
        %v1575 = vsel %vm1569, %v1572, %v1574
        %v1576 = vsel %vm1568, %v1555, %v1558
        %v1577 = vsel %vm1571, %v1564, 920167782
        %v1578 = vsel %vm1570, %v1561, %v1577
        %v1579 = vsel %vm1569, %v1576, %v1578
        %v1580 = vsel %vm1568, %v1558, %v1561
        %v1581 = vsel %vm1571, %v1567, 1326507024
        %v1582 = vsel %vm1570, %v1564, %v1581
        %v1583 = vsel %vm1569, %v1580, %v1582
        %v1584 = vshll.u32 %v1544, 8
        %v1585 = vmul.u32.u64.compose %v1584, %v1583
        %v1586 = vextract.low.u32 %v1585
        %v1587 = vextract.high.u32 %v1585
        %v1588 = vmul.u32.u64.compose %v1584, %v1579
        %v1589 = vextract.low.u32 %v1588
        %v1590 = vextract.high.u32 %v1588
        %v1591 = vmul.u32 %v1584, %v1575
        %v1592 = vadd.s32 %v1587, %v1589
        %vm1593 = vc.u32 %v1587, %v1589
        %v1594 = vadd.s32 %v1590, 1
        %v1595 = vsel %vm1593, %v1594, %v1590
        %v1596 = vadd.s32 %v1591, %v1595
        %v1597 = vadd.s32 %v1596, 536870912
        %v1598 = vshrl.u32 %v1597, 30
        %v1599 = vshll.u32 %v1598, 30
        %v1600 = vsub.s32 %v1596, %v1599
        %vm1601 = vcmp.lt.s32.totalorder %v1600, 0
        %v1602 = vsub.s32 0, %v1600
        %v1603 = vsel %vm1601, %v1602, %v1600
        %v1604 = vclz %v1603
        %v1605 = vsub.s32 %v1604, 2
        %vm1606 = vcmp.gt.s32.totalorder 0, %v1605
        %v1607 = vsel %vm1606, 0, %v1605
        %v1608 = vsub.s32 32, %v1607
        %v1609 = vshll.u32 %v1600, %v1607
        %v1610 = vshrl.u32 %v1592, %v1608
        %v1611 = vor.u32 %v1609, %v1610
        %v1612 = vsub.s32 4294967266, %v1607
        %v1613 = vadd.s32 %v1612, 127
        %v1614 = vshll.u32 %v1613, 23
        %v1615 = vor.u32 4788187, %v1614
        %v1616 = vand.u32 2147483647, %v1615
        %v1618 = vcvt.s32.f32 %v1611
        %v1619 = vmul.f32 %v1618, %v1616
        %v1620 = vxor.u32 %v1619, 2147483648
        %v1621 = vsel %vm1538, %v1620, %v1619
        %v1622 = vsub.s32 4, %v1598
        %v1623 = vsel %vm1538, %v1622, %v1598
        %v1624 = vsel %vm1537, %v391, %v1621
        %v1625 = vsel %vm1537, 0, %v1623
        %v1626 = vcosq.f32.pop %v1624
        %v1627 = vsinq.f32.pop %v1624
        %vm1628 = vweird.f32 %v391
        %v1629 = vadd.s32 %v1625, 3
        %v1630 = vand.u32 %v1629, 3
        %vm1631 = vcmp.lt.s32.totalorder %v1630, 2
        %vm1632 = vcmp.eq.s32.totalorder %v1630, 0
        %v1633 = vxor.u32 %v1627, 2147483648
        %v1634 = vsel %vm1632, %v1626, %v1633
        %vm1635 = vcmp.eq.s32.totalorder %v1630, 2
        %v1636 = vxor.u32 %v1626, 2147483648
        %v1637 = vsel %vm1635, %v1636, %v1627
        %v1638 = vsel %vm1631, %v1634, %v1637
        %v1639 = vsel %vm1628, nan, %v1638
        %1641 = vset.pattern.permute.xlu0 0
        %1642 = vperm.xlu0 %1641, %v287
        %v1643 = vpop.permute.xlu0 %1642
        %1646 = vset.pattern.permute.xlu0 0
        %1647 = vperm.xlu0 %1646, %v288
        %v1648 = vpop.permute.xlu0 %1647
        %1651 = vset.pattern.permute.xlu0 0
        %1652 = vperm.xlu0 %1651, %v289
        %v1653 = vpop.permute.xlu0 %1652
        %vm1655 = vcmask 162816
        %v1657 = vsel %vm1655, %v284, 0
        %v1660 = vsel %vm1655, %v285, 0
        %v1663 = vsel %vm1655, %v286, 0
        %vm1665 = vcmask 1043456
        %v1667 = vsel %vm1665, %v1327, 0
        %v1670 = vsel %vm1665, %v1431, 0
        %v1673 = vsel %vm1665, %v1535, 0
        %v1676 = vsel %vm1665, %v1639, 0
        %1678 = vmatprep.subr.mxu0 %v599
        %1679 = vmatpush1.msra.mxu0 %v495
        %1680 = vmatprep.subr.mxu0 %v1015
        %1681 = vmatpush1.msra.mxu0 %v911
        %1682 = vmatprep.subr.mxu0 %v1670
        %1683 = vmatpush1.msra.mxu0 %v1667
        %1684 = vmatprep.subr.mxu0 0.0
        %1685 = vmatpush1.msra.mxu0 0.0
        %1686 = vmatprep.subr.mxu0 0.0
        %1687 = vmatpush1.msra.mxu0 0.0
        %1688 = vmatprep.subr.mxu0 0.0
        %1689 = vmatpush1.msra.mxu0 0.0
        %1690 = vmatprep.subr.mxu0 0.0
        %1691 = vmatpush1.msra.mxu0 0.0
        %1692 = vmatprep.subr.mxu0 0.0
        %1693 = vmatpush1.msra.mxu0 0.0
        %1694 = vmatprep.subr.mxu0 0.0
        %1695 = vmatpush1.msra.mxu0 0.0
        %1696 = vmatprep.subr.mxu0 0.0
        %1697 = vmatpush1.msra.mxu0 0.0
        %1698 = vmatprep.subr.mxu0 0.0
        %1699 = vmatpush1.msra.mxu0 0.0
        %1700 = vmatprep.subr.mxu0 0.0
        %1701 = vmatpush1.msra.mxu0 0.0
        %1702 = vmatprep.subr.mxu0 0.0
        %1703 = vmatpush1.msra.mxu0 0.0
        %1704 = vmatprep.subr.mxu0 0.0
        %1705 = vmatpush1.msra.mxu0 0.0
        %1706 = vmatprep.subr.mxu0 0.0
        %1707 = vmatpush1.msra.mxu0 0.0
        %1708 = vmatprep.subr.mxu0 0.0
        %1709 = vmatpush1.msra.mxu0 0.0
        %1710 = vmatprep.subr.mxu0 0.0
        %1711 = vmatpush1.msra.mxu0 0.0
        %1712 = vmatprep.subr.mxu0 0.0
        %1713 = vmatpush1.msra.mxu0 0.0
        %1714 = vmatprep.subr.mxu0 0.0
        %1715 = vmatpush1.msra.mxu0 0.0
        %1716 = vmatprep.subr.mxu0 0.0
        %1717 = vmatpush1.msra.mxu0 0.0
        %1718 = vmatprep.subr.mxu0 0.0
        %1719 = vmatpush1.msra.mxu0 0.0
        %1720 = vmatprep.subr.mxu0 0.0
        %1721 = vmatpush1.msra.mxu0 0.0
        %1722 = vmatprep.subr.mxu0 0.0
        %1723 = vmatpush1.msra.mxu0 0.0
        %1724 = vmatprep.subr.mxu0 0.0
        %1725 = vmatpush1.msra.mxu0 0.0
        %1726 = vmatprep.subr.mxu0 0.0
        %1727 = vmatpush1.msra.mxu0 0.0
        %1728 = vmatprep.subr.mxu0 0.0
        %1729 = vmatpush1.msra.mxu0 0.0
        %1730 = vmatprep.subr.mxu0 0.0
        %1731 = vmatpush1.msra.mxu0 0.0
        %1732 = vmatprep.subr.mxu0 0.0
        %1733 = vmatpush1.msra.mxu0 0.0
        %1734 = vmatprep.subr.mxu0 0.0
        %1735 = vmatpush1.msra.mxu0 0.0
        %1736 = vmatprep.subr.mxu0 0.0
        %1737 = vmatpush1.msra.mxu0 0.0
        %1738 = vmatprep.subr.mxu0 0.0
        %1739 = vmatpush1.msra.mxu0 0.0
        %1740 = vmatprep.subr.mxu0 0.0
        %1741 = vmatpush1.msra.mxu0 0.0
        %1742 = vmatprep.mubr.f32.mxu0 0.0
        %1743 = vmatmul.mubr.f32.gmra.mrb[0].mxu0 %v1657
        %v1744 = vpop.f32.mrb[0].mxu0
        %v1745 = vadd.f32 %v1643, %v1744
        %v1746 = vpop.f32.mrb[0].mxu0
        %v1747 = vadd.f32 %v1643, %v1746
        %1748 = vmatprep.mubr.f32.mxu0 0.0
        %1749 = vmatmul.mubr.f32.gmra.mrb[0].mxu0 %v1660
        %v1750 = vpop.f32.mrb[0].mxu0
        %v1751 = vadd.f32 %v1648, %v1750
        %v1752 = vpop.f32.mrb[0].mxu0
        %v1753 = vadd.f32 %v1648, %v1752
        %1754 = vmatprep.mubr.f32.mxu0 0.0
        %1755 = vmatmul.mubr.f32.gmra.mrb[0].mxu0 %v1663
        %v1756 = vpop.f32.mrb[0].mxu0
        %v1757 = vadd.f32 %v1653, %v1756
        %v1758 = vpop.f32.mrb[0].mxu0
        %v1759 = vadd.f32 %v1653, %v1758
        %1760 = vdwg.mxu0
        %1761 = vmatprep.subr.mxu0 %v807
        %1762 = vmatpush1.msra.mxu0 %v703
        %1763 = vmatprep.subr.mxu0 %v1223
        %1764 = vmatpush1.msra.mxu0 %v1119
        %1765 = vmatprep.subr.mxu0 %v1676
        %1766 = vmatpush1.msra.mxu0 %v1673
        %1767 = vmatprep.subr.mxu0 0.0
        %1768 = vmatpush1.msra.mxu0 0.0
        %1769 = vmatprep.subr.mxu0 0.0
        %1770 = vmatpush1.msra.mxu0 0.0
        %1771 = vmatprep.subr.mxu0 0.0
        %1772 = vmatpush1.msra.mxu0 0.0
        %1773 = vmatprep.subr.mxu0 0.0
        %1774 = vmatpush1.msra.mxu0 0.0
        %1775 = vmatprep.subr.mxu0 0.0
        %1776 = vmatpush1.msra.mxu0 0.0
        %1777 = vmatprep.subr.mxu0 0.0
        %1778 = vmatpush1.msra.mxu0 0.0
        %1779 = vmatprep.subr.mxu0 0.0
        %1780 = vmatpush1.msra.mxu0 0.0
        %1781 = vmatprep.subr.mxu0 0.0
        %1782 = vmatpush1.msra.mxu0 0.0
        %1783 = vmatprep.subr.mxu0 0.0
        %1784 = vmatpush1.msra.mxu0 0.0
        %1785 = vmatprep.subr.mxu0 0.0
        %1786 = vmatpush1.msra.mxu0 0.0
        %1787 = vmatprep.subr.mxu0 0.0
        %1788 = vmatpush1.msra.mxu0 0.0
        %1789 = vmatprep.subr.mxu0 0.0
        %1790 = vmatpush1.msra.mxu0 0.0
        %1791 = vmatprep.subr.mxu0 0.0
        %1792 = vmatpush1.msra.mxu0 0.0
        %1793 = vmatprep.subr.mxu0 0.0
        %1794 = vmatpush1.msra.mxu0 0.0
        %1795 = vmatprep.subr.mxu0 0.0
        %1796 = vmatpush1.msra.mxu0 0.0
        %1797 = vmatprep.subr.mxu0 0.0
        %1798 = vmatpush1.msra.mxu0 0.0
        %1799 = vmatprep.subr.mxu0 0.0
        %1800 = vmatpush1.msra.mxu0 0.0
        %1801 = vmatprep.subr.mxu0 0.0
        %1802 = vmatpush1.msra.mxu0 0.0
        %1803 = vmatprep.subr.mxu0 0.0
        %1804 = vmatpush1.msra.mxu0 0.0
        %1805 = vmatprep.subr.mxu0 0.0
        %1806 = vmatpush1.msra.mxu0 0.0
        %1807 = vmatprep.subr.mxu0 0.0
        %1808 = vmatpush1.msra.mxu0 0.0
        %1809 = vmatprep.subr.mxu0 0.0
        %1810 = vmatpush1.msra.mxu0 0.0
        %1811 = vmatprep.subr.mxu0 0.0
        %1812 = vmatpush1.msra.mxu0 0.0
        %1813 = vmatprep.subr.mxu0 0.0
        %1814 = vmatpush1.msra.mxu0 0.0
        %1815 = vmatprep.subr.mxu0 0.0
        %1816 = vmatpush1.msra.mxu0 0.0
        %1817 = vmatprep.subr.mxu0 0.0
        %1818 = vmatpush1.msra.mxu0 0.0
        %1819 = vmatprep.subr.mxu0 0.0
        %1820 = vmatpush1.msra.mxu0 0.0
        %1821 = vmatprep.subr.mxu0 0.0
        %1822 = vmatpush1.msra.mxu0 0.0
        %1823 = vmatprep.subr.mxu0 0.0
        %1824 = vmatpush1.msra.mxu0 0.0
        %1825 = vmatprep.mubr.f32.mxu0 0.0
        %1826 = vmatmul.mubr.f32.gmra.mrb[0].mxu0 %v1657
        %v1827 = vpop.f32.mrb[0].mxu0
        %v1828 = vadd.f32 %v1643, %v1827
        %v1829 = vpop.f32.mrb[0].mxu0
        %v1830 = vadd.f32 %v1643, %v1829
        %1831 = vmatprep.mubr.f32.mxu0 0.0
        %1832 = vmatmul.mubr.f32.gmra.mrb[0].mxu0 %v1660
        %v1833 = vpop.f32.mrb[0].mxu0
        %v1834 = vadd.f32 %v1648, %v1833
        %v1835 = vpop.f32.mrb[0].mxu0
        %v1836 = vadd.f32 %v1648, %v1835
        %1837 = vmatprep.mubr.f32.mxu0 0.0
        %1838 = vmatmul.mubr.f32.gmra.mrb[0].mxu0 %v1663
        %v1839 = vpop.f32.mrb[0].mxu0
        %v1840 = vadd.f32 %v1653, %v1839
        %v1841 = vpop.f32.mrb[0].mxu0
        %v1842 = vadd.f32 %v1653, %v1841
        %1843 = vdwg.mxu0
        %v1844 = vmul.f32 %v1745, 1.442695
        %v1845 = vpow.pop %v1844
        %v1846 = vmul.f32 %v1747, 1.442695
        %v1847 = vpow.pop %v1846
        %v1848 = vmul.f32 %v1828, 1.442695
        %v1849 = vpow.pop %v1848
        %v1850 = vmul.f32 %v1830, 1.442695
        %v1851 = vpow.pop %v1850
        %v1852 = vmul.f32 %v1751, 1.442695
        %v1853 = vpow.pop %v1852
        %v1854 = vmul.f32 %v1753, 1.442695
        %v1855 = vpow.pop %v1854
        %v1856 = vmul.f32 %v1834, 1.442695
        %v1857 = vpow.pop %v1856
        %v1858 = vmul.f32 %v1836, 1.442695
        %v1859 = vpow.pop %v1858
        %v1860 = vmul.f32 %v1757, 1.442695
        %v1861 = vpow.pop %v1860
        %v1862 = vmul.f32 %v1759, 1.442695
        %v1863 = vpow.pop %v1862
        %v1864 = vmul.f32 %v1840, 1.442695
        %v1865 = vpow.pop %v1864
        %v1866 = vmul.f32 %v1842, 1.442695
        %v1867 = vpow.pop %v1866
        %v1868 = vand.u32 2147483647, %v1845
        %vm1869 = vcmp.le.f32.partialorder %v1868, 0.7853982
        %vm1870 = vcmp.lt.s32.totalorder %v1845, 0
        %v1871 = vand.u32 %v1845, 2139095040
        %v1872 = vshrl.u32 %v1871, 23
        %v1873 = vsub.s32 %v1872, 127
        %v1874 = vand.u32 2147483647, %v1845
        %v1875 = vand.u32 %v1874, 8388607
        %v1876 = vor.u32 %v1875, 8388608
        %v1877 = vsub.s32 0, %v1876
        %v1878 = vadd.s32 %v1873, 1
        %vm1879 = vcmp.gt.s32.totalorder %v1878, 0
        %v1880 = vsel %vm1879, %v1878, 0
        %v1881 = vshrl.u32 %v1880, 5
        %v1882 = vand.u32 %v1880, 31
        %v1883 = vsub.s32 32, %v1882
        %v1884 = vshrl.u32 683565275, %v1883
        %v1885 = vshll.u32 683565275, %v1882
        %v1886 = vshrl.u32 2475754826, %v1883
        %v1887 = vor.u32 %v1885, %v1886
        %v1888 = vshll.u32 2475754826, %v1882
        %v1889 = vshrl.u32 2131351028, %v1883
        %v1890 = vor.u32 %v1888, %v1889
        %v1891 = vshll.u32 2131351028, %v1882
        %v1892 = vshrl.u32 2102212464, %v1883
        %v1893 = vor.u32 %v1891, %v1892
        %v1894 = vshll.u32 2102212464, %v1882
        %v1895 = vshrl.u32 920167782, %v1883
        %v1896 = vor.u32 %v1894, %v1895
        %v1897 = vshll.u32 920167782, %v1882
        %v1898 = vshrl.u32 1326507024, %v1883
        %v1899 = vor.u32 %v1897, %v1898
        %vm1900 = vcmp.lt.s32.totalorder %v1881, 1
        %vm1901 = vcmp.lt.s32.totalorder %v1881, 2
        %vm1902 = vcmp.lt.s32.totalorder %v1881, 3
        %vm1903 = vcmp.lt.s32.totalorder %v1881, 4
        %v1904 = vsel %vm1900, %v1884, %v1887
        %v1905 = vsel %vm1903, %v1893, 2102212464
        %v1906 = vsel %vm1902, %v1890, %v1905
        %v1907 = vsel %vm1901, %v1904, %v1906
        %v1908 = vsel %vm1900, %v1887, %v1890
        %v1909 = vsel %vm1903, %v1896, 920167782
        %v1910 = vsel %vm1902, %v1893, %v1909
        %v1911 = vsel %vm1901, %v1908, %v1910
        %v1912 = vsel %vm1900, %v1890, %v1893
        %v1913 = vsel %vm1903, %v1899, 1326507024
        %v1914 = vsel %vm1902, %v1896, %v1913
        %v1915 = vsel %vm1901, %v1912, %v1914
        %v1916 = vshll.u32 %v1876, 8
        %v1917 = vmul.u32.u64.compose %v1916, %v1915
        %v1918 = vextract.low.u32 %v1917
        %v1919 = vextract.high.u32 %v1917
        %v1920 = vmul.u32.u64.compose %v1916, %v1911
        %v1921 = vextract.low.u32 %v1920
        %v1922 = vextract.high.u32 %v1920
        %v1923 = vmul.u32 %v1916, %v1907
        %v1924 = vadd.s32 %v1919, %v1921
        %vm1925 = vc.u32 %v1919, %v1921
        %v1926 = vadd.s32 %v1922, 1
        %v1927 = vsel %vm1925, %v1926, %v1922
        %v1928 = vadd.s32 %v1923, %v1927
        %v1929 = vadd.s32 %v1928, 536870912
        %v1930 = vshrl.u32 %v1929, 30
        %v1931 = vshll.u32 %v1930, 30
        %v1932 = vsub.s32 %v1928, %v1931
        %vm1933 = vcmp.lt.s32.totalorder %v1932, 0
        %v1934 = vsub.s32 0, %v1932
        %v1935 = vsel %vm1933, %v1934, %v1932
        %v1936 = vclz %v1935
        %v1937 = vsub.s32 %v1936, 2
        %vm1938 = vcmp.gt.s32.totalorder 0, %v1937
        %v1939 = vsel %vm1938, 0, %v1937
        %v1940 = vsub.s32 32, %v1939
        %v1941 = vshll.u32 %v1932, %v1939
        %v1942 = vshrl.u32 %v1924, %v1940
        %v1943 = vor.u32 %v1941, %v1942
        %v1944 = vsub.s32 4294967266, %v1939
        %v1945 = vadd.s32 %v1944, 127
        %v1946 = vshll.u32 %v1945, 23
        %v1947 = vor.u32 4788187, %v1946
        %v1948 = vand.u32 2147483647, %v1947
        %v1950 = vcvt.s32.f32 %v1943
        %v1951 = vmul.f32 %v1950, %v1948
        %v1952 = vxor.u32 %v1951, 2147483648
        %v1953 = vsel %vm1870, %v1952, %v1951
        %v1954 = vsub.s32 4, %v1930
        %v1955 = vsel %vm1870, %v1954, %v1930
        %v1956 = vsel %vm1869, %v1845, %v1953
        %v1957 = vsel %vm1869, 0, %v1955
        %v1958 = vcosq.f32.pop %v1956
        %v1959 = vsinq.f32.pop %v1956
        %vm1960 = vweird.f32 %v1845
        %v1961 = vadd.s32 %v1957, 3
        %v1962 = vand.u32 %v1961, 3
        %vm1963 = vcmp.lt.s32.totalorder %v1962, 2
        %vm1964 = vcmp.eq.s32.totalorder %v1962, 0
        %v1965 = vxor.u32 %v1959, 2147483648
        %v1966 = vsel %vm1964, %v1958, %v1965
        %vm1967 = vcmp.eq.s32.totalorder %v1962, 2
        %v1968 = vxor.u32 %v1958, 2147483648
        %v1969 = vsel %vm1967, %v1968, %v1959
        %v1970 = vsel %vm1963, %v1966, %v1969
        %v1971 = vsel %vm1960, nan, %v1970
        %v1972 = vand.u32 2147483647, %v1847
        %vm1973 = vcmp.le.f32.partialorder %v1972, 0.7853982
        %vm1974 = vcmp.lt.s32.totalorder %v1847, 0
        %v1975 = vand.u32 %v1847, 2139095040
        %v1976 = vshrl.u32 %v1975, 23
        %v1977 = vsub.s32 %v1976, 127
        %v1978 = vand.u32 2147483647, %v1847
        %v1979 = vand.u32 %v1978, 8388607
        %v1980 = vor.u32 %v1979, 8388608
        %v1981 = vsub.s32 0, %v1980
        %v1982 = vadd.s32 %v1977, 1
        %vm1983 = vcmp.gt.s32.totalorder %v1982, 0
        %v1984 = vsel %vm1983, %v1982, 0
        %v1985 = vshrl.u32 %v1984, 5
        %v1986 = vand.u32 %v1984, 31
        %v1987 = vsub.s32 32, %v1986
        %v1988 = vshrl.u32 683565275, %v1987
        %v1989 = vshll.u32 683565275, %v1986
        %v1990 = vshrl.u32 2475754826, %v1987
        %v1991 = vor.u32 %v1989, %v1990
        %v1992 = vshll.u32 2475754826, %v1986
        %v1993 = vshrl.u32 2131351028, %v1987
        %v1994 = vor.u32 %v1992, %v1993
        %v1995 = vshll.u32 2131351028, %v1986
        %v1996 = vshrl.u32 2102212464, %v1987
        %v1997 = vor.u32 %v1995, %v1996
        %v1998 = vshll.u32 2102212464, %v1986
        %v1999 = vshrl.u32 920167782, %v1987
        %v2000 = vor.u32 %v1998, %v1999
        %v2001 = vshll.u32 920167782, %v1986
        %v2002 = vshrl.u32 1326507024, %v1987
        %v2003 = vor.u32 %v2001, %v2002
        %vm2004 = vcmp.lt.s32.totalorder %v1985, 1
        %vm2005 = vcmp.lt.s32.totalorder %v1985, 2
        %vm2006 = vcmp.lt.s32.totalorder %v1985, 3
        %vm2007 = vcmp.lt.s32.totalorder %v1985, 4
        %v2008 = vsel %vm2004, %v1988, %v1991
        %v2009 = vsel %vm2007, %v1997, 2102212464
        %v2010 = vsel %vm2006, %v1994, %v2009
        %v2011 = vsel %vm2005, %v2008, %v2010
        %v2012 = vsel %vm2004, %v1991, %v1994
        %v2013 = vsel %vm2007, %v2000, 920167782
        %v2014 = vsel %vm2006, %v1997, %v2013
        %v2015 = vsel %vm2005, %v2012, %v2014
        %v2016 = vsel %vm2004, %v1994, %v1997
        %v2017 = vsel %vm2007, %v2003, 1326507024
        %v2018 = vsel %vm2006, %v2000, %v2017
        %v2019 = vsel %vm2005, %v2016, %v2018
        %v2020 = vshll.u32 %v1980, 8
        %v2021 = vmul.u32.u64.compose %v2020, %v2019
        %v2022 = vextract.low.u32 %v2021
        %v2023 = vextract.high.u32 %v2021
        %v2024 = vmul.u32.u64.compose %v2020, %v2015
        %v2025 = vextract.low.u32 %v2024
        %v2026 = vextract.high.u32 %v2024
        %v2027 = vmul.u32 %v2020, %v2011
        %v2028 = vadd.s32 %v2023, %v2025
        %vm2029 = vc.u32 %v2023, %v2025
        %v2030 = vadd.s32 %v2026, 1
        %v2031 = vsel %vm2029, %v2030, %v2026
        %v2032 = vadd.s32 %v2027, %v2031
        %v2033 = vadd.s32 %v2032, 536870912
        %v2034 = vshrl.u32 %v2033, 30
        %v2035 = vshll.u32 %v2034, 30
        %v2036 = vsub.s32 %v2032, %v2035
        %vm2037 = vcmp.lt.s32.totalorder %v2036, 0
        %v2038 = vsub.s32 0, %v2036
        %v2039 = vsel %vm2037, %v2038, %v2036
        %v2040 = vclz %v2039
        %v2041 = vsub.s32 %v2040, 2
        %vm2042 = vcmp.gt.s32.totalorder 0, %v2041
        %v2043 = vsel %vm2042, 0, %v2041
        %v2044 = vsub.s32 32, %v2043
        %v2045 = vshll.u32 %v2036, %v2043
        %v2046 = vshrl.u32 %v2028, %v2044
        %v2047 = vor.u32 %v2045, %v2046
        %v2048 = vsub.s32 4294967266, %v2043
        %v2049 = vadd.s32 %v2048, 127
        %v2050 = vshll.u32 %v2049, 23
        %v2051 = vor.u32 4788187, %v2050
        %v2052 = vand.u32 2147483647, %v2051
        %v2054 = vcvt.s32.f32 %v2047
        %v2055 = vmul.f32 %v2054, %v2052
        %v2056 = vxor.u32 %v2055, 2147483648
        %v2057 = vsel %vm1974, %v2056, %v2055
        %v2058 = vsub.s32 4, %v2034
        %v2059 = vsel %vm1974, %v2058, %v2034
        %v2060 = vsel %vm1973, %v1847, %v2057
        %v2061 = vsel %vm1973, 0, %v2059
        %v2062 = vcosq.f32.pop %v2060
        %v2063 = vsinq.f32.pop %v2060
        %vm2064 = vweird.f32 %v1847
        %v2065 = vadd.s32 %v2061, 3
        %v2066 = vand.u32 %v2065, 3
        %vm2067 = vcmp.lt.s32.totalorder %v2066, 2
        %vm2068 = vcmp.eq.s32.totalorder %v2066, 0
        %v2069 = vxor.u32 %v2063, 2147483648
        %v2070 = vsel %vm2068, %v2062, %v2069
        %vm2071 = vcmp.eq.s32.totalorder %v2066, 2
        %v2072 = vxor.u32 %v2062, 2147483648
        %v2073 = vsel %vm2071, %v2072, %v2063
        %v2074 = vsel %vm2067, %v2070, %v2073
        %v2075 = vsel %vm2064, nan, %v2074
        %v2076 = vand.u32 2147483647, %v1849
        %vm2077 = vcmp.le.f32.partialorder %v2076, 0.7853982
        %vm2078 = vcmp.lt.s32.totalorder %v1849, 0
        %v2079 = vand.u32 %v1849, 2139095040
        %v2080 = vshrl.u32 %v2079, 23
        %v2081 = vsub.s32 %v2080, 127
        %v2082 = vand.u32 2147483647, %v1849
        %v2083 = vand.u32 %v2082, 8388607
        %v2084 = vor.u32 %v2083, 8388608
        %v2085 = vsub.s32 0, %v2084
        %v2086 = vadd.s32 %v2081, 1
        %vm2087 = vcmp.gt.s32.totalorder %v2086, 0
        %v2088 = vsel %vm2087, %v2086, 0
        %v2089 = vshrl.u32 %v2088, 5
        %v2090 = vand.u32 %v2088, 31
        %v2091 = vsub.s32 32, %v2090
        %v2092 = vshrl.u32 683565275, %v2091
        %v2093 = vshll.u32 683565275, %v2090
        %v2094 = vshrl.u32 2475754826, %v2091
        %v2095 = vor.u32 %v2093, %v2094
        %v2096 = vshll.u32 2475754826, %v2090
        %v2097 = vshrl.u32 2131351028, %v2091
        %v2098 = vor.u32 %v2096, %v2097
        %v2099 = vshll.u32 2131351028, %v2090
        %v2100 = vshrl.u32 2102212464, %v2091
        %v2101 = vor.u32 %v2099, %v2100
        %v2102 = vshll.u32 2102212464, %v2090
        %v2103 = vshrl.u32 920167782, %v2091
        %v2104 = vor.u32 %v2102, %v2103
        %v2105 = vshll.u32 920167782, %v2090
        %v2106 = vshrl.u32 1326507024, %v2091
        %v2107 = vor.u32 %v2105, %v2106
        %vm2108 = vcmp.lt.s32.totalorder %v2089, 1
        %vm2109 = vcmp.lt.s32.totalorder %v2089, 2
        %vm2110 = vcmp.lt.s32.totalorder %v2089, 3
        %vm2111 = vcmp.lt.s32.totalorder %v2089, 4
        %v2112 = vsel %vm2108, %v2092, %v2095
        %v2113 = vsel %vm2111, %v2101, 2102212464
        %v2114 = vsel %vm2110, %v2098, %v2113
        %v2115 = vsel %vm2109, %v2112, %v2114
        %v2116 = vsel %vm2108, %v2095, %v2098
        %v2117 = vsel %vm2111, %v2104, 920167782
        %v2118 = vsel %vm2110, %v2101, %v2117
        %v2119 = vsel %vm2109, %v2116, %v2118
        %v2120 = vsel %vm2108, %v2098, %v2101
        %v2121 = vsel %vm2111, %v2107, 1326507024
        %v2122 = vsel %vm2110, %v2104, %v2121
        %v2123 = vsel %vm2109, %v2120, %v2122
        %v2124 = vshll.u32 %v2084, 8
        %v2125 = vmul.u32.u64.compose %v2124, %v2123
        %v2126 = vextract.low.u32 %v2125
        %v2127 = vextract.high.u32 %v2125
        %v2128 = vmul.u32.u64.compose %v2124, %v2119
        %v2129 = vextract.low.u32 %v2128
        %v2130 = vextract.high.u32 %v2128
        %v2131 = vmul.u32 %v2124, %v2115
        %v2132 = vadd.s32 %v2127, %v2129
        %vm2133 = vc.u32 %v2127, %v2129
        %v2134 = vadd.s32 %v2130, 1
        %v2135 = vsel %vm2133, %v2134, %v2130
        %v2136 = vadd.s32 %v2131, %v2135
        %v2137 = vadd.s32 %v2136, 536870912
        %v2138 = vshrl.u32 %v2137, 30
        %v2139 = vshll.u32 %v2138, 30
        %v2140 = vsub.s32 %v2136, %v2139
        %vm2141 = vcmp.lt.s32.totalorder %v2140, 0
        %v2142 = vsub.s32 0, %v2140
        %v2143 = vsel %vm2141, %v2142, %v2140
        %v2144 = vclz %v2143
        %v2145 = vsub.s32 %v2144, 2
        %vm2146 = vcmp.gt.s32.totalorder 0, %v2145
        %v2147 = vsel %vm2146, 0, %v2145
        %v2148 = vsub.s32 32, %v2147
        %v2149 = vshll.u32 %v2140, %v2147
        %v2150 = vshrl.u32 %v2132, %v2148
        %v2151 = vor.u32 %v2149, %v2150
        %v2152 = vsub.s32 4294967266, %v2147
        %v2153 = vadd.s32 %v2152, 127
        %v2154 = vshll.u32 %v2153, 23
        %v2155 = vor.u32 4788187, %v2154
        %v2156 = vand.u32 2147483647, %v2155
        %v2158 = vcvt.s32.f32 %v2151
        %v2159 = vmul.f32 %v2158, %v2156
        %v2160 = vxor.u32 %v2159, 2147483648
        %v2161 = vsel %vm2078, %v2160, %v2159
        %v2162 = vsub.s32 4, %v2138
        %v2163 = vsel %vm2078, %v2162, %v2138
        %v2164 = vsel %vm2077, %v1849, %v2161
        %v2165 = vsel %vm2077, 0, %v2163
        %v2166 = vcosq.f32.pop %v2164
        %v2167 = vsinq.f32.pop %v2164
        %vm2168 = vweird.f32 %v1849
        %v2169 = vadd.s32 %v2165, 3
        %v2170 = vand.u32 %v2169, 3
        %vm2171 = vcmp.lt.s32.totalorder %v2170, 2
        %vm2172 = vcmp.eq.s32.totalorder %v2170, 0
        %v2173 = vxor.u32 %v2167, 2147483648
        %v2174 = vsel %vm2172, %v2166, %v2173
        %vm2175 = vcmp.eq.s32.totalorder %v2170, 2
        %v2176 = vxor.u32 %v2166, 2147483648
        %v2177 = vsel %vm2175, %v2176, %v2167
        %v2178 = vsel %vm2171, %v2174, %v2177
        %v2179 = vsel %vm2168, nan, %v2178
        %v2180 = vand.u32 2147483647, %v1851
        %vm2181 = vcmp.le.f32.partialorder %v2180, 0.7853982
        %vm2182 = vcmp.lt.s32.totalorder %v1851, 0
        %v2183 = vand.u32 %v1851, 2139095040
        %v2184 = vshrl.u32 %v2183, 23
        %v2185 = vsub.s32 %v2184, 127
        %v2186 = vand.u32 2147483647, %v1851
        %v2187 = vand.u32 %v2186, 8388607
        %v2188 = vor.u32 %v2187, 8388608
        %v2189 = vsub.s32 0, %v2188
        %v2190 = vadd.s32 %v2185, 1
        %vm2191 = vcmp.gt.s32.totalorder %v2190, 0
        %v2192 = vsel %vm2191, %v2190, 0
        %v2193 = vshrl.u32 %v2192, 5
        %v2194 = vand.u32 %v2192, 31
        %v2195 = vsub.s32 32, %v2194
        %v2196 = vshrl.u32 683565275, %v2195
        %v2197 = vshll.u32 683565275, %v2194
        %v2198 = vshrl.u32 2475754826, %v2195
        %v2199 = vor.u32 %v2197, %v2198
        %v2200 = vshll.u32 2475754826, %v2194
        %v2201 = vshrl.u32 2131351028, %v2195
        %v2202 = vor.u32 %v2200, %v2201
        %v2203 = vshll.u32 2131351028, %v2194
        %v2204 = vshrl.u32 2102212464, %v2195
        %v2205 = vor.u32 %v2203, %v2204
        %v2206 = vshll.u32 2102212464, %v2194
        %v2207 = vshrl.u32 920167782, %v2195
        %v2208 = vor.u32 %v2206, %v2207
        %v2209 = vshll.u32 920167782, %v2194
        %v2210 = vshrl.u32 1326507024, %v2195
        %v2211 = vor.u32 %v2209, %v2210
        %vm2212 = vcmp.lt.s32.totalorder %v2193, 1
        %vm2213 = vcmp.lt.s32.totalorder %v2193, 2
        %vm2214 = vcmp.lt.s32.totalorder %v2193, 3
        %vm2215 = vcmp.lt.s32.totalorder %v2193, 4
        %v2216 = vsel %vm2212, %v2196, %v2199
        %v2217 = vsel %vm2215, %v2205, 2102212464
        %v2218 = vsel %vm2214, %v2202, %v2217
        %v2219 = vsel %vm2213, %v2216, %v2218
        %v2220 = vsel %vm2212, %v2199, %v2202
        %v2221 = vsel %vm2215, %v2208, 920167782
        %v2222 = vsel %vm2214, %v2205, %v2221
        %v2223 = vsel %vm2213, %v2220, %v2222
        %v2224 = vsel %vm2212, %v2202, %v2205
        %v2225 = vsel %vm2215, %v2211, 1326507024
        %v2226 = vsel %vm2214, %v2208, %v2225
        %v2227 = vsel %vm2213, %v2224, %v2226
        %v2228 = vshll.u32 %v2188, 8
        %v2229 = vmul.u32.u64.compose %v2228, %v2227
        %v2230 = vextract.low.u32 %v2229
        %v2231 = vextract.high.u32 %v2229
        %v2232 = vmul.u32.u64.compose %v2228, %v2223
        %v2233 = vextract.low.u32 %v2232
        %v2234 = vextract.high.u32 %v2232
        %v2235 = vmul.u32 %v2228, %v2219
        %v2236 = vadd.s32 %v2231, %v2233
        %vm2237 = vc.u32 %v2231, %v2233
        %v2238 = vadd.s32 %v2234, 1
        %v2239 = vsel %vm2237, %v2238, %v2234
        %v2240 = vadd.s32 %v2235, %v2239
        %v2241 = vadd.s32 %v2240, 536870912
        %v2242 = vshrl.u32 %v2241, 30
        %v2243 = vshll.u32 %v2242, 30
        %v2244 = vsub.s32 %v2240, %v2243
        %vm2245 = vcmp.lt.s32.totalorder %v2244, 0
        %v2246 = vsub.s32 0, %v2244
        %v2247 = vsel %vm2245, %v2246, %v2244
        %v2248 = vclz %v2247
        %v2249 = vsub.s32 %v2248, 2
        %vm2250 = vcmp.gt.s32.totalorder 0, %v2249
        %v2251 = vsel %vm2250, 0, %v2249
        %v2252 = vsub.s32 32, %v2251
        %v2253 = vshll.u32 %v2244, %v2251
        %v2254 = vshrl.u32 %v2236, %v2252
        %v2255 = vor.u32 %v2253, %v2254
        %v2256 = vsub.s32 4294967266, %v2251
        %v2257 = vadd.s32 %v2256, 127
        %v2258 = vshll.u32 %v2257, 23
        %v2259 = vor.u32 4788187, %v2258
        %v2260 = vand.u32 2147483647, %v2259
        %v2262 = vcvt.s32.f32 %v2255
        %v2263 = vmul.f32 %v2262, %v2260
        %v2264 = vxor.u32 %v2263, 2147483648
        %v2265 = vsel %vm2182, %v2264, %v2263
        %v2266 = vsub.s32 4, %v2242
        %v2267 = vsel %vm2182, %v2266, %v2242
        %v2268 = vsel %vm2181, %v1851, %v2265
        %v2269 = vsel %vm2181, 0, %v2267
        %v2270 = vcosq.f32.pop %v2268
        %v2271 = vsinq.f32.pop %v2268
        %vm2272 = vweird.f32 %v1851
        %v2273 = vadd.s32 %v2269, 3
        %v2274 = vand.u32 %v2273, 3
        %vm2275 = vcmp.lt.s32.totalorder %v2274, 2
        %vm2276 = vcmp.eq.s32.totalorder %v2274, 0
        %v2277 = vxor.u32 %v2271, 2147483648
        %v2278 = vsel %vm2276, %v2270, %v2277
        %vm2279 = vcmp.eq.s32.totalorder %v2274, 2
        %v2280 = vxor.u32 %v2270, 2147483648
        %v2281 = vsel %vm2279, %v2280, %v2271
        %v2282 = vsel %vm2275, %v2278, %v2281
        %v2283 = vsel %vm2272, nan, %v2282
        %v2284 = vand.u32 2147483647, %v1853
        %vm2285 = vcmp.le.f32.partialorder %v2284, 0.7853982
        %vm2286 = vcmp.lt.s32.totalorder %v1853, 0
        %v2287 = vand.u32 %v1853, 2139095040
        %v2288 = vshrl.u32 %v2287, 23
        %v2289 = vsub.s32 %v2288, 127
        %v2290 = vand.u32 2147483647, %v1853
        %v2291 = vand.u32 %v2290, 8388607
        %v2292 = vor.u32 %v2291, 8388608
        %v2293 = vsub.s32 0, %v2292
        %v2294 = vadd.s32 %v2289, 1
        %vm2295 = vcmp.gt.s32.totalorder %v2294, 0
        %v2296 = vsel %vm2295, %v2294, 0
        %v2297 = vshrl.u32 %v2296, 5
        %v2298 = vand.u32 %v2296, 31
        %v2299 = vsub.s32 32, %v2298
        %v2300 = vshrl.u32 683565275, %v2299
        %v2301 = vshll.u32 683565275, %v2298
        %v2302 = vshrl.u32 2475754826, %v2299
        %v2303 = vor.u32 %v2301, %v2302
        %v2304 = vshll.u32 2475754826, %v2298
        %v2305 = vshrl.u32 2131351028, %v2299
        %v2306 = vor.u32 %v2304, %v2305
        %v2307 = vshll.u32 2131351028, %v2298
        %v2308 = vshrl.u32 2102212464, %v2299
        %v2309 = vor.u32 %v2307, %v2308
        %v2310 = vshll.u32 2102212464, %v2298
        %v2311 = vshrl.u32 920167782, %v2299
        %v2312 = vor.u32 %v2310, %v2311
        %v2313 = vshll.u32 920167782, %v2298
        %v2314 = vshrl.u32 1326507024, %v2299
        %v2315 = vor.u32 %v2313, %v2314
        %vm2316 = vcmp.lt.s32.totalorder %v2297, 1
        %vm2317 = vcmp.lt.s32.totalorder %v2297, 2
        %vm2318 = vcmp.lt.s32.totalorder %v2297, 3
        %vm2319 = vcmp.lt.s32.totalorder %v2297, 4
        %v2320 = vsel %vm2316, %v2300, %v2303
        %v2321 = vsel %vm2319, %v2309, 2102212464
        %v2322 = vsel %vm2318, %v2306, %v2321
        %v2323 = vsel %vm2317, %v2320, %v2322
        %v2324 = vsel %vm2316, %v2303, %v2306
        %v2325 = vsel %vm2319, %v2312, 920167782
        %v2326 = vsel %vm2318, %v2309, %v2325
        %v2327 = vsel %vm2317, %v2324, %v2326
        %v2328 = vsel %vm2316, %v2306, %v2309
        %v2329 = vsel %vm2319, %v2315, 1326507024
        %v2330 = vsel %vm2318, %v2312, %v2329
        %v2331 = vsel %vm2317, %v2328, %v2330
        %v2332 = vshll.u32 %v2292, 8
        %v2333 = vmul.u32.u64.compose %v2332, %v2331
        %v2334 = vextract.low.u32 %v2333
        %v2335 = vextract.high.u32 %v2333
        %v2336 = vmul.u32.u64.compose %v2332, %v2327
        %v2337 = vextract.low.u32 %v2336
        %v2338 = vextract.high.u32 %v2336
        %v2339 = vmul.u32 %v2332, %v2323
        %v2340 = vadd.s32 %v2335, %v2337
        %vm2341 = vc.u32 %v2335, %v2337
        %v2342 = vadd.s32 %v2338, 1
        %v2343 = vsel %vm2341, %v2342, %v2338
        %v2344 = vadd.s32 %v2339, %v2343
        %v2345 = vadd.s32 %v2344, 536870912
        %v2346 = vshrl.u32 %v2345, 30
        %v2347 = vshll.u32 %v2346, 30
        %v2348 = vsub.s32 %v2344, %v2347
        %vm2349 = vcmp.lt.s32.totalorder %v2348, 0
        %v2350 = vsub.s32 0, %v2348
        %v2351 = vsel %vm2349, %v2350, %v2348
        %v2352 = vclz %v2351
        %v2353 = vsub.s32 %v2352, 2
        %vm2354 = vcmp.gt.s32.totalorder 0, %v2353
        %v2355 = vsel %vm2354, 0, %v2353
        %v2356 = vsub.s32 32, %v2355
        %v2357 = vshll.u32 %v2348, %v2355
        %v2358 = vshrl.u32 %v2340, %v2356
        %v2359 = vor.u32 %v2357, %v2358
        %v2360 = vsub.s32 4294967266, %v2355
        %v2361 = vadd.s32 %v2360, 127
        %v2362 = vshll.u32 %v2361, 23
        %v2363 = vor.u32 4788187, %v2362
        %v2364 = vand.u32 2147483647, %v2363
        %v2366 = vcvt.s32.f32 %v2359
        %v2367 = vmul.f32 %v2366, %v2364
        %v2368 = vxor.u32 %v2367, 2147483648
        %v2369 = vsel %vm2286, %v2368, %v2367
        %v2370 = vsub.s32 4, %v2346
        %v2371 = vsel %vm2286, %v2370, %v2346
        %v2372 = vsel %vm2285, %v1853, %v2369
        %v2373 = vsel %vm2285, 0, %v2371
        %v2374 = vcosq.f32.pop %v2372
        %v2375 = vsinq.f32.pop %v2372
        %vm2376 = vweird.f32 %v1853
        %v2377 = vadd.s32 %v2373, 3
        %v2378 = vand.u32 %v2377, 3
        %vm2379 = vcmp.lt.s32.totalorder %v2378, 2
        %vm2380 = vcmp.eq.s32.totalorder %v2378, 0
        %v2381 = vxor.u32 %v2375, 2147483648
        %v2382 = vsel %vm2380, %v2374, %v2381
        %vm2383 = vcmp.eq.s32.totalorder %v2378, 2
        %v2384 = vxor.u32 %v2374, 2147483648
        %v2385 = vsel %vm2383, %v2384, %v2375
        %v2386 = vsel %vm2379, %v2382, %v2385
        %v2387 = vsel %vm2376, nan, %v2386
        %v2388 = vand.u32 2147483647, %v1855
        %vm2389 = vcmp.le.f32.partialorder %v2388, 0.7853982
        %vm2390 = vcmp.lt.s32.totalorder %v1855, 0
        %v2391 = vand.u32 %v1855, 2139095040
        %v2392 = vshrl.u32 %v2391, 23
        %v2393 = vsub.s32 %v2392, 127
        %v2394 = vand.u32 2147483647, %v1855
        %v2395 = vand.u32 %v2394, 8388607
        %v2396 = vor.u32 %v2395, 8388608
        %v2397 = vsub.s32 0, %v2396
        %v2398 = vadd.s32 %v2393, 1
        %vm2399 = vcmp.gt.s32.totalorder %v2398, 0
        %v2400 = vsel %vm2399, %v2398, 0
        %v2401 = vshrl.u32 %v2400, 5
        %v2402 = vand.u32 %v2400, 31
        %v2403 = vsub.s32 32, %v2402
        %v2404 = vshrl.u32 683565275, %v2403
        %v2405 = vshll.u32 683565275, %v2402
        %v2406 = vshrl.u32 2475754826, %v2403
        %v2407 = vor.u32 %v2405, %v2406
        %v2408 = vshll.u32 2475754826, %v2402
        %v2409 = vshrl.u32 2131351028, %v2403
        %v2410 = vor.u32 %v2408, %v2409
        %v2411 = vshll.u32 2131351028, %v2402
        %v2412 = vshrl.u32 2102212464, %v2403
        %v2413 = vor.u32 %v2411, %v2412
        %v2414 = vshll.u32 2102212464, %v2402
        %v2415 = vshrl.u32 920167782, %v2403
        %v2416 = vor.u32 %v2414, %v2415
        %v2417 = vshll.u32 920167782, %v2402
        %v2418 = vshrl.u32 1326507024, %v2403
        %v2419 = vor.u32 %v2417, %v2418
        %vm2420 = vcmp.lt.s32.totalorder %v2401, 1
        %vm2421 = vcmp.lt.s32.totalorder %v2401, 2
        %vm2422 = vcmp.lt.s32.totalorder %v2401, 3
        %vm2423 = vcmp.lt.s32.totalorder %v2401, 4
        %v2424 = vsel %vm2420, %v2404, %v2407
        %v2425 = vsel %vm2423, %v2413, 2102212464
        %v2426 = vsel %vm2422, %v2410, %v2425
        %v2427 = vsel %vm2421, %v2424, %v2426
        %v2428 = vsel %vm2420, %v2407, %v2410
        %v2429 = vsel %vm2423, %v2416, 920167782
        %v2430 = vsel %vm2422, %v2413, %v2429
        %v2431 = vsel %vm2421, %v2428, %v2430
        %v2432 = vsel %vm2420, %v2410, %v2413
        %v2433 = vsel %vm2423, %v2419, 1326507024
        %v2434 = vsel %vm2422, %v2416, %v2433
        %v2435 = vsel %vm2421, %v2432, %v2434
        %v2436 = vshll.u32 %v2396, 8
        %v2437 = vmul.u32.u64.compose %v2436, %v2435
        %v2438 = vextract.low.u32 %v2437
        %v2439 = vextract.high.u32 %v2437
        %v2440 = vmul.u32.u64.compose %v2436, %v2431
        %v2441 = vextract.low.u32 %v2440
        %v2442 = vextract.high.u32 %v2440
        %v2443 = vmul.u32 %v2436, %v2427
        %v2444 = vadd.s32 %v2439, %v2441
        %vm2445 = vc.u32 %v2439, %v2441
        %v2446 = vadd.s32 %v2442, 1
        %v2447 = vsel %vm2445, %v2446, %v2442
        %v2448 = vadd.s32 %v2443, %v2447
        %v2449 = vadd.s32 %v2448, 536870912
        %v2450 = vshrl.u32 %v2449, 30
        %v2451 = vshll.u32 %v2450, 30
        %v2452 = vsub.s32 %v2448, %v2451
        %vm2453 = vcmp.lt.s32.totalorder %v2452, 0
        %v2454 = vsub.s32 0, %v2452
        %v2455 = vsel %vm2453, %v2454, %v2452
        %v2456 = vclz %v2455
        %v2457 = vsub.s32 %v2456, 2
        %vm2458 = vcmp.gt.s32.totalorder 0, %v2457
        %v2459 = vsel %vm2458, 0, %v2457
        %v2460 = vsub.s32 32, %v2459
        %v2461 = vshll.u32 %v2452, %v2459
        %v2462 = vshrl.u32 %v2444, %v2460
        %v2463 = vor.u32 %v2461, %v2462
        %v2464 = vsub.s32 4294967266, %v2459
        %v2465 = vadd.s32 %v2464, 127
        %v2466 = vshll.u32 %v2465, 23
        %v2467 = vor.u32 4788187, %v2466
        %v2468 = vand.u32 2147483647, %v2467
        %v2470 = vcvt.s32.f32 %v2463
        %v2471 = vmul.f32 %v2470, %v2468
        %v2472 = vxor.u32 %v2471, 2147483648
        %v2473 = vsel %vm2390, %v2472, %v2471
        %v2474 = vsub.s32 4, %v2450
        %v2475 = vsel %vm2390, %v2474, %v2450
        %v2476 = vsel %vm2389, %v1855, %v2473
        %v2477 = vsel %vm2389, 0, %v2475
        %v2478 = vcosq.f32.pop %v2476
        %v2479 = vsinq.f32.pop %v2476
        %vm2480 = vweird.f32 %v1855
        %v2481 = vadd.s32 %v2477, 3
        %v2482 = vand.u32 %v2481, 3
        %vm2483 = vcmp.lt.s32.totalorder %v2482, 2
        %vm2484 = vcmp.eq.s32.totalorder %v2482, 0
        %v2485 = vxor.u32 %v2479, 2147483648
        %v2486 = vsel %vm2484, %v2478, %v2485
        %vm2487 = vcmp.eq.s32.totalorder %v2482, 2
        %v2488 = vxor.u32 %v2478, 2147483648
        %v2489 = vsel %vm2487, %v2488, %v2479
        %v2490 = vsel %vm2483, %v2486, %v2489
        %v2491 = vsel %vm2480, nan, %v2490
        %v2492 = vand.u32 2147483647, %v1857
        %vm2493 = vcmp.le.f32.partialorder %v2492, 0.7853982
        %vm2494 = vcmp.lt.s32.totalorder %v1857, 0
        %v2495 = vand.u32 %v1857, 2139095040
        %v2496 = vshrl.u32 %v2495, 23
        %v2497 = vsub.s32 %v2496, 127
        %v2498 = vand.u32 2147483647, %v1857
        %v2499 = vand.u32 %v2498, 8388607
        %v2500 = vor.u32 %v2499, 8388608
        %v2501 = vsub.s32 0, %v2500
        %v2502 = vadd.s32 %v2497, 1
        %vm2503 = vcmp.gt.s32.totalorder %v2502, 0
        %v2504 = vsel %vm2503, %v2502, 0
        %v2505 = vshrl.u32 %v2504, 5
        %v2506 = vand.u32 %v2504, 31
        %v2507 = vsub.s32 32, %v2506
        %v2508 = vshrl.u32 683565275, %v2507
        %v2509 = vshll.u32 683565275, %v2506
        %v2510 = vshrl.u32 2475754826, %v2507
        %v2511 = vor.u32 %v2509, %v2510
        %v2512 = vshll.u32 2475754826, %v2506
        %v2513 = vshrl.u32 2131351028, %v2507
        %v2514 = vor.u32 %v2512, %v2513
        %v2515 = vshll.u32 2131351028, %v2506
        %v2516 = vshrl.u32 2102212464, %v2507
        %v2517 = vor.u32 %v2515, %v2516
        %v2518 = vshll.u32 2102212464, %v2506
        %v2519 = vshrl.u32 920167782, %v2507
        %v2520 = vor.u32 %v2518, %v2519
        %v2521 = vshll.u32 920167782, %v2506
        %v2522 = vshrl.u32 1326507024, %v2507
        %v2523 = vor.u32 %v2521, %v2522
        %vm2524 = vcmp.lt.s32.totalorder %v2505, 1
        %vm2525 = vcmp.lt.s32.totalorder %v2505, 2
        %vm2526 = vcmp.lt.s32.totalorder %v2505, 3
        %vm2527 = vcmp.lt.s32.totalorder %v2505, 4
        %v2528 = vsel %vm2524, %v2508, %v2511
        %v2529 = vsel %vm2527, %v2517, 2102212464
        %v2530 = vsel %vm2526, %v2514, %v2529
        %v2531 = vsel %vm2525, %v2528, %v2530
        %v2532 = vsel %vm2524, %v2511, %v2514
        %v2533 = vsel %vm2527, %v2520, 920167782
        %v2534 = vsel %vm2526, %v2517, %v2533
        %v2535 = vsel %vm2525, %v2532, %v2534
        %v2536 = vsel %vm2524, %v2514, %v2517
        %v2537 = vsel %vm2527, %v2523, 1326507024
        %v2538 = vsel %vm2526, %v2520, %v2537
        %v2539 = vsel %vm2525, %v2536, %v2538
        %v2540 = vshll.u32 %v2500, 8
        %v2541 = vmul.u32.u64.compose %v2540, %v2539
        %v2542 = vextract.low.u32 %v2541
        %v2543 = vextract.high.u32 %v2541
        %v2544 = vmul.u32.u64.compose %v2540, %v2535
        %v2545 = vextract.low.u32 %v2544
        %v2546 = vextract.high.u32 %v2544
        %v2547 = vmul.u32 %v2540, %v2531
        %v2548 = vadd.s32 %v2543, %v2545
        %vm2549 = vc.u32 %v2543, %v2545
        %v2550 = vadd.s32 %v2546, 1
        %v2551 = vsel %vm2549, %v2550, %v2546
        %v2552 = vadd.s32 %v2547, %v2551
        %v2553 = vadd.s32 %v2552, 536870912
        %v2554 = vshrl.u32 %v2553, 30
        %v2555 = vshll.u32 %v2554, 30
        %v2556 = vsub.s32 %v2552, %v2555
        %vm2557 = vcmp.lt.s32.totalorder %v2556, 0
        %v2558 = vsub.s32 0, %v2556
        %v2559 = vsel %vm2557, %v2558, %v2556
        %v2560 = vclz %v2559
        %v2561 = vsub.s32 %v2560, 2
        %vm2562 = vcmp.gt.s32.totalorder 0, %v2561
        %v2563 = vsel %vm2562, 0, %v2561
        %v2564 = vsub.s32 32, %v2563
        %v2565 = vshll.u32 %v2556, %v2563
        %v2566 = vshrl.u32 %v2548, %v2564
        %v2567 = vor.u32 %v2565, %v2566
        %v2568 = vsub.s32 4294967266, %v2563
        %v2569 = vadd.s32 %v2568, 127
        %v2570 = vshll.u32 %v2569, 23
        %v2571 = vor.u32 4788187, %v2570
        %v2572 = vand.u32 2147483647, %v2571
        %v2574 = vcvt.s32.f32 %v2567
        %v2575 = vmul.f32 %v2574, %v2572
        %v2576 = vxor.u32 %v2575, 2147483648
        %v2577 = vsel %vm2494, %v2576, %v2575
        %v2578 = vsub.s32 4, %v2554
        %v2579 = vsel %vm2494, %v2578, %v2554
        %v2580 = vsel %vm2493, %v1857, %v2577
        %v2581 = vsel %vm2493, 0, %v2579
        %v2582 = vcosq.f32.pop %v2580
        %v2583 = vsinq.f32.pop %v2580
        %vm2584 = vweird.f32 %v1857
        %v2585 = vadd.s32 %v2581, 3
        %v2586 = vand.u32 %v2585, 3
        %vm2587 = vcmp.lt.s32.totalorder %v2586, 2
        %vm2588 = vcmp.eq.s32.totalorder %v2586, 0
        %v2589 = vxor.u32 %v2583, 2147483648
        %v2590 = vsel %vm2588, %v2582, %v2589
        %vm2591 = vcmp.eq.s32.totalorder %v2586, 2
        %v2592 = vxor.u32 %v2582, 2147483648
        %v2593 = vsel %vm2591, %v2592, %v2583
        %v2594 = vsel %vm2587, %v2590, %v2593
        %v2595 = vsel %vm2584, nan, %v2594
        %v2596 = vand.u32 2147483647, %v1859
        %vm2597 = vcmp.le.f32.partialorder %v2596, 0.7853982
        %vm2598 = vcmp.lt.s32.totalorder %v1859, 0
        %v2599 = vand.u32 %v1859, 2139095040
        %v2600 = vshrl.u32 %v2599, 23
        %v2601 = vsub.s32 %v2600, 127
        %v2602 = vand.u32 2147483647, %v1859
        %v2603 = vand.u32 %v2602, 8388607
        %v2604 = vor.u32 %v2603, 8388608
        %v2605 = vsub.s32 0, %v2604
        %v2606 = vadd.s32 %v2601, 1
        %vm2607 = vcmp.gt.s32.totalorder %v2606, 0
        %v2608 = vsel %vm2607, %v2606, 0
        %v2609 = vshrl.u32 %v2608, 5
        %v2610 = vand.u32 %v2608, 31
        %v2611 = vsub.s32 32, %v2610
        %v2612 = vshrl.u32 683565275, %v2611
        %v2613 = vshll.u32 683565275, %v2610
        %v2614 = vshrl.u32 2475754826, %v2611
        %v2615 = vor.u32 %v2613, %v2614
        %v2616 = vshll.u32 2475754826, %v2610
        %v2617 = vshrl.u32 2131351028, %v2611
        %v2618 = vor.u32 %v2616, %v2617
        %v2619 = vshll.u32 2131351028, %v2610
        %v2620 = vshrl.u32 2102212464, %v2611
        %v2621 = vor.u32 %v2619, %v2620
        %v2622 = vshll.u32 2102212464, %v2610
        %v2623 = vshrl.u32 920167782, %v2611
        %v2624 = vor.u32 %v2622, %v2623
        %v2625 = vshll.u32 920167782, %v2610
        %v2626 = vshrl.u32 1326507024, %v2611
        %v2627 = vor.u32 %v2625, %v2626
        %vm2628 = vcmp.lt.s32.totalorder %v2609, 1
        %vm2629 = vcmp.lt.s32.totalorder %v2609, 2
        %vm2630 = vcmp.lt.s32.totalorder %v2609, 3
        %vm2631 = vcmp.lt.s32.totalorder %v2609, 4
        %v2632 = vsel %vm2628, %v2612, %v2615
        %v2633 = vsel %vm2631, %v2621, 2102212464
        %v2634 = vsel %vm2630, %v2618, %v2633
        %v2635 = vsel %vm2629, %v2632, %v2634
        %v2636 = vsel %vm2628, %v2615, %v2618
        %v2637 = vsel %vm2631, %v2624, 920167782
        %v2638 = vsel %vm2630, %v2621, %v2637
        %v2639 = vsel %vm2629, %v2636, %v2638
        %v2640 = vsel %vm2628, %v2618, %v2621
        %v2641 = vsel %vm2631, %v2627, 1326507024
        %v2642 = vsel %vm2630, %v2624, %v2641
        %v2643 = vsel %vm2629, %v2640, %v2642
        %v2644 = vshll.u32 %v2604, 8
        %v2645 = vmul.u32.u64.compose %v2644, %v2643
        %v2646 = vextract.low.u32 %v2645
        %v2647 = vextract.high.u32 %v2645
        %v2648 = vmul.u32.u64.compose %v2644, %v2639
        %v2649 = vextract.low.u32 %v2648
        %v2650 = vextract.high.u32 %v2648
        %v2651 = vmul.u32 %v2644, %v2635
        %v2652 = vadd.s32 %v2647, %v2649
        %vm2653 = vc.u32 %v2647, %v2649
        %v2654 = vadd.s32 %v2650, 1
        %v2655 = vsel %vm2653, %v2654, %v2650
        %v2656 = vadd.s32 %v2651, %v2655
        %v2657 = vadd.s32 %v2656, 536870912
        %v2658 = vshrl.u32 %v2657, 30
        %v2659 = vshll.u32 %v2658, 30
        %v2660 = vsub.s32 %v2656, %v2659
        %vm2661 = vcmp.lt.s32.totalorder %v2660, 0
        %v2662 = vsub.s32 0, %v2660
        %v2663 = vsel %vm2661, %v2662, %v2660
        %v2664 = vclz %v2663
        %v2665 = vsub.s32 %v2664, 2
        %vm2666 = vcmp.gt.s32.totalorder 0, %v2665
        %v2667 = vsel %vm2666, 0, %v2665
        %v2668 = vsub.s32 32, %v2667
        %v2669 = vshll.u32 %v2660, %v2667
        %v2670 = vshrl.u32 %v2652, %v2668
        %v2671 = vor.u32 %v2669, %v2670
        %v2672 = vsub.s32 4294967266, %v2667
        %v2673 = vadd.s32 %v2672, 127
        %v2674 = vshll.u32 %v2673, 23
        %v2675 = vor.u32 4788187, %v2674
        %v2676 = vand.u32 2147483647, %v2675
        %v2678 = vcvt.s32.f32 %v2671
        %v2679 = vmul.f32 %v2678, %v2676
        %v2680 = vxor.u32 %v2679, 2147483648
        %v2681 = vsel %vm2598, %v2680, %v2679
        %v2682 = vsub.s32 4, %v2658
        %v2683 = vsel %vm2598, %v2682, %v2658
        %v2684 = vsel %vm2597, %v1859, %v2681
        %v2685 = vsel %vm2597, 0, %v2683
        %v2686 = vcosq.f32.pop %v2684
        %v2687 = vsinq.f32.pop %v2684
        %vm2688 = vweird.f32 %v1859
        %v2689 = vadd.s32 %v2685, 3
        %v2690 = vand.u32 %v2689, 3
        %vm2691 = vcmp.lt.s32.totalorder %v2690, 2
        %vm2692 = vcmp.eq.s32.totalorder %v2690, 0
        %v2693 = vxor.u32 %v2687, 2147483648
        %v2694 = vsel %vm2692, %v2686, %v2693
        %vm2695 = vcmp.eq.s32.totalorder %v2690, 2
        %v2696 = vxor.u32 %v2686, 2147483648
        %v2697 = vsel %vm2695, %v2696, %v2687
        %v2698 = vsel %vm2691, %v2694, %v2697
        %v2699 = vsel %vm2688, nan, %v2698
        %v2700 = vand.u32 2147483647, %v1861
        %vm2701 = vcmp.le.f32.partialorder %v2700, 0.7853982
        %vm2702 = vcmp.lt.s32.totalorder %v1861, 0
        %v2703 = vand.u32 %v1861, 2139095040
        %v2704 = vshrl.u32 %v2703, 23
        %v2705 = vsub.s32 %v2704, 127
        %v2706 = vand.u32 2147483647, %v1861
        %v2707 = vand.u32 %v2706, 8388607
        %v2708 = vor.u32 %v2707, 8388608
        %v2709 = vsub.s32 0, %v2708
        %v2710 = vadd.s32 %v2705, 1
        %vm2711 = vcmp.gt.s32.totalorder %v2710, 0
        %v2712 = vsel %vm2711, %v2710, 0
        %v2713 = vshrl.u32 %v2712, 5
        %v2714 = vand.u32 %v2712, 31
        %v2715 = vsub.s32 32, %v2714
        %v2716 = vshrl.u32 683565275, %v2715
        %v2717 = vshll.u32 683565275, %v2714
        %v2718 = vshrl.u32 2475754826, %v2715
        %v2719 = vor.u32 %v2717, %v2718
        %v2720 = vshll.u32 2475754826, %v2714
        %v2721 = vshrl.u32 2131351028, %v2715
        %v2722 = vor.u32 %v2720, %v2721
        %v2723 = vshll.u32 2131351028, %v2714
        %v2724 = vshrl.u32 2102212464, %v2715
        %v2725 = vor.u32 %v2723, %v2724
        %v2726 = vshll.u32 2102212464, %v2714
        %v2727 = vshrl.u32 920167782, %v2715
        %v2728 = vor.u32 %v2726, %v2727
        %v2729 = vshll.u32 920167782, %v2714
        %v2730 = vshrl.u32 1326507024, %v2715
        %v2731 = vor.u32 %v2729, %v2730
        %vm2732 = vcmp.lt.s32.totalorder %v2713, 1
        %vm2733 = vcmp.lt.s32.totalorder %v2713, 2
        %vm2734 = vcmp.lt.s32.totalorder %v2713, 3
        %vm2735 = vcmp.lt.s32.totalorder %v2713, 4
        %v2736 = vsel %vm2732, %v2716, %v2719
        %v2737 = vsel %vm2735, %v2725, 2102212464
        %v2738 = vsel %vm2734, %v2722, %v2737
        %v2739 = vsel %vm2733, %v2736, %v2738
        %v2740 = vsel %vm2732, %v2719, %v2722
        %v2741 = vsel %vm2735, %v2728, 920167782
        %v2742 = vsel %vm2734, %v2725, %v2741
        %v2743 = vsel %vm2733, %v2740, %v2742
        %v2744 = vsel %vm2732, %v2722, %v2725
        %v2745 = vsel %vm2735, %v2731, 1326507024
        %v2746 = vsel %vm2734, %v2728, %v2745
        %v2747 = vsel %vm2733, %v2744, %v2746
        %v2748 = vshll.u32 %v2708, 8
        %v2749 = vmul.u32.u64.compose %v2748, %v2747
        %v2750 = vextract.low.u32 %v2749
        %v2751 = vextract.high.u32 %v2749
        %v2752 = vmul.u32.u64.compose %v2748, %v2743
        %v2753 = vextract.low.u32 %v2752
        %v2754 = vextract.high.u32 %v2752
        %v2755 = vmul.u32 %v2748, %v2739
        %v2756 = vadd.s32 %v2751, %v2753
        %vm2757 = vc.u32 %v2751, %v2753
        %v2758 = vadd.s32 %v2754, 1
        %v2759 = vsel %vm2757, %v2758, %v2754
        %v2760 = vadd.s32 %v2755, %v2759
        %v2761 = vadd.s32 %v2760, 536870912
        %v2762 = vshrl.u32 %v2761, 30
        %v2763 = vshll.u32 %v2762, 30
        %v2764 = vsub.s32 %v2760, %v2763
        %vm2765 = vcmp.lt.s32.totalorder %v2764, 0
        %v2766 = vsub.s32 0, %v2764
        %v2767 = vsel %vm2765, %v2766, %v2764
        %v2768 = vclz %v2767
        %v2769 = vsub.s32 %v2768, 2
        %vm2770 = vcmp.gt.s32.totalorder 0, %v2769
        %v2771 = vsel %vm2770, 0, %v2769
        %v2772 = vsub.s32 32, %v2771
        %v2773 = vshll.u32 %v2764, %v2771
        %v2774 = vshrl.u32 %v2756, %v2772
        %v2775 = vor.u32 %v2773, %v2774
        %v2776 = vsub.s32 4294967266, %v2771
        %v2777 = vadd.s32 %v2776, 127
        %v2778 = vshll.u32 %v2777, 23
        %v2779 = vor.u32 4788187, %v2778
        %v2780 = vand.u32 2147483647, %v2779
        %v2782 = vcvt.s32.f32 %v2775
        %v2783 = vmul.f32 %v2782, %v2780
        %v2784 = vxor.u32 %v2783, 2147483648
        %v2785 = vsel %vm2702, %v2784, %v2783
        %v2786 = vsub.s32 4, %v2762
        %v2787 = vsel %vm2702, %v2786, %v2762
        %v2788 = vsel %vm2701, %v1861, %v2785
        %v2789 = vsel %vm2701, 0, %v2787
        %v2790 = vcosq.f32.pop %v2788
        %v2791 = vsinq.f32.pop %v2788
        %vm2792 = vweird.f32 %v1861
        %v2793 = vadd.s32 %v2789, 3
        %v2794 = vand.u32 %v2793, 3
        %vm2795 = vcmp.lt.s32.totalorder %v2794, 2
        %vm2796 = vcmp.eq.s32.totalorder %v2794, 0
        %v2797 = vxor.u32 %v2791, 2147483648
        %v2798 = vsel %vm2796, %v2790, %v2797
        %vm2799 = vcmp.eq.s32.totalorder %v2794, 2
        %v2800 = vxor.u32 %v2790, 2147483648
        %v2801 = vsel %vm2799, %v2800, %v2791
        %v2802 = vsel %vm2795, %v2798, %v2801
        %v2803 = vsel %vm2792, nan, %v2802
        %v2804 = vand.u32 2147483647, %v1863
        %vm2805 = vcmp.le.f32.partialorder %v2804, 0.7853982
        %vm2806 = vcmp.lt.s32.totalorder %v1863, 0
        %v2807 = vand.u32 %v1863, 2139095040
        %v2808 = vshrl.u32 %v2807, 23
        %v2809 = vsub.s32 %v2808, 127
        %v2810 = vand.u32 2147483647, %v1863
        %v2811 = vand.u32 %v2810, 8388607
        %v2812 = vor.u32 %v2811, 8388608
        %v2813 = vsub.s32 0, %v2812
        %v2814 = vadd.s32 %v2809, 1
        %vm2815 = vcmp.gt.s32.totalorder %v2814, 0
        %v2816 = vsel %vm2815, %v2814, 0
        %v2817 = vshrl.u32 %v2816, 5
        %v2818 = vand.u32 %v2816, 31
        %v2819 = vsub.s32 32, %v2818
        %v2820 = vshrl.u32 683565275, %v2819
        %v2821 = vshll.u32 683565275, %v2818
        %v2822 = vshrl.u32 2475754826, %v2819
        %v2823 = vor.u32 %v2821, %v2822
        %v2824 = vshll.u32 2475754826, %v2818
        %v2825 = vshrl.u32 2131351028, %v2819
        %v2826 = vor.u32 %v2824, %v2825
        %v2827 = vshll.u32 2131351028, %v2818
        %v2828 = vshrl.u32 2102212464, %v2819
        %v2829 = vor.u32 %v2827, %v2828
        %v2830 = vshll.u32 2102212464, %v2818
        %v2831 = vshrl.u32 920167782, %v2819
        %v2832 = vor.u32 %v2830, %v2831
        %v2833 = vshll.u32 920167782, %v2818
        %v2834 = vshrl.u32 1326507024, %v2819
        %v2835 = vor.u32 %v2833, %v2834
        %vm2836 = vcmp.lt.s32.totalorder %v2817, 1
        %vm2837 = vcmp.lt.s32.totalorder %v2817, 2
        %vm2838 = vcmp.lt.s32.totalorder %v2817, 3
        %vm2839 = vcmp.lt.s32.totalorder %v2817, 4
        %v2840 = vsel %vm2836, %v2820, %v2823
        %v2841 = vsel %vm2839, %v2829, 2102212464
        %v2842 = vsel %vm2838, %v2826, %v2841
        %v2843 = vsel %vm2837, %v2840, %v2842
        %v2844 = vsel %vm2836, %v2823, %v2826
        %v2845 = vsel %vm2839, %v2832, 920167782
        %v2846 = vsel %vm2838, %v2829, %v2845
        %v2847 = vsel %vm2837, %v2844, %v2846
        %v2848 = vsel %vm2836, %v2826, %v2829
        %v2849 = vsel %vm2839, %v2835, 1326507024
        %v2850 = vsel %vm2838, %v2832, %v2849
        %v2851 = vsel %vm2837, %v2848, %v2850
        %v2852 = vshll.u32 %v2812, 8
        %v2853 = vmul.u32.u64.compose %v2852, %v2851
        %v2854 = vextract.low.u32 %v2853
        %v2855 = vextract.high.u32 %v2853
        %v2856 = vmul.u32.u64.compose %v2852, %v2847
        %v2857 = vextract.low.u32 %v2856
        %v2858 = vextract.high.u32 %v2856
        %v2859 = vmul.u32 %v2852, %v2843
        %v2860 = vadd.s32 %v2855, %v2857
        %vm2861 = vc.u32 %v2855, %v2857
        %v2862 = vadd.s32 %v2858, 1
        %v2863 = vsel %vm2861, %v2862, %v2858
        %v2864 = vadd.s32 %v2859, %v2863
        %v2865 = vadd.s32 %v2864, 536870912
        %v2866 = vshrl.u32 %v2865, 30
        %v2867 = vshll.u32 %v2866, 30
        %v2868 = vsub.s32 %v2864, %v2867
        %vm2869 = vcmp.lt.s32.totalorder %v2868, 0
        %v2870 = vsub.s32 0, %v2868
        %v2871 = vsel %vm2869, %v2870, %v2868
        %v2872 = vclz %v2871
        %v2873 = vsub.s32 %v2872, 2
        %vm2874 = vcmp.gt.s32.totalorder 0, %v2873
        %v2875 = vsel %vm2874, 0, %v2873
        %v2876 = vsub.s32 32, %v2875
        %v2877 = vshll.u32 %v2868, %v2875
        %v2878 = vshrl.u32 %v2860, %v2876
        %v2879 = vor.u32 %v2877, %v2878
        %v2880 = vsub.s32 4294967266, %v2875
        %v2881 = vadd.s32 %v2880, 127
        %v2882 = vshll.u32 %v2881, 23
        %v2883 = vor.u32 4788187, %v2882
        %v2884 = vand.u32 2147483647, %v2883
        %v2886 = vcvt.s32.f32 %v2879
        %v2887 = vmul.f32 %v2886, %v2884
        %v2888 = vxor.u32 %v2887, 2147483648
        %v2889 = vsel %vm2806, %v2888, %v2887
        %v2890 = vsub.s32 4, %v2866
        %v2891 = vsel %vm2806, %v2890, %v2866
        %v2892 = vsel %vm2805, %v1863, %v2889
        %v2893 = vsel %vm2805, 0, %v2891
        %v2894 = vcosq.f32.pop %v2892
        %v2895 = vsinq.f32.pop %v2892
        %vm2896 = vweird.f32 %v1863
        %v2897 = vadd.s32 %v2893, 3
        %v2898 = vand.u32 %v2897, 3
        %vm2899 = vcmp.lt.s32.totalorder %v2898, 2
        %vm2900 = vcmp.eq.s32.totalorder %v2898, 0
        %v2901 = vxor.u32 %v2895, 2147483648
        %v2902 = vsel %vm2900, %v2894, %v2901
        %vm2903 = vcmp.eq.s32.totalorder %v2898, 2
        %v2904 = vxor.u32 %v2894, 2147483648
        %v2905 = vsel %vm2903, %v2904, %v2895
        %v2906 = vsel %vm2899, %v2902, %v2905
        %v2907 = vsel %vm2896, nan, %v2906
        %v2908 = vand.u32 2147483647, %v1865
        %vm2909 = vcmp.le.f32.partialorder %v2908, 0.7853982
        %vm2910 = vcmp.lt.s32.totalorder %v1865, 0
        %v2911 = vand.u32 %v1865, 2139095040
        %v2912 = vshrl.u32 %v2911, 23
        %v2913 = vsub.s32 %v2912, 127
        %v2914 = vand.u32 2147483647, %v1865
        %v2915 = vand.u32 %v2914, 8388607
        %v2916 = vor.u32 %v2915, 8388608
        %v2917 = vsub.s32 0, %v2916
        %v2918 = vadd.s32 %v2913, 1
        %vm2919 = vcmp.gt.s32.totalorder %v2918, 0
        %v2920 = vsel %vm2919, %v2918, 0
        %v2921 = vshrl.u32 %v2920, 5
        %v2922 = vand.u32 %v2920, 31
        %v2923 = vsub.s32 32, %v2922
        %v2924 = vshrl.u32 683565275, %v2923
        %v2925 = vshll.u32 683565275, %v2922
        %v2926 = vshrl.u32 2475754826, %v2923
        %v2927 = vor.u32 %v2925, %v2926
        %v2928 = vshll.u32 2475754826, %v2922
        %v2929 = vshrl.u32 2131351028, %v2923
        %v2930 = vor.u32 %v2928, %v2929
        %v2931 = vshll.u32 2131351028, %v2922
        %v2932 = vshrl.u32 2102212464, %v2923
        %v2933 = vor.u32 %v2931, %v2932
        %v2934 = vshll.u32 2102212464, %v2922
        %v2935 = vshrl.u32 920167782, %v2923
        %v2936 = vor.u32 %v2934, %v2935
        %v2937 = vshll.u32 920167782, %v2922
        %v2938 = vshrl.u32 1326507024, %v2923
        %v2939 = vor.u32 %v2937, %v2938
        %vm2940 = vcmp.lt.s32.totalorder %v2921, 1
        %vm2941 = vcmp.lt.s32.totalorder %v2921, 2
        %vm2942 = vcmp.lt.s32.totalorder %v2921, 3
        %vm2943 = vcmp.lt.s32.totalorder %v2921, 4
        %v2944 = vsel %vm2940, %v2924, %v2927
        %v2945 = vsel %vm2943, %v2933, 2102212464
        %v2946 = vsel %vm2942, %v2930, %v2945
        %v2947 = vsel %vm2941, %v2944, %v2946
        %v2948 = vsel %vm2940, %v2927, %v2930
        %v2949 = vsel %vm2943, %v2936, 920167782
        %v2950 = vsel %vm2942, %v2933, %v2949
        %v2951 = vsel %vm2941, %v2948, %v2950
        %v2952 = vsel %vm2940, %v2930, %v2933
        %v2953 = vsel %vm2943, %v2939, 1326507024
        %v2954 = vsel %vm2942, %v2936, %v2953
        %v2955 = vsel %vm2941, %v2952, %v2954
        %v2956 = vshll.u32 %v2916, 8
        %v2957 = vmul.u32.u64.compose %v2956, %v2955
        %v2958 = vextract.low.u32 %v2957
        %v2959 = vextract.high.u32 %v2957
        %v2960 = vmul.u32.u64.compose %v2956, %v2951
        %v2961 = vextract.low.u32 %v2960
        %v2962 = vextract.high.u32 %v2960
        %v2963 = vmul.u32 %v2956, %v2947
        %v2964 = vadd.s32 %v2959, %v2961
        %vm2965 = vc.u32 %v2959, %v2961
        %v2966 = vadd.s32 %v2962, 1
        %v2967 = vsel %vm2965, %v2966, %v2962
        %v2968 = vadd.s32 %v2963, %v2967
        %v2969 = vadd.s32 %v2968, 536870912
        %v2970 = vshrl.u32 %v2969, 30
        %v2971 = vshll.u32 %v2970, 30
        %v2972 = vsub.s32 %v2968, %v2971
        %vm2973 = vcmp.lt.s32.totalorder %v2972, 0
        %v2974 = vsub.s32 0, %v2972
        %v2975 = vsel %vm2973, %v2974, %v2972
        %v2976 = vclz %v2975
        %v2977 = vsub.s32 %v2976, 2
        %vm2978 = vcmp.gt.s32.totalorder 0, %v2977
        %v2979 = vsel %vm2978, 0, %v2977
        %v2980 = vsub.s32 32, %v2979
        %v2981 = vshll.u32 %v2972, %v2979
        %v2982 = vshrl.u32 %v2964, %v2980
        %v2983 = vor.u32 %v2981, %v2982
        %v2984 = vsub.s32 4294967266, %v2979
        %v2985 = vadd.s32 %v2984, 127
        %v2986 = vshll.u32 %v2985, 23
        %v2987 = vor.u32 4788187, %v2986
        %v2988 = vand.u32 2147483647, %v2987
        %v2990 = vcvt.s32.f32 %v2983
        %v2991 = vmul.f32 %v2990, %v2988
        %v2992 = vxor.u32 %v2991, 2147483648
        %v2993 = vsel %vm2910, %v2992, %v2991
        %v2994 = vsub.s32 4, %v2970
        %v2995 = vsel %vm2910, %v2994, %v2970
        %v2996 = vsel %vm2909, %v1865, %v2993
        %v2997 = vsel %vm2909, 0, %v2995
        %v2998 = vcosq.f32.pop %v2996
        %v2999 = vsinq.f32.pop %v2996
        %vm3000 = vweird.f32 %v1865
        %v3001 = vadd.s32 %v2997, 3
        %v3002 = vand.u32 %v3001, 3
        %vm3003 = vcmp.lt.s32.totalorder %v3002, 2
        %vm3004 = vcmp.eq.s32.totalorder %v3002, 0
        %v3005 = vxor.u32 %v2999, 2147483648
        %v3006 = vsel %vm3004, %v2998, %v3005
        %vm3007 = vcmp.eq.s32.totalorder %v3002, 2
        %v3008 = vxor.u32 %v2998, 2147483648
        %v3009 = vsel %vm3007, %v3008, %v2999
        %v3010 = vsel %vm3003, %v3006, %v3009
        %v3011 = vsel %vm3000, nan, %v3010
        %v3012 = vand.u32 2147483647, %v1867
        %vm3013 = vcmp.le.f32.partialorder %v3012, 0.7853982
        %vm3014 = vcmp.lt.s32.totalorder %v1867, 0
        %v3015 = vand.u32 %v1867, 2139095040
        %v3016 = vshrl.u32 %v3015, 23
        %v3017 = vsub.s32 %v3016, 127
        %v3018 = vand.u32 2147483647, %v1867
        %v3019 = vand.u32 %v3018, 8388607
        %v3020 = vor.u32 %v3019, 8388608
        %v3021 = vsub.s32 0, %v3020
        %v3022 = vadd.s32 %v3017, 1
        %vm3023 = vcmp.gt.s32.totalorder %v3022, 0
        %v3024 = vsel %vm3023, %v3022, 0
        %v3025 = vshrl.u32 %v3024, 5
        %v3026 = vand.u32 %v3024, 31
        %v3027 = vsub.s32 32, %v3026
        %v3028 = vshrl.u32 683565275, %v3027
        %v3029 = vshll.u32 683565275, %v3026
        %v3030 = vshrl.u32 2475754826, %v3027
        %v3031 = vor.u32 %v3029, %v3030
        %v3032 = vshll.u32 2475754826, %v3026
        %v3033 = vshrl.u32 2131351028, %v3027
        %v3034 = vor.u32 %v3032, %v3033
        %v3035 = vshll.u32 2131351028, %v3026
        %v3036 = vshrl.u32 2102212464, %v3027
        %v3037 = vor.u32 %v3035, %v3036
        %v3038 = vshll.u32 2102212464, %v3026
        %v3039 = vshrl.u32 920167782, %v3027
        %v3040 = vor.u32 %v3038, %v3039
        %v3041 = vshll.u32 920167782, %v3026
        %v3042 = vshrl.u32 1326507024, %v3027
        %v3043 = vor.u32 %v3041, %v3042
        %vm3044 = vcmp.lt.s32.totalorder %v3025, 1
        %vm3045 = vcmp.lt.s32.totalorder %v3025, 2
        %vm3046 = vcmp.lt.s32.totalorder %v3025, 3
        %vm3047 = vcmp.lt.s32.totalorder %v3025, 4
        %v3048 = vsel %vm3044, %v3028, %v3031
        %v3049 = vsel %vm3047, %v3037, 2102212464
        %v3050 = vsel %vm3046, %v3034, %v3049
        %v3051 = vsel %vm3045, %v3048, %v3050
        %v3052 = vsel %vm3044, %v3031, %v3034
        %v3053 = vsel %vm3047, %v3040, 920167782
        %v3054 = vsel %vm3046, %v3037, %v3053
        %v3055 = vsel %vm3045, %v3052, %v3054
        %v3056 = vsel %vm3044, %v3034, %v3037
        %v3057 = vsel %vm3047, %v3043, 1326507024
        %v3058 = vsel %vm3046, %v3040, %v3057
        %v3059 = vsel %vm3045, %v3056, %v3058
        %v3060 = vshll.u32 %v3020, 8
        %v3061 = vmul.u32.u64.compose %v3060, %v3059
        %v3062 = vextract.low.u32 %v3061
        %v3063 = vextract.high.u32 %v3061
        %v3064 = vmul.u32.u64.compose %v3060, %v3055
        %v3065 = vextract.low.u32 %v3064
        %v3066 = vextract.high.u32 %v3064
        %v3067 = vmul.u32 %v3060, %v3051
        %v3068 = vadd.s32 %v3063, %v3065
        %vm3069 = vc.u32 %v3063, %v3065
        %v3070 = vadd.s32 %v3066, 1
        %v3071 = vsel %vm3069, %v3070, %v3066
        %v3072 = vadd.s32 %v3067, %v3071
        %v3073 = vadd.s32 %v3072, 536870912
        %v3074 = vshrl.u32 %v3073, 30
        %v3075 = vshll.u32 %v3074, 30
        %v3076 = vsub.s32 %v3072, %v3075
        %vm3077 = vcmp.lt.s32.totalorder %v3076, 0
        %v3078 = vsub.s32 0, %v3076
        %v3079 = vsel %vm3077, %v3078, %v3076
        %v3080 = vclz %v3079
        %v3081 = vsub.s32 %v3080, 2
        %vm3082 = vcmp.gt.s32.totalorder 0, %v3081
        %v3083 = vsel %vm3082, 0, %v3081
        %v3084 = vsub.s32 32, %v3083
        %v3085 = vshll.u32 %v3076, %v3083
        %v3086 = vshrl.u32 %v3068, %v3084
        %v3087 = vor.u32 %v3085, %v3086
        %v3088 = vsub.s32 4294967266, %v3083
        %v3089 = vadd.s32 %v3088, 127
        %v3090 = vshll.u32 %v3089, 23
        %v3091 = vor.u32 4788187, %v3090
        %v3092 = vand.u32 2147483647, %v3091
        %v3094 = vcvt.s32.f32 %v3087
        %v3095 = vmul.f32 %v3094, %v3092
        %v3096 = vxor.u32 %v3095, 2147483648
        %v3097 = vsel %vm3014, %v3096, %v3095
        %v3098 = vsub.s32 4, %v3074
        %v3099 = vsel %vm3014, %v3098, %v3074
        %v3100 = vsel %vm3013, %v1867, %v3097
        %v3101 = vsel %vm3013, 0, %v3099
        %v3102 = vcosq.f32.pop %v3100
        %v3103 = vsinq.f32.pop %v3100
        %vm3104 = vweird.f32 %v1867
        %v3105 = vadd.s32 %v3101, 3
        %v3106 = vand.u32 %v3105, 3
        %vm3107 = vcmp.lt.s32.totalorder %v3106, 2
        %vm3108 = vcmp.eq.s32.totalorder %v3106, 0
        %v3109 = vxor.u32 %v3103, 2147483648
        %v3110 = vsel %vm3108, %v3102, %v3109
        %vm3111 = vcmp.eq.s32.totalorder %v3106, 2
        %v3112 = vxor.u32 %v3102, 2147483648
        %v3113 = vsel %vm3111, %v3112, %v3103
        %v3114 = vsel %vm3107, %v3110, %v3113
        %v3115 = vsel %vm3104, nan, %v3114
        %v3116 = vstv %s291
        %v3118 = vsel %vm1655, %v290, 0
        %v3121 = vsel %vm1665, %v2803, 0
        %v3124 = vsel %vm1665, %v2907, 0
        %v3127 = vsel %vm1665, %v3011, 0
        %v3130 = vsel %vm1665, %v3115, 0
        %3132 = vmatprep.subr.mxu0 %v2075
        %3133 = vmatpush1.msra.mxu0 %v1971
        %3134 = vmatprep.subr.mxu0 %v2491
        %3135 = vmatpush1.msra.mxu0 %v2387
        %3136 = vmatprep.subr.mxu0 %v3124
        %3137 = vmatpush1.msra.mxu0 %v3121
        %3138 = vmatprep.subr.mxu0 0.0
        %3139 = vmatpush1.msra.mxu0 0.0
        %3140 = vmatprep.subr.mxu0 0.0
        %3141 = vmatpush1.msra.mxu0 0.0
        %3142 = vmatprep.subr.mxu0 0.0
        %3143 = vmatpush1.msra.mxu0 0.0
        %3144 = vmatprep.subr.mxu0 0.0
        %3145 = vmatpush1.msra.mxu0 0.0
        %3146 = vmatprep.subr.mxu0 0.0
        %3147 = vmatpush1.msra.mxu0 0.0
        %3148 = vmatprep.subr.mxu0 0.0
        %3149 = vmatpush1.msra.mxu0 0.0
        %3150 = vmatprep.subr.mxu0 0.0
        %3151 = vmatpush1.msra.mxu0 0.0
        %3152 = vmatprep.subr.mxu0 0.0
        %3153 = vmatpush1.msra.mxu0 0.0
        %3154 = vmatprep.subr.mxu0 0.0
        %3155 = vmatpush1.msra.mxu0 0.0
        %3156 = vmatprep.subr.mxu0 0.0
        %3157 = vmatpush1.msra.mxu0 0.0
        %3158 = vmatprep.subr.mxu0 0.0
        %3159 = vmatpush1.msra.mxu0 0.0
        %3160 = vmatprep.subr.mxu0 0.0
        %3161 = vmatpush1.msra.mxu0 0.0
        %3162 = vmatprep.subr.mxu0 0.0
        %3163 = vmatpush1.msra.mxu0 0.0
        %3164 = vmatprep.subr.mxu0 0.0
        %3165 = vmatpush1.msra.mxu0 0.0
        %3166 = vmatprep.subr.mxu0 0.0
        %3167 = vmatpush1.msra.mxu0 0.0
        %3168 = vmatprep.subr.mxu0 0.0
        %3169 = vmatpush1.msra.mxu0 0.0
        %3170 = vmatprep.subr.mxu0 0.0
        %3171 = vmatpush1.msra.mxu0 0.0
        %3172 = vmatprep.subr.mxu0 0.0
        %3173 = vmatpush1.msra.mxu0 0.0
        %3174 = vmatprep.subr.mxu0 0.0
        %3175 = vmatpush1.msra.mxu0 0.0
        %3176 = vmatprep.subr.mxu0 0.0
        %3177 = vmatpush1.msra.mxu0 0.0
        %3178 = vmatprep.subr.mxu0 0.0
        %3179 = vmatpush1.msra.mxu0 0.0
        %3180 = vmatprep.subr.mxu0 0.0
        %3181 = vmatpush1.msra.mxu0 0.0
        %3182 = vmatprep.subr.mxu0 0.0
        %3183 = vmatpush1.msra.mxu0 0.0
        %3184 = vmatprep.subr.mxu0 0.0
        %3185 = vmatpush1.msra.mxu0 0.0
        %3186 = vmatprep.subr.mxu0 0.0
        %3187 = vmatpush1.msra.mxu0 0.0
        %3188 = vmatprep.subr.mxu0 0.0
        %3189 = vmatpush1.msra.mxu0 0.0
        %3190 = vmatprep.subr.mxu0 0.0
        %3191 = vmatpush1.msra.mxu0 0.0
        %3192 = vmatprep.subr.mxu0 0.0
        %3193 = vmatpush1.msra.mxu0 0.0
        %3194 = vmatprep.subr.mxu0 0.0
        %3195 = vmatpush1.msra.mxu0 0.0
        %3196 = vmatprep.mubr.f32.mxu0 0.0
        %3197 = vmatmul.mubr.f32.gmra.mrb[0].mxu0 %v3118
        %v3198 = vpop.f32.mrb[0].mxu0
        %v3199 = vadd.f32 %v3116, %v3198
        %v3200 = vpop.f32.mrb[0].mxu0
        %v3201 = vadd.f32 %v3116, %v3200
        %3202 = vdwg.mxu0
        %3203 = vmatprep.subr.mxu0 %v2283
        %3204 = vmatpush1.msra.mxu0 %v2179
        %3205 = vmatprep.subr.mxu0 %v2699
        %3206 = vmatpush1.msra.mxu0 %v2595
        %3207 = vmatprep.subr.mxu0 %v3130
        %3208 = vmatpush1.msra.mxu0 %v3127
        %3209 = vmatprep.subr.mxu0 0.0
        %3210 = vmatpush1.msra.mxu0 0.0
        %3211 = vmatprep.subr.mxu0 0.0
        %3212 = vmatpush1.msra.mxu0 0.0
        %3213 = vmatprep.subr.mxu0 0.0
        %3214 = vmatpush1.msra.mxu0 0.0
        %3215 = vmatprep.subr.mxu0 0.0
        %3216 = vmatpush1.msra.mxu0 0.0
        %3217 = vmatprep.subr.mxu0 0.0
        %3218 = vmatpush1.msra.mxu0 0.0
        %3219 = vmatprep.subr.mxu0 0.0
        %3220 = vmatpush1.msra.mxu0 0.0
        %3221 = vmatprep.subr.mxu0 0.0
        %3222 = vmatpush1.msra.mxu0 0.0
        %3223 = vmatprep.subr.mxu0 0.0
        %3224 = vmatpush1.msra.mxu0 0.0
        %3225 = vmatprep.subr.mxu0 0.0
        %3226 = vmatpush1.msra.mxu0 0.0
        %3227 = vmatprep.subr.mxu0 0.0
        %3228 = vmatpush1.msra.mxu0 0.0
        %3229 = vmatprep.subr.mxu0 0.0
        %3230 = vmatpush1.msra.mxu0 0.0
        %3231 = vmatprep.subr.mxu0 0.0
        %3232 = vmatpush1.msra.mxu0 0.0
        %3233 = vmatprep.subr.mxu0 0.0
        %3234 = vmatpush1.msra.mxu0 0.0
        %3235 = vmatprep.subr.mxu0 0.0
        %3236 = vmatpush1.msra.mxu0 0.0
        %3237 = vmatprep.subr.mxu0 0.0
        %3238 = vmatpush1.msra.mxu0 0.0
        %3239 = vmatprep.subr.mxu0 0.0
        %3240 = vmatpush1.msra.mxu0 0.0
        %3241 = vmatprep.subr.mxu0 0.0
        %3242 = vmatpush1.msra.mxu0 0.0
        %3243 = vmatprep.subr.mxu0 0.0
        %3244 = vmatpush1.msra.mxu0 0.0
        %3245 = vmatprep.subr.mxu0 0.0
        %3246 = vmatpush1.msra.mxu0 0.0
        %3247 = vmatprep.subr.mxu0 0.0
        %3248 = vmatpush1.msra.mxu0 0.0
        %3249 = vmatprep.subr.mxu0 0.0
        %3250 = vmatpush1.msra.mxu0 0.0
        %3251 = vmatprep.subr.mxu0 0.0
        %3252 = vmatpush1.msra.mxu0 0.0
        %3253 = vmatprep.subr.mxu0 0.0
        %3254 = vmatpush1.msra.mxu0 0.0
        %3255 = vmatprep.subr.mxu0 0.0
        %3256 = vmatpush1.msra.mxu0 0.0
        %3257 = vmatprep.subr.mxu0 0.0
        %3258 = vmatpush1.msra.mxu0 0.0
        %3259 = vmatprep.subr.mxu0 0.0
        %3260 = vmatpush1.msra.mxu0 0.0
        %3261 = vmatprep.subr.mxu0 0.0
        %3262 = vmatpush1.msra.mxu0 0.0
        %3263 = vmatprep.subr.mxu0 0.0
        %3264 = vmatpush1.msra.mxu0 0.0
        %3265 = vmatprep.subr.mxu0 0.0
        %3266 = vmatpush1.msra.mxu0 0.0
        %3267 = vmatprep.mubr.f32.mxu0 0.0
        %3268 = vmatmul.mubr.f32.gmra.mrb[0].mxu0 %v3118
        %v3269 = vpop.f32.mrb[0].mxu0
        %v3270 = vadd.f32 %v3116, %v3269
        %v3271 = vpop.f32.mrb[0].mxu0
        %v3272 = vadd.f32 %v3116, %v3271
        %3273 = vdwg.mxu0
        %v3278 = vcombine.low %v3199, %v3201
        %v3279 = vcombine.low %v3270, %v3272
        %v3281 = vunpack.c.l.s4 1966171168
        %v3282 = vunpack.c.0.s8 %v3281
        %v3283 = vlaneseq
        %v3284 = vshrl.u32 %v3283, 7
        %v3285 = vsub.s32 %v3282, %v3284
        %v3286 = vrot.slane %v3278, %v3285
        %v3288 = vunpack.c.l.s4 1966171168
        %v3289 = vunpack.c.0.s8 %v3288
        %v3290 = vlaneseq
        %v3291 = vshrl.u32 %v3290, 7
        %v3292 = vsub.s32 %v3289, %v3291
        %v3293 = vrot.slane %v3279, %v3292
        %v3294 = vcombine.low %v3286, %v3293
        %v3296 = vunpack.c.l.s4 1966171168
        %v3297 = vunpack.c.0.s8 %v3296
        %v3298 = vlaneseq
        %v3299 = vshrl.u32 %v3298, 7
        %v3300 = vsub.s32 %v3297, %v3299
        %v3301 = vrot.slane %v3294, %v3300
        %v3303 = vlaneseq
        %vm3304 = vcmp.ge.s32.totalorder %v3303, 0
        %vm3305 = vcmp.lt.s32.totalorder %v3303, 512
        %vm3306 = vmand %vm3304, %vm3305
        %3307 = vst.msk [vmem:[%s271] sm:$0xf] %vm3306, %v3301
        %s3308 = sand.u32 %s182, 1
        %s3309 = scalar_lea.sflag [#allocation4], %s3308
        %s3310 = sand.u32 %s182, 1
        %s3311 = smul.addr %s3310, 4
        %s3312 = scalar_lea.vmem [#allocation3], %s3311
        // Predicated region
        $region49: #{tpu_custom_call.1} parent=47 // pred_check
          %p3313 = pneg %p192
        $region50: #{tpu_custom_call.1} parent=47 // pred_check_branch
          %3315 = sbr.rel (%p3313) target = $region52
        $region51: #{tpu_custom_call.1} parent=47 // pred_region
          %s3316 = smul.u32 4, %s22
          %s3318 = ssub.s32 64, 64
          %3319 = vsyncadd %s3309, %s3318
          %s3320 = smul.addr %s3316, 16
          %s3321 = scalar_lea.hbm %s7, %s3320
          %s3323 = sshll.u32 %s3312, 4
          %s3324 = int_to_ptr.vmem [resolvable:$true] %s3323
          %3326 = dma.vmem_to_hbm [thread:$0]  %s3324, 64, %s3321, %s3309
        $region52: #{tpu_custom_call.1} parent=47 // pred_fallthru
          _
      $region48: #{tpu_custom_call.1} parent=5 // pred_fallthru
        _
      %p3327 = scmp.le.s32.totalorder 2, %s17
      // Predicated region
      $region53: #{tpu_custom_call.1} parent=5 // pred_check
        %p3328 = pneg %p3327
      $region54: #{tpu_custom_call.1} parent=5 // pred_check_branch
        %3330 = sbr.rel (%p3328) target = $region56
      $region55: #{tpu_custom_call.1} parent=5 // pred_region
        %s3331 = ssub.s32 %s17, 2
        // Predicated region
        $region57: #{tpu_custom_call.1} parent=55 // pred_check
          %p3332 = pneg %p198
        $region58: #{tpu_custom_call.1} parent=55 // pred_check_branch
          %3334 = sbr.rel (%p3332) target = $region60
        $region59: #{tpu_custom_call.1} parent=55 // pred_region
          %s3335 = sand.u32 %s183, 1
          %s3336 = scalar_lea.sflag [#allocation4], %s3335
          %s3337 = sand.u32 %s183, 1
          %s3338 = smul.addr %s3337, 4
          %s3339 = scalar_lea.vmem [#allocation3], %s3338
          %3340 = dma.done %s3336, 64
        $region60: #{tpu_custom_call.1} parent=55 // pred_fallthru
          _
      $region56: #{tpu_custom_call.1} parent=5 // pred_fallthru
        _
    $region6: #{tpu_custom_call.1} parent=1 // loop_footer
      %s21 = sadd.s32 1, %s17
    $region7: #{tpu_custom_call.1} parent=1 // loop_footer_branch
      %16 = sbr.rel target = $region3
    $region8: #{tpu_custom_call.1} parent=1 // loop_exit
      _
    %3341 = vsyncpa [#allocation4], 1
    %s3342 = scalar_lea.sflag [#allocation4], 1
    %3343 = vsyncpa %s3342, 1

</llo_original>
